<compile_context>
chip_gen: v6e
topology: v6e:2x2x1
jax: 0.10.0
libtpu: 0.0.40
codegen_flags: <defaults>
</compile_context>

<pallas_src>
import jax
import jax.numpy as jnp
from jax.experimental import pallas as pl
from jax.experimental.pallas import tpu as pltpu

NUM_POINTS = 2048            # fixed in the PyTorch module
LATENT = 128
H1, H2, H3 = 256, 512, 1024
N_OUT = 3 * NUM_POINTS       # 6144
TILE_N = 1024                # fc4 output-column tile (multiple of 128)
N_TILES = N_OUT // TILE_N    # 6 -> even split across v7x's 2 TensorCores


# ----------------------------- Pallas kernel ------------------------------- #

def _generator_kernel(x_ref, w1_ref, b1_ref, w2_ref, b2_ref, w3_ref, b3_ref,
                      w4_ref, b4_ref, o_ref):
    """Whole MLP fused.  fc1-3 weights are VMEM-resident (constant index_map);
    the 256/512/1024-wide hidden is recomputed per output tile (cheap, keeps
    the grid axis independent / 'parallel').  fc4 weight tile streams through
    VMEM double-buffered; output tile is lane-dense (TILE_N = 1024)."""
    bf16 = jnp.bfloat16
    f32 = jnp.float32

    x = x_ref[...].astype(bf16)
    h = jnp.dot(x, w1_ref[...], preferred_element_type=f32)
    h = jnp.maximum(h + b1_ref[...], 0.0)
    h = jnp.dot(h.astype(bf16), w2_ref[...], preferred_element_type=f32)
    h = jnp.maximum(h + b2_ref[...], 0.0)
    h = jnp.dot(h.astype(bf16), w3_ref[...], preferred_element_type=f32)
    h = jnp.maximum(h + b3_ref[...], 0.0)

    y = jnp.dot(h.astype(bf16), w4_ref[...], preferred_element_type=f32)
    o_ref[...] = jnp.tanh(y + b4_ref[...])


def _generator_pallas(x_pad, p):
    """x_pad: (B_pad, 128) fp32, B_pad a multiple of 8 -> (B_pad, 6144) fp32."""
    b_pad = x_pad.shape[0]

    cost = pl.CostEstimate(
        flops=N_TILES * 2 * b_pad * (LATENT * H1 + H1 * H2 + H2 * H3)
              + 2 * b_pad * H3 * N_OUT,
        transcendentals=b_pad * N_OUT,
        bytes_accessed=2 * (LATENT * H1 + H1 * H2 + H2 * H3 + H3 * N_OUT)
                       + 4 * (b_pad * LATENT + H1 + H2 + H3 + N_OUT
                              + b_pad * N_OUT))

    return pl.pallas_call(
        _generator_kernel,
        out_shape=jax.ShapeDtypeStruct((b_pad, N_OUT), jnp.float32),
        grid=(N_TILES,),
        in_specs=[
            # Resident inputs: constant index_map -> DMA'd once, kept in VMEM.
            pl.BlockSpec((b_pad, LATENT), lambda j: (0, 0)),   # x
            pl.BlockSpec((LATENT, H1), lambda j: (0, 0)),      # w1 (bf16)
            pl.BlockSpec((1, H1), lambda j: (0, 0)),           # b1
            pl.BlockSpec((H1, H2), lambda j: (0, 0)),          # w2 (bf16)
            pl.BlockSpec((1, H2), lambda j: (0, 0)),           # b2
            pl.BlockSpec((H2, H3), lambda j: (0, 0)),          # w3 (bf16)
            pl.BlockSpec((1, H3), lambda j: (0, 0)),           # b3
            # Streamed fc4 weight: contiguous 2 MiB bf16 slab per grid step.
            pl.BlockSpec((None, H3, TILE_N), lambda j: (j, 0, 0)),  # w4t
            pl.BlockSpec((1, TILE_N), lambda j: (0, j)),            # b4 tile
        ],
        out_specs=pl.BlockSpec((b_pad, TILE_N), lambda j: (0, j)),
        compiler_params=pltpu.CompilerParams(
            dimension_semantics=("parallel",)),   # v7x: 2 TCs split the tiles
        cost_estimate=cost,
    )(x_pad, p["w1"], p["b1"], p["w2"], p["b2"], p["w3"], p["b3"],
      p["w4t"], p["b4"])


# ------------------------------ Parameters --------------------------------- #

def init_params(key):
    keys = jax.random.split(key, 8)

    def lin(k_w, k_b, cin, cout):
        # PyTorch Linear default init range, stored as (in, out).
        bound = 1.0 / jnp.sqrt(jnp.float32(cin))
        w = jax.random.uniform(k_w, (cin, cout), jnp.float32, -bound, bound)
        bb = jax.random.uniform(k_b, (cout,), jnp.float32, -bound, bound)
        # Weights in bf16 (halves HBM bytes); biases stay fp32 (tiny, exact add).
        return w.astype(jnp.bfloat16), bb.reshape(1, cout)

    p = {}
    p["w1"], p["b1"] = lin(keys[0], keys[1], LATENT, H1)
    p["w2"], p["b2"] = lin(keys[2], keys[3], H1, H2)
    p["w3"], p["b3"] = lin(keys[4], keys[5], H2, H3)
    w4, p["b4"] = lin(keys[6], keys[7], H3, N_OUT)
    # One-time re-layout so each streamed output-column tile is contiguous:
    # w4t[t, k, c] == w4[k, t*TILE_N + c].
    p["w4t"] = w4.reshape(H3, N_TILES, TILE_N).transpose(1, 0, 2)
    return p


# ------------------------------ Forward pass -------------------------------- #

def generator_forward(x, p):
    """x: (B, 128) fp32 -> (B, 3, num_points), matching Generator.forward."""
    b = x.shape[0]
    # Pad batch to a sublane multiple so output stores are unmasked vregs.
    b_pad = max(8, -(-b // 8) * 8)
    if b_pad != b:
        x = jnp.pad(x, ((0, b_pad - b), (0, 0)))
    y = _generator_pallas(x, p)            # (B_pad, 6144), lane-dense tiles
    return y[:b].reshape(b, 3, NUM_POINTS)  # same row-major view as PyTorch


def _reference_forward(x, p):
    """Pure-JAX reference mirroring the kernel's bf16-weight / fp32-accum math."""
    bf16, f32 = jnp.bfloat16, jnp.float32
    w4 = p["w4t"].transpose(1, 0, 2).reshape(H3, N_OUT)

    def mm(a, w):
        return jnp.dot(a.astype(bf16), w, preferred_element_type=f32)

    h = jnp.maximum(mm(x, p["w1"]) + p["b1"], 0.0)
    h = jnp.maximum(mm(h, p["w2"]) + p["b2"], 0.0)
    h = jnp.maximum(mm(h, p["w3"]) + p["b3"], 0.0)
    y = jnp.tanh(mm(h, w4) + p["b4"])
    return y.reshape(x.shape[0], 3, NUM_POINTS)


# ---------------------------------- main ------------------------------------ #

if __name__ == "__main__":
    root = jax.random.PRNGKey(0)
    k_x, k_p = jax.random.split(root)
    B = 2                                               # small batch
    x = jax.random.normal(k_x, (B, LATENT), jnp.float32)
    params = init_params(k_p)

    fwd = jax.jit(generator_forward)
    out = fwd(x, params)
    jax.block_until_ready(out)

    assert out.shape == (B, 3, NUM_POINTS) and out.dtype == jnp.float32
    ref = _reference_forward(x, params)
    assert bool(jnp.all(jnp.isfinite(out)))
    assert bool(jnp.allclose(out, ref, atol=1e-3, rtol=1e-3))
    print("KERNEL_OK")
</pallas_src>

<mosaic_0001>
module attributes {stable_mosaic.version = 11 : i64} {
  func.func @_generator_kernel(%arg0: i32, %arg1: memref<8x128xf32, #tpu.memory_space<vmem>>, %arg2: memref<128x256xbf16, #tpu.memory_space<vmem>>, %arg3: memref<1x256xf32, #tpu.memory_space<vmem>>, %arg4: memref<256x512xbf16, #tpu.memory_space<vmem>>, %arg5: memref<1x512xf32, #tpu.memory_space<vmem>>, %arg6: memref<512x1024xbf16, #tpu.memory_space<vmem>>, %arg7: memref<1x1024xf32, #tpu.memory_space<vmem>>, %arg8: memref<1x1024x1024xbf16, #tpu.memory_space<vmem>>, %arg9: memref<1x1024xf32, #tpu.memory_space<vmem>>, %arg10: memref<8x1024xf32, #tpu.memory_space<vmem>>) attributes {dimension_semantics = [#tpu.dimension_semantics<parallel>], iteration_bounds = array<i64: 6>, scalar_prefetch = 0 : i64, scratch_operands = 0 : i64, tpu.core_type = #tpu.core_type<tc>, window_params = [{pipeline_mode = #tpu.pipeline_mode<synchronous>, transform_indices = @transform_0, window_bounds = array<i64: 8, 128>}, {pipeline_mode = #tpu.pipeline_mode<synchronous>, transform_indices = @transform_1, window_bounds = array<i64: 128, 256>}, {pipeline_mode = #tpu.pipeline_mode<synchronous>, transform_indices = @transform_2, window_bounds = array<i64: 1, 256>}, {pipeline_mode = #tpu.pipeline_mode<synchronous>, transform_indices = @transform_3, window_bounds = array<i64: 256, 512>}, {pipeline_mode = #tpu.pipeline_mode<synchronous>, transform_indices = @transform_4, window_bounds = array<i64: 1, 512>}, {pipeline_mode = #tpu.pipeline_mode<synchronous>, transform_indices = @transform_5, window_bounds = array<i64: 512, 1024>}, {pipeline_mode = #tpu.pipeline_mode<synchronous>, transform_indices = @transform_6, window_bounds = array<i64: 1, 1024>}, {transform_indices = @transform_7, window_bounds = array<i64: 1, 1024, 1024>}, {transform_indices = @transform_8, window_bounds = array<i64: 1, 1024>}, {transform_indices = @transform_9, window_bounds = array<i64: 8, 1024>}]} {
    %c0 = arith.constant 0 : index
    %c0_0 = arith.constant 0 : index
    %0 = vector.load %arg1[%c0, %c0_0] : memref<8x128xf32, #tpu.memory_space<vmem>>, vector<8x128xf32>
    %1 = arith.truncf %0 : vector<8x128xf32> to vector<8x128xbf16>
    %c0_1 = arith.constant 0 : index
    %c0_2 = arith.constant 0 : index
    %2 = vector.load %arg2[%c0_1, %c0_2] : memref<128x256xbf16, #tpu.memory_space<vmem>>, vector<128x256xbf16>
    %cst = arith.constant dense<0.000000e+00> : vector<8x256xf32>
    %3 = tpu.matmul %1, %2, %cst {dimension_numbers = #tpu.dot_dimension_numbers<[1], [0], [0], [1], [0, 0, 1, 1], [], []>} : vector<8x128xbf16>, vector<128x256xbf16>, vector<8x256xf32> -> vector<8x256xf32>
    %c0_3 = arith.constant 0 : index
    %c0_4 = arith.constant 0 : index
    %4 = vector.load %arg3[%c0_3, %c0_4] : memref<1x256xf32, #tpu.memory_space<vmem>>, vector<1x256xf32>
    %5 = vector.broadcast %4 : vector<1x256xf32> to vector<8x256xf32>
    %6 = arith.addf %3, %5 : vector<8x256xf32>
    %cst_5 = arith.constant 0.000000e+00 : f32
    %7 = vector.broadcast %cst_5 : f32 to vector<8x256xf32>
    %8 = arith.maximumf %6, %7 : vector<8x256xf32>
    %9 = arith.truncf %8 : vector<8x256xf32> to vector<8x256xbf16>
    %c0_6 = arith.constant 0 : index
    %c0_7 = arith.constant 0 : index
    %10 = vector.load %arg4[%c0_6, %c0_7] : memref<256x512xbf16, #tpu.memory_space<vmem>>, vector<256x512xbf16>
    %cst_8 = arith.constant dense<0.000000e+00> : vector<8x512xf32>
    %11 = tpu.matmul %9, %10, %cst_8 {dimension_numbers = #tpu.dot_dimension_numbers<[1], [0], [0], [1], [0, 0, 1, 1], [], []>} : vector<8x256xbf16>, vector<256x512xbf16>, vector<8x512xf32> -> vector<8x512xf32>
    %c0_9 = arith.constant 0 : index
    %c0_10 = arith.constant 0 : index
    %12 = vector.load %arg5[%c0_9, %c0_10] : memref<1x512xf32, #tpu.memory_space<vmem>>, vector<1x512xf32>
    %13 = vector.broadcast %12 : vector<1x512xf32> to vector<8x512xf32>
    %14 = arith.addf %11, %13 : vector<8x512xf32>
    %cst_11 = arith.constant 0.000000e+00 : f32
    %15 = vector.broadcast %cst_11 : f32 to vector<8x512xf32>
    %16 = arith.maximumf %14, %15 : vector<8x512xf32>
    %17 = arith.truncf %16 : vector<8x512xf32> to vector<8x512xbf16>
    %c0_12 = arith.constant 0 : index
    %c0_13 = arith.constant 0 : index
    %18 = vector.load %arg6[%c0_12, %c0_13] : memref<512x1024xbf16, #tpu.memory_space<vmem>>, vector<512x1024xbf16>
    %cst_14 = arith.constant dense<0.000000e+00> : vector<8x1024xf32>
    %19 = tpu.matmul %17, %18, %cst_14 {dimension_numbers = #tpu.dot_dimension_numbers<[1], [0], [0], [1], [0, 0, 1, 1], [], []>} : vector<8x512xbf16>, vector<512x1024xbf16>, vector<8x1024xf32> -> vector<8x1024xf32>
    %c0_15 = arith.constant 0 : index
    %c0_16 = arith.constant 0 : index
    %20 = vector.load %arg7[%c0_15, %c0_16] : memref<1x1024xf32, #tpu.memory_space<vmem>>, vector<1x1024xf32>
    %21 = vector.broadcast %20 : vector<1x1024xf32> to vector<8x1024xf32>
    %22 = arith.addf %19, %21 : vector<8x1024xf32>
    %cst_17 = arith.constant 0.000000e+00 : f32
    %23 = vector.broadcast %cst_17 : f32 to vector<8x1024xf32>
    %24 = arith.maximumf %22, %23 : vector<8x1024xf32>
    %25 = arith.truncf %24 : vector<8x1024xf32> to vector<8x1024xbf16>
    %c0_18 = arith.constant 0 : index
    %c0_19 = arith.constant 0 : index
    %c0_20 = arith.constant 0 : index
    %26 = vector.load %arg8[%c0_18, %c0_19, %c0_20] : memref<1x1024x1024xbf16, #tpu.memory_space<vmem>>, vector<1x1024x1024xbf16>
    %27 = vector.shape_cast %26 : vector<1x1024x1024xbf16> to vector<1024x1024xbf16>
    %cst_21 = arith.constant dense<0.000000e+00> : vector<8x1024xf32>
    %28 = tpu.matmul %25, %27, %cst_21 {dimension_numbers = #tpu.dot_dimension_numbers<[1], [0], [0], [1], [0, 0, 1, 1], [], []>} : vector<8x1024xbf16>, vector<1024x1024xbf16>, vector<8x1024xf32> -> vector<8x1024xf32>
    %c0_22 = arith.constant 0 : index
    %c0_23 = arith.constant 0 : index
    %29 = vector.load %arg9[%c0_22, %c0_23] : memref<1x1024xf32, #tpu.memory_space<vmem>>, vector<1x1024xf32>
    %30 = vector.broadcast %29 : vector<1x1024xf32> to vector<8x1024xf32>
    %31 = arith.addf %28, %30 : vector<8x1024xf32>
    %32 = math.tanh %31 : vector<8x1024xf32>
    %c0_24 = arith.constant 0 : index
    %c0_25 = arith.constant 0 : index
    %33 = vector.load %arg10[%c0_24, %c0_25] : memref<8x1024xf32, #tpu.memory_space<vmem>>, vector<8x1024xf32>
    tpu.vector_store %arg10[%c0_24, %c0_25], %32 {strides = array<i32>} : memref<8x1024xf32, #tpu.memory_space<vmem>>, vector<8x1024xf32>,
    return
  }
  func.func @transform_0(%arg0: i32) -> (i32, i32) {
    %c0_i32 = arith.constant 0 : i32
    %c0_i32_0 = arith.constant 0 : i32
    %c0_i32_1 = arith.constant 0 : i32
    return %c0_i32, %c0_i32_0 : i32, i32
  }
  func.func @transform_1(%arg0: i32) -> (i32, i32) {
    %c0_i32 = arith.constant 0 : i32
    %c0_i32_0 = arith.constant 0 : i32
    %c0_i32_1 = arith.constant 0 : i32
    return %c0_i32, %c0_i32_0 : i32, i32
  }
  func.func @transform_2(%arg0: i32) -> (i32, i32) {
    %c0_i32 = arith.constant 0 : i32
    %c0_i32_0 = arith.constant 0 : i32
    %c0_i32_1 = arith.constant 0 : i32
    return %c0_i32, %c0_i32_0 : i32, i32
  }
  func.func @transform_3(%arg0: i32) -> (i32, i32) {
    %c0_i32 = arith.constant 0 : i32
    %c0_i32_0 = arith.constant 0 : i32
    %c0_i32_1 = arith.constant 0 : i32
    return %c0_i32, %c0_i32_0 : i32, i32
  }
  func.func @transform_4(%arg0: i32) -> (i32, i32) {
    %c0_i32 = arith.constant 0 : i32
    %c0_i32_0 = arith.constant 0 : i32
    %c0_i32_1 = arith.constant 0 : i32
    return %c0_i32, %c0_i32_0 : i32, i32
  }
  func.func @transform_5(%arg0: i32) -> (i32, i32) {
    %c0_i32 = arith.constant 0 : i32
    %c0_i32_0 = arith.constant 0 : i32
    %c0_i32_1 = arith.constant 0 : i32
    return %c0_i32, %c0_i32_0 : i32, i32
  }
  func.func @transform_6(%arg0: i32) -> (i32, i32) {
    %c0_i32 = arith.constant 0 : i32
    %c0_i32_0 = arith.constant 0 : i32
    %c0_i32_1 = arith.constant 0 : i32
    return %c0_i32, %c0_i32_0 : i32, i32
  }
  func.func @transform_7(%arg0: i32) -> (i32, i32, i32) {
    %c0_i32 = arith.constant 0 : i32
    %c0_i32_0 = arith.constant 0 : i32
    %c0_i32_1 = arith.constant 0 : i32
    return %arg0, %c0_i32, %c0_i32_0 : i32, i32, i32
  }
  func.func @transform_8(%arg0: i32) -> (i32, i32) {
    %c0_i32 = arith.constant 0 : i32
    %c0_i32_0 = arith.constant 0 : i32
    return %c0_i32, %arg0 : i32, i32
  }
  func.func @transform_9(%arg0: i32) -> (i32, i32) {
    %c0_i32 = arith.constant 0 : i32
    %c0_i32_0 = arith.constant 0 : i32
    return %c0_i32, %arg0 : i32, i32
  }
}

</mosaic_0001>

<llo_original>
// kernel: generator_forward.1
$region0: #{generator_forward.1}
  #allocation0 [shape = 'u32[]', space=smem, size = 0x4, offset = 0x4, fixed_abs, tag = 'smem constant byte address 0x4 - core index']
  #allocation1 [shape = 'u32[144,128]{1,0:T(1,128)}', space=vmem, size = 0x12000, scoped, tag = 'internal scratch']
  %s0 = inlined_call_operand.vmem [shape: f32[8,128], index: 0, kind: input, shape index: {}]
  %s1 = inlined_call_operand.hbm [shape: bf16[128,256], index: 1, kind: input, shape index: {}]
  %s2 = inlined_call_operand.hbm [shape: f32[1,256], index: 2, kind: input, shape index: {}]
  %s3 = inlined_call_operand.hbm [shape: bf16[256,512], index: 3, kind: input, shape index: {}]
  %s4 = inlined_call_operand.hbm [shape: f32[1,512], index: 4, kind: input, shape index: {}]
  %s5 = inlined_call_operand.hbm [shape: bf16[512,1024], index: 5, kind: input, shape index: {}]
  %s6 = inlined_call_operand.hbm [shape: f32[1,1024], index: 6, kind: input, shape index: {}]
  %s7 = inlined_call_operand.hbm [shape: bf16[6,1024,1024], index: 7, kind: input, shape index: {}]
  %s8 = inlined_call_operand.hbm [shape: f32[1,6144], index: 8, kind: input, shape index: {}]
  %s9 = inlined_call_operand.vmem [shape: f32[8,6144], index: 9, kind: output, shape index: {}]
  %s10 = sld [smem:[#allocation0]]
  $region101: #{generator_forward.1} parent=0
    _
  %s12 = ssub.s32 1, %s10
  %s13 = scalar_select 0, %s12, %s10
  $region1: #{generator_forward.1} parent=0
    #allocation2 [shape = 'u8[65536]{0}', space=vmem, size = 0x10000, scoped, tag = 'input window, operand 1, single buffered']
    #allocation3 [shape = 's32[2]{0}', space=sflag, size = 0x8, scoped, tag = 'scoped memory for generator_forward.1']
    #allocation4 [shape = 'u8[1024]{0}', space=vmem, size = 0x400, scoped, tag = 'input window, operand 2, single buffered']
    #allocation5 [shape = 's32[1]{0}', space=sflag, size = 0x4, scoped, tag = 'scoped memory for generator_forward.1']
    #allocation6 [shape = 'u8[262144]{0}', space=vmem, size = 0x40000, scoped, tag = 'input window, operand 3, single buffered']
    #allocation7 [shape = 'u8[2048]{0}', space=vmem, size = 0x800, scoped, tag = 'input window, operand 4, single buffered']
    #allocation8 [shape = 's32[1]{0}', space=sflag, size = 0x4, scoped, tag = 'scoped memory for generator_forward.1']
    #allocation9 [shape = 'u8[1048576]{0}', space=vmem, size = 0x100000, scoped, tag = 'input window, operand 5, single buffered']
    #allocation10 [shape = 'u8[4096]{0}', space=vmem, size = 0x1000, scoped, tag = 'input window, operand 6, single buffered']
    #allocation11 [shape = 's32[1]{0}', space=sflag, size = 0x4, scoped, tag = 'scoped memory for generator_forward.1']
    #allocation12 [shape = 'u8[4194304]{0}', space=vmem, size = 0x400000, scoped, tag = 'input window, operand 7']
    #allocation13 [shape = 'u8[8192]{0}', space=vmem, size = 0x2000, scoped, tag = 'input window, operand 8']
    %14 = vsyncpa [#allocation3], 0
    %15 = vsyncpa [#allocation5], 0
    %16 = vsyncpa [#allocation8], 0
    %17 = vsyncpa [#allocation11], 0
    loop: start=0, step=1, limit=8
    $region2: #{generator_forward.1} parent=1 // loop_pre_header
      _
    $region3: #{generator_forward.1} parent=1 // loop_header
      %s19 = sphi 0, %s23
      %p20 = scmp.ge.s32.totalorder %s19, 8
      %s27 = sphi 0, %s27
      %s29 = sphi 0, %s27
      %s30 = sphi 0, %s29
      %s44 = sphi 0, %s30
      %s48 = sphi 0, %s48
      %s50 = sphi 0, %s48
      %s51 = sphi 0, %s50
      %s65 = sphi 0, %s51
      %s69 = sphi 0, %s69
      %s71 = sphi 0, %s69
      %s72 = sphi 0, %s71
      %s86 = sphi 0, %s72
      %s90 = sphi 0, %s90
      %s92 = sphi 0, %s90
      %s93 = sphi 0, %s92
      %s107 = sphi 0, %s93
      %s111 = sphi 0, %s111
      %s113 = sphi 0, %s111
      %s114 = sphi 0, %s113
      %s128 = sphi 0, %s114
      %s132 = sphi 0, %s132
      %s134 = sphi 0, %s132
      %s135 = sphi 0, %s134
      %s149 = sphi 0, %s135
      %s153 = sphi 0, %s153
      %s155 = sphi 0, %s153
      %s156 = sphi 0, %s155
      %s170 = sphi 0, %s156
      %s176 = sphi 0, %s178
      %s179 = sphi 0, %s176
      %s180 = sphi 0, %s179
      %s196 = sphi 0, %s180
      %s202 = sphi 0, %s204
      %s205 = sphi 0, %s202
      %s206 = sphi 0, %s205
      %s222 = sphi 0, %s206
      %s228 = sphi 0, %s230
      %s231 = sphi 0, %s228
      %s232 = sphi 0, %s231
      %s248 = sphi 0, %s232
    $region4: #{generator_forward.1} parent=1 // loop_header_branch
      %22 = sbr.rel (%p20) target = $region8
    $region5: #{generator_forward.1} parent=1 // loop_body
      %s24 = ssub.s32 %s19, 1
      %s25 = ssub.s32 %s19, 2
      %s26 = sadd.s32 %s19, 1
      %s28 = sadd.s32 %s27, 1
      %p31 = scmp.eq.s32.totalorder %s19, 5
      %p32 = scmp.ne.s32.totalorder %s27, %s29
      %p33 = scmp.eq.s32.totalorder %s19, 0
      %p34 = por %p32, %p33
      %p35 = scmp.ne.s32.totalorder %s27, %s29
      %p36 = scmp.eq.s32.totalorder %s24, 5
      %p37 = por %p35, %p36
      %p38 = scmp.ne.s32.totalorder %s29, %s30
      %p39 = scmp.eq.s32.totalorder %s24, 0
      %p40 = por %p38, %p39
      %p41 = scmp.ne.s32.totalorder %s29, %s30
      %p42 = scmp.eq.s32.totalorder %s25, 5
      %p43 = por %p41, %p42
      %p45 = scmp.ne.s32.totalorder %s30, %s44
      %p46 = scmp.eq.s32.totalorder %s25, 0
      %p47 = por %p45, %p46
      %s49 = sadd.s32 %s48, 1
      %p52 = scmp.eq.s32.totalorder %s19, 5
      %p53 = scmp.ne.s32.totalorder %s48, %s50
      %p54 = scmp.eq.s32.totalorder %s19, 0
      %p55 = por %p53, %p54
      %p56 = scmp.ne.s32.totalorder %s48, %s50
      %p57 = scmp.eq.s32.totalorder %s24, 5
      %p58 = por %p56, %p57
      %p59 = scmp.ne.s32.totalorder %s50, %s51
      %p60 = scmp.eq.s32.totalorder %s24, 0
      %p61 = por %p59, %p60
      %p62 = scmp.ne.s32.totalorder %s50, %s51
      %p63 = scmp.eq.s32.totalorder %s25, 5
      %p64 = por %p62, %p63
      %p66 = scmp.ne.s32.totalorder %s51, %s65
      %p67 = scmp.eq.s32.totalorder %s25, 0
      %p68 = por %p66, %p67
      %s70 = sadd.s32 %s69, 1
      %p73 = scmp.eq.s32.totalorder %s19, 5
      %p74 = scmp.ne.s32.totalorder %s69, %s71
      %p75 = scmp.eq.s32.totalorder %s19, 0
      %p76 = por %p74, %p75
      %p77 = scmp.ne.s32.totalorder %s69, %s71
      %p78 = scmp.eq.s32.totalorder %s24, 5
      %p79 = por %p77, %p78
      %p80 = scmp.ne.s32.totalorder %s71, %s72
      %p81 = scmp.eq.s32.totalorder %s24, 0
      %p82 = por %p80, %p81
      %p83 = scmp.ne.s32.totalorder %s71, %s72
      %p84 = scmp.eq.s32.totalorder %s25, 5
      %p85 = por %p83, %p84
      %p87 = scmp.ne.s32.totalorder %s72, %s86
      %p88 = scmp.eq.s32.totalorder %s25, 0
      %p89 = por %p87, %p88
      %s91 = sadd.s32 %s90, 1
      %p94 = scmp.eq.s32.totalorder %s19, 5
      %p95 = scmp.ne.s32.totalorder %s90, %s92
      %p96 = scmp.eq.s32.totalorder %s19, 0
      %p97 = por %p95, %p96
      %p98 = scmp.ne.s32.totalorder %s90, %s92
      %p99 = scmp.eq.s32.totalorder %s24, 5
      %p100 = por %p98, %p99
      %p101 = scmp.ne.s32.totalorder %s92, %s93
      %p102 = scmp.eq.s32.totalorder %s24, 0
      %p103 = por %p101, %p102
      %p104 = scmp.ne.s32.totalorder %s92, %s93
      %p105 = scmp.eq.s32.totalorder %s25, 5
      %p106 = por %p104, %p105
      %p108 = scmp.ne.s32.totalorder %s93, %s107
      %p109 = scmp.eq.s32.totalorder %s25, 0
      %p110 = por %p108, %p109
      %s112 = sadd.s32 %s111, 1
      %p115 = scmp.eq.s32.totalorder %s19, 5
      %p116 = scmp.ne.s32.totalorder %s111, %s113
      %p117 = scmp.eq.s32.totalorder %s19, 0
      %p118 = por %p116, %p117
      %p119 = scmp.ne.s32.totalorder %s111, %s113
      %p120 = scmp.eq.s32.totalorder %s24, 5
      %p121 = por %p119, %p120
      %p122 = scmp.ne.s32.totalorder %s113, %s114
      %p123 = scmp.eq.s32.totalorder %s24, 0
      %p124 = por %p122, %p123
      %p125 = scmp.ne.s32.totalorder %s113, %s114
      %p126 = scmp.eq.s32.totalorder %s25, 5
      %p127 = por %p125, %p126
      %p129 = scmp.ne.s32.totalorder %s114, %s128
      %p130 = scmp.eq.s32.totalorder %s25, 0
      %p131 = por %p129, %p130
      %s133 = sadd.s32 %s132, 1
      %p136 = scmp.eq.s32.totalorder %s19, 5
      %p137 = scmp.ne.s32.totalorder %s132, %s134
      %p138 = scmp.eq.s32.totalorder %s19, 0
      %p139 = por %p137, %p138
      %p140 = scmp.ne.s32.totalorder %s132, %s134
      %p141 = scmp.eq.s32.totalorder %s24, 5
      %p142 = por %p140, %p141
      %p143 = scmp.ne.s32.totalorder %s134, %s135
      %p144 = scmp.eq.s32.totalorder %s24, 0
      %p145 = por %p143, %p144
      %p146 = scmp.ne.s32.totalorder %s134, %s135
      %p147 = scmp.eq.s32.totalorder %s25, 5
      %p148 = por %p146, %p147
      %p150 = scmp.ne.s32.totalorder %s135, %s149
      %p151 = scmp.eq.s32.totalorder %s25, 0
      %p152 = por %p150, %p151
      %s154 = sadd.s32 %s153, 1
      %p157 = scmp.eq.s32.totalorder %s19, 5
      %p158 = scmp.ne.s32.totalorder %s153, %s155
      %p159 = scmp.eq.s32.totalorder %s19, 0
      %p160 = por %p158, %p159
      %p161 = scmp.ne.s32.totalorder %s153, %s155
      %p162 = scmp.eq.s32.totalorder %s24, 5
      %p163 = por %p161, %p162
      %p164 = scmp.ne.s32.totalorder %s155, %s156
      %p165 = scmp.eq.s32.totalorder %s24, 0
      %p166 = por %p164, %p165
      %p167 = scmp.ne.s32.totalorder %s155, %s156
      %p168 = scmp.eq.s32.totalorder %s25, 5
      %p169 = por %p167, %p168
      %p171 = scmp.ne.s32.totalorder %s156, %s170
      %p172 = scmp.eq.s32.totalorder %s25, 0
      %p173 = por %p171, %p172
      %s174 = ssub.s32 %s19, %s26
      %p175 = scmp.eq.s32.totalorder %s174, 0
      %s177 = sadd.s32 %s176, 1
      %s178 = scalar_select %p175, %s176, %s177
      %p181 = pneg %p175
      %p182 = scmp.eq.s32.totalorder %s19, 5
      %p183 = por %p181, %p182
      %p184 = scmp.ne.s32.totalorder %s176, %s179
      %p185 = scmp.eq.s32.totalorder %s19, 0
      %p186 = por %p184, %p185
      %p187 = scmp.ne.s32.totalorder %s176, %s179
      %p188 = scmp.eq.s32.totalorder %s24, 5
      %p189 = por %p187, %p188
      %p190 = scmp.ne.s32.totalorder %s179, %s180
      %p191 = scmp.eq.s32.totalorder %s24, 0
      %p192 = por %p190, %p191
      %p193 = scmp.ne.s32.totalorder %s179, %s180
      %p194 = scmp.eq.s32.totalorder %s25, 5
      %p195 = por %p193, %p194
      %p197 = scmp.ne.s32.totalorder %s180, %s196
      %p198 = scmp.eq.s32.totalorder %s25, 0
      %p199 = por %p197, %p198
      %s200 = ssub.s32 %s19, %s26
      %p201 = scmp.eq.s32.totalorder %s200, 0
      %s203 = sadd.s32 %s202, 1
      %s204 = scalar_select %p201, %s202, %s203
      %p207 = pneg %p201
      %p208 = scmp.eq.s32.totalorder %s19, 5
      %p209 = por %p207, %p208
      %p210 = scmp.ne.s32.totalorder %s202, %s205
      %p211 = scmp.eq.s32.totalorder %s19, 0
      %p212 = por %p210, %p211
      %p213 = scmp.ne.s32.totalorder %s202, %s205
      %p214 = scmp.eq.s32.totalorder %s24, 5
      %p215 = por %p213, %p214
      %p216 = scmp.ne.s32.totalorder %s205, %s206
      %p217 = scmp.eq.s32.totalorder %s24, 0
      %p218 = por %p216, %p217
      %p219 = scmp.ne.s32.totalorder %s205, %s206
      %p220 = scmp.eq.s32.totalorder %s25, 5
      %p221 = por %p219, %p220
      %p223 = scmp.ne.s32.totalorder %s206, %s222
      %p224 = scmp.eq.s32.totalorder %s25, 0
      %p225 = por %p223, %p224
      %s226 = ssub.s32 %s19, %s26
      %p227 = scmp.eq.s32.totalorder %s226, 0
      %s229 = sadd.s32 %s228, 1
      %s230 = scalar_select %p227, %s228, %s229
      %p233 = pneg %p227
      %p234 = scmp.eq.s32.totalorder %s19, 5
      %p235 = por %p233, %p234
      %p236 = scmp.ne.s32.totalorder %s228, %s231
      %p237 = scmp.eq.s32.totalorder %s19, 0
      %p238 = por %p236, %p237
      %p239 = scmp.ne.s32.totalorder %s228, %s231
      %p240 = scmp.eq.s32.totalorder %s24, 5
      %p241 = por %p239, %p240
      %p242 = scmp.ne.s32.totalorder %s231, %s232
      %p243 = scmp.eq.s32.totalorder %s24, 0
      %p244 = por %p242, %p243
      %p245 = scmp.ne.s32.totalorder %s231, %s232
      %p246 = scmp.eq.s32.totalorder %s25, 5
      %p247 = por %p245, %p246
      %p249 = scmp.ne.s32.totalorder %s232, %s248
      %p250 = scmp.eq.s32.totalorder %s25, 0
      %p251 = por %p249, %p250
      %p252 = scmp.le.s32.totalorder 1, %s19
      %p253 = scmp.lt.s32.totalorder %s19, 7
      %p254 = pnand %p252, %p253
      %p255 = pneg %p254
      // Predicated region
      $region9: #{generator_forward.1} parent=5 // pred_check
        _
      $region10: #{generator_forward.1} parent=5 // pred_check_branch
        %257 = sbr.rel (%p254) target = $region12
      $region11: #{generator_forward.1} parent=5 // pred_region
        %s258 = ssub.s32 %s19, 1
        // Predicated region
        $region13: #{generator_forward.1} parent=11 // pred_check
          %p259 = pneg %p40
        $region14: #{generator_forward.1} parent=11 // pred_check_branch
          %261 = sbr.rel (%p259) target = $region16
        $region15: #{generator_forward.1} parent=11 // pred_region
          _
        $region16: #{generator_forward.1} parent=11 // pred_fallthru
          _
        // Predicated region
        $region17: #{generator_forward.1} parent=11 // pred_check
          %p262 = pneg %p61
        $region18: #{generator_forward.1} parent=11 // pred_check_branch
          %264 = sbr.rel (%p262) target = $region20
        $region19: #{generator_forward.1} parent=11 // pred_region
          %s266 = ssub.s32 2048, 2048
          %267 = vsyncadd [#allocation3], %s266
          %s268 = sshll.u32 [#allocation2], 4
          %s269 = int_to_ptr.vmem [resolvable:$true] %s268
          %274 = dma.hbm_to_vmem [thread:$0]  %s1, 2048, %s269, [#allocation3], 128, 128, 8
        $region20: #{generator_forward.1} parent=11 // pred_fallthru
          _
        // Predicated region
        $region21: #{generator_forward.1} parent=11 // pred_check
          %p275 = pneg %p82
        $region22: #{generator_forward.1} parent=11 // pred_check_branch
          %277 = sbr.rel (%p275) target = $region24
        $region23: #{generator_forward.1} parent=11 // pred_region
          %s279 = ssub.s32 32, 32
          %280 = vsyncadd [#allocation5], %s279
          %s282 = sshll.u32 [#allocation4], 4
          %s283 = int_to_ptr.vmem [resolvable:$true] %s282
          %285 = dma.hbm_to_vmem [thread:$0]  %s2, 32, %s283, [#allocation5]
        $region24: #{generator_forward.1} parent=11 // pred_fallthru
          _
        // Predicated region
        $region25: #{generator_forward.1} parent=11 // pred_check
          %p286 = pneg %p103
        $region26: #{generator_forward.1} parent=11 // pred_check_branch
          %288 = sbr.rel (%p286) target = $region28
        $region27: #{generator_forward.1} parent=11 // pred_region
          %s290 = ssub.s32 8192, 8192
          %291 = vsyncadd [#allocation5], %s290
          %s292 = sshll.u32 [#allocation6], 4
          %s293 = int_to_ptr.vmem [resolvable:$true] %s292
          %298 = dma.hbm_to_vmem [thread:$0]  %s3, 8192, %s293, [#allocation5], 256, 256, 16
        $region28: #{generator_forward.1} parent=11 // pred_fallthru
          _
        // Predicated region
        $region29: #{generator_forward.1} parent=11 // pred_check
          %p299 = pneg %p124
        $region30: #{generator_forward.1} parent=11 // pred_check_branch
          %301 = sbr.rel (%p299) target = $region32
        $region31: #{generator_forward.1} parent=11 // pred_region
          %s303 = ssub.s32 64, 64
          %304 = vsyncadd [#allocation8], %s303
          %s306 = sshll.u32 [#allocation7], 4
          %s307 = int_to_ptr.vmem [resolvable:$true] %s306
          %309 = dma.hbm_to_vmem [thread:$0]  %s4, 64, %s307, [#allocation8]
        $region32: #{generator_forward.1} parent=11 // pred_fallthru
          _
        // Predicated region
        $region33: #{generator_forward.1} parent=11 // pred_check
          %p310 = pneg %p145
        $region34: #{generator_forward.1} parent=11 // pred_check_branch
          %312 = sbr.rel (%p310) target = $region36
        $region35: #{generator_forward.1} parent=11 // pred_region
          %s314 = ssub.s32 32768, 32768
          %315 = vsyncadd [#allocation8], %s314
          %s316 = sshll.u32 [#allocation9], 4
          %s317 = int_to_ptr.vmem [resolvable:$true] %s316
          %322 = dma.hbm_to_vmem [thread:$0]  %s5, 32768, %s317, [#allocation8], 512, 512, 32
        $region36: #{generator_forward.1} parent=11 // pred_fallthru
          _
        // Predicated region
        $region37: #{generator_forward.1} parent=11 // pred_check
          %p323 = pneg %p166
        $region38: #{generator_forward.1} parent=11 // pred_check_branch
          %325 = sbr.rel (%p323) target = $region40
        $region39: #{generator_forward.1} parent=11 // pred_region
          %s327 = ssub.s32 128, 128
          %328 = vsyncadd [#allocation11], %s327
          %s330 = sshll.u32 [#allocation10], 4
          %s331 = int_to_ptr.vmem [resolvable:$true] %s330
          %333 = dma.hbm_to_vmem [thread:$0]  %s6, 128, %s331, [#allocation11]
        $region40: #{generator_forward.1} parent=11 // pred_fallthru
          _
      $region12: #{generator_forward.1} parent=5 // pred_fallthru
        _
      %p334 = scmp.lt.s32.totalorder %s19, 6
      // Predicated region
      $region41: #{generator_forward.1} parent=5 // pred_check
        %p335 = pneg %p334
      $region42: #{generator_forward.1} parent=5 // pred_check_branch
        %337 = sbr.rel (%p335) target = $region44
      $region43: #{generator_forward.1} parent=5 // pred_region
        // Predicated region
        $region45: #{generator_forward.1} parent=43 // pred_check
          %p338 = pneg %p186
        $region46: #{generator_forward.1} parent=43 // pred_check_branch
          %340 = sbr.rel (%p338) target = $region48
        $region47: #{generator_forward.1} parent=43 // pred_region
          %s341 = sand.u32 %s19, 1
          %s342 = scalar_lea.sflag [#allocation3], %s341
          %s343 = sand.u32 %s176, 1
          %s344 = smul.addr %s343, 4096
          %s345 = scalar_lea.vmem [#allocation12], %s344
          %s347 = ssub.s32 65536, 65536
          %348 = vsyncadd %s342, %s347
          %s349 = smul.addr %s19, 1024
          %s350 = smul.addr %s349, 64
          %s351 = scalar_lea.hbm %s7, %s350
          %s352 = sshll.u32 %s345, 4
          %s353 = int_to_ptr.vmem [resolvable:$true] %s352
          %358 = dma.hbm_to_vmem [thread:$0]  %s351, 65536, %s353, %s342, 512, 512, 32
        $region48: #{generator_forward.1} parent=43 // pred_fallthru
          _
        // Predicated region
        $region49: #{generator_forward.1} parent=43 // pred_check
          %p359 = pneg %p212
        $region50: #{generator_forward.1} parent=43 // pred_check_branch
          %361 = sbr.rel (%p359) target = $region52
        $region51: #{generator_forward.1} parent=43 // pred_region
          %s362 = sand.u32 %s19, 1
          %s363 = scalar_lea.sflag [#allocation3], %s362
          %s364 = sand.u32 %s202, 1
          %s365 = smul.addr %s364, 8
          %s366 = scalar_lea.vmem [#allocation13], %s365
          %s367 = smul.u32 8, %s19
          %s369 = ssub.s32 128, 128
          %370 = vsyncadd %s363, %s369
          %s371 = smul.addr %s367, 16
          %s372 = scalar_lea.hbm %s8, %s371
          %s374 = sshll.u32 %s366, 4
          %s375 = int_to_ptr.vmem [resolvable:$true] %s374
          %377 = dma.hbm_to_vmem [thread:$0]  %s372, 128, %s375, %s363
        $region52: #{generator_forward.1} parent=43 // pred_fallthru
          _
      $region44: #{generator_forward.1} parent=5 // pred_fallthru
        _
      %p378 = scmp.le.s32.totalorder 1, %s19
      %p379 = scmp.lt.s32.totalorder %s19, 7
      %p380 = pnand %p378, %p379
      %p381 = pneg %p380
      // Predicated region
      $region53: #{generator_forward.1} parent=5 // pred_check
        _
      $region54: #{generator_forward.1} parent=5 // pred_check_branch
        %383 = sbr.rel (%p380) target = $region56
      $region55: #{generator_forward.1} parent=5 // pred_region
        %s384 = ssub.s32 %s19, 1
        // Predicated region
        $region57: #{generator_forward.1} parent=55 // pred_check
          %p385 = pneg %p61
        $region58: #{generator_forward.1} parent=55 // pred_check_branch
          %387 = sbr.rel (%p385) target = $region60
        $region59: #{generator_forward.1} parent=55 // pred_region
          %388 = dma.done [#allocation3], 2048
        $region60: #{generator_forward.1} parent=55 // pred_fallthru
          _
        // Predicated region
        $region61: #{generator_forward.1} parent=55 // pred_check
          %p389 = pneg %p82
        $region62: #{generator_forward.1} parent=55 // pred_check_branch
          %391 = sbr.rel (%p389) target = $region64
        $region63: #{generator_forward.1} parent=55 // pred_region
          %392 = dma.done [#allocation5], 32
        $region64: #{generator_forward.1} parent=55 // pred_fallthru
          _
        // Predicated region
        $region65: #{generator_forward.1} parent=55 // pred_check
          %p393 = pneg %p103
        $region66: #{generator_forward.1} parent=55 // pred_check_branch
          %395 = sbr.rel (%p393) target = $region68
        $region67: #{generator_forward.1} parent=55 // pred_region
          %396 = dma.done [#allocation5], 8192
        $region68: #{generator_forward.1} parent=55 // pred_fallthru
          _
        // Predicated region
        $region69: #{generator_forward.1} parent=55 // pred_check
          %p397 = pneg %p124
        $region70: #{generator_forward.1} parent=55 // pred_check_branch
          %399 = sbr.rel (%p397) target = $region72
        $region71: #{generator_forward.1} parent=55 // pred_region
          %400 = dma.done [#allocation8], 64
        $region72: #{generator_forward.1} parent=55 // pred_fallthru
          _
        // Predicated region
        $region73: #{generator_forward.1} parent=55 // pred_check
          %p401 = pneg %p145
        $region74: #{generator_forward.1} parent=55 // pred_check_branch
          %403 = sbr.rel (%p401) target = $region76
        $region75: #{generator_forward.1} parent=55 // pred_region
          %404 = dma.done [#allocation8], 32768
        $region76: #{generator_forward.1} parent=55 // pred_fallthru
          _
        // Predicated region
        $region77: #{generator_forward.1} parent=55 // pred_check
          %p405 = pneg %p166
        $region78: #{generator_forward.1} parent=55 // pred_check_branch
          %407 = sbr.rel (%p405) target = $region80
        $region79: #{generator_forward.1} parent=55 // pred_region
          %408 = dma.done [#allocation11], 128
        $region80: #{generator_forward.1} parent=55 // pred_fallthru
          _
        %s409 = sand.u32 %s24, 1
        %s410 = scalar_lea.sflag [#allocation3], %s409
        %s411 = sand.u32 %s179, 1
        %s412 = smul.addr %s411, 4096
        %s413 = scalar_lea.vmem [#allocation12], %s412
        // Predicated region
        $region81: #{generator_forward.1} parent=55 // pred_check
          %p414 = pneg %p192
        $region82: #{generator_forward.1} parent=55 // pred_check_branch
          %416 = sbr.rel (%p414) target = $region84
        $region83: #{generator_forward.1} parent=55 // pred_region
          %417 = dma.done %s410, 65536
        $region84: #{generator_forward.1} parent=55 // pred_fallthru
          _
        %s418 = sand.u32 %s24, 1
        %s419 = scalar_lea.sflag [#allocation3], %s418
        %s420 = sand.u32 %s205, 1
        %s421 = smul.addr %s420, 8
        %s422 = scalar_lea.vmem [#allocation13], %s421
        // Predicated region
        $region85: #{generator_forward.1} parent=55 // pred_check
          %p423 = pneg %p218
        $region86: #{generator_forward.1} parent=55 // pred_check_branch
          %425 = sbr.rel (%p423) target = $region88
        $region87: #{generator_forward.1} parent=55 // pred_region
          %426 = dma.done %s419, 128
        $region88: #{generator_forward.1} parent=55 // pred_fallthru
          _
        %p427 = pneg %p40
        %p428 = pneg %p37
        %p429 = pneg %p61
        %p430 = pneg %p58
        %p431 = pneg %p82
        %p432 = pneg %p79
        %p433 = pneg %p103
        %p434 = pneg %p100
        %p435 = pneg %p124
        %p436 = pneg %p121
        %p437 = pneg %p145
        %p438 = pneg %p142
        %p439 = pneg %p166
        %p440 = pneg %p163
        %s441 = sand.u32 %s24, 1
        %s442 = scalar_lea.sflag [#allocation3], %s441
        %s443 = sand.u32 %s179, 1
        %s444 = smul.addr %s443, 4096
        %s445 = scalar_lea.vmem [#allocation12], %s444
        %p446 = pneg %p192
        %p447 = pneg %p189
        %s448 = sand.u32 %s24, 1
        %s449 = scalar_lea.sflag [#allocation3], %s448
        %s450 = sand.u32 %s205, 1
        %s451 = smul.addr %s450, 8
        %s452 = scalar_lea.vmem [#allocation13], %s451
        %p453 = pneg %p218
        %p454 = pneg %p215
        %p455 = pneg %p244
        %p456 = pneg %p241
        %s457 = smul.u32 8, %s24
        %p458 = scmp.lt.s32.totalorder %s457, 47
        %s459 = scalar_select %p458, %s457, 47
        %s460 = smul.addr %s459, 8
        %s461 = scalar_lea.vmem %s9, %s460
        %s462 = smul.u32 8, %s24
        %s463 = smul.u32 8, %s24
        %p464 = scmp.lt.s32.totalorder %s463, 47
        %s465 = scalar_select %p464, %s463, 47
        %s466 = smul.addr %s465, 8
        %s467 = scalar_lea.vmem %s9, %s466
        %s468 = smul.u32 8, %s24
        %v470 = vld [vmem:[%s0] sm:$0xff]
        %v471 = vpack.c.bf16 %v470, %v470
        %v472 = vld [vmem:[#allocation2] sm:$0xff]
        %v473 = vld [vmem:[#allocation2 + $0x8] sm:$0xff]
        %v474 = vld [vmem:[#allocation2 + $0x10] sm:$0xff]
        %v475 = vld [vmem:[#allocation2 + $0x18] sm:$0xff]
        %v476 = vld [vmem:[#allocation2 + $0x20] sm:$0xff]
        %v477 = vld [vmem:[#allocation2 + $0x28] sm:$0xff]
        %v478 = vld [vmem:[#allocation2 + $0x30] sm:$0xff]
        %v479 = vld [vmem:[#allocation2 + $0x38] sm:$0xff]
        %v480 = vld [vmem:[#allocation2 + $0x40] sm:$0xff]
        %v481 = vld [vmem:[#allocation2 + $0x48] sm:$0xff]
        %v482 = vld [vmem:[#allocation2 + $0x50] sm:$0xff]
        %v483 = vld [vmem:[#allocation2 + $0x58] sm:$0xff]
        %v484 = vld [vmem:[#allocation2 + $0x60] sm:$0xff]
        %v485 = vld [vmem:[#allocation2 + $0x68] sm:$0xff]
        %v486 = vld [vmem:[#allocation2 + $0x70] sm:$0xff]
        %v487 = vld [vmem:[#allocation2 + $0x78] sm:$0xff]
        %v488 = vld [vmem:[#allocation4] sm:$0x3]
        %v490 = vlaneseq
        %v491 = vshrl.u32 %v490, 7
        %v492 = vsub.s32 0, %v491
        %v493 = vrot.slane %v488, %v492
        %v494 = vlaneseq
        %v495 = vshrl.u32 %v494, 7
        %v496 = vsub.s32 1, %v495
        %v497 = vrot.slane %v488, %v496
        %v516 = vunpack.c.l.b16 %v472
        %v517 = vunpack.c.h.b16 %v472
        %v518 = vunpack.c.l.b16 %v473
        %v519 = vunpack.c.h.b16 %v473
        %v520 = vunpack.c.l.b16 %v474
        %v521 = vunpack.c.h.b16 %v474
        %v522 = vunpack.c.l.b16 %v475
        %v523 = vunpack.c.h.b16 %v475
        %v524 = vunpack.c.l.b16 %v476
        %v525 = vunpack.c.h.b16 %v476
        %v526 = vunpack.c.l.b16 %v477
        %v527 = vunpack.c.h.b16 %v477
        %v528 = vunpack.c.l.b16 %v478
        %v529 = vunpack.c.h.b16 %v478
        %v530 = vunpack.c.l.b16 %v479
        %v531 = vunpack.c.h.b16 %v479
        %v532 = vunpack.c.l.b16 %v480
        %v533 = vunpack.c.h.b16 %v480
        %v534 = vunpack.c.l.b16 %v481
        %v535 = vunpack.c.h.b16 %v481
        %v536 = vunpack.c.l.b16 %v482
        %v537 = vunpack.c.h.b16 %v482
        %v538 = vunpack.c.l.b16 %v483
        %v539 = vunpack.c.h.b16 %v483
        %v540 = vunpack.c.l.b16 %v484
        %v541 = vunpack.c.h.b16 %v484
        %v542 = vunpack.c.l.b16 %v485
        %v543 = vunpack.c.h.b16 %v485
        %v544 = vunpack.c.l.b16 %v486
        %v545 = vunpack.c.h.b16 %v486
        %v546 = vunpack.c.l.b16 %v487
        %v547 = vunpack.c.h.b16 %v487
        %v548 = vpack.c.b16 %v518, %v516
        %v549 = vpack.c.b16 %v519, %v517
        %v550 = vpack.c.b16 %v522, %v520
        %v551 = vpack.c.b16 %v523, %v521
        %v552 = vpack.c.b16 %v526, %v524
        %v553 = vpack.c.b16 %v527, %v525
        %v554 = vpack.c.b16 %v530, %v528
        %v555 = vpack.c.b16 %v531, %v529
        %v556 = vpack.c.b16 %v534, %v532
        %v557 = vpack.c.b16 %v535, %v533
        %v558 = vpack.c.b16 %v538, %v536
        %v559 = vpack.c.b16 %v539, %v537
        %v560 = vpack.c.b16 %v542, %v540
        %v561 = vpack.c.b16 %v543, %v541
        %v562 = vpack.c.b16 %v546, %v544
        %v563 = vpack.c.b16 %v547, %v545
        %580 = vmatprep.subr.bf16.mxu0 %v563
        %581 = vmatpush1.bf16.msra.mxu0 %v562
        %582 = vmatprep.subr.bf16.mxu0 %v561
        %583 = vmatpush1.bf16.msra.mxu0 %v560
        %584 = vmatprep.subr.bf16.mxu0 %v559
        %585 = vmatpush1.bf16.msra.mxu0 %v558
        %586 = vmatprep.subr.bf16.mxu0 %v557
        %587 = vmatpush1.bf16.msra.mxu0 %v556
        %588 = vmatprep.subr.bf16.mxu0 %v555
        %589 = vmatpush1.bf16.msra.mxu0 %v554
        %590 = vmatprep.subr.bf16.mxu0 %v553
        %591 = vmatpush1.bf16.msra.mxu0 %v552
        %592 = vmatprep.subr.bf16.mxu0 %v551
        %593 = vmatpush1.bf16.msra.mxu0 %v550
        %594 = vmatprep.subr.bf16.mxu0 %v549
        %595 = vmatpush1.bf16.msra.mxu0 %v548
        %596 = vmatprep.subr.bf16.mxu0 0
        %597 = vmatpush2.bf16.msra.mxu0 0
        %598 = vmatprep.subr.bf16.mxu0 0
        %599 = vmatpush2.bf16.msra.mxu0 0
        %600 = vmatprep.subr.bf16.mxu0 0
        %601 = vmatpush2.bf16.msra.mxu0 0
        %602 = vmatprep.subr.bf16.mxu0 0
        %603 = vmatpush2.bf16.msra.mxu0 0
        %604 = vmatprep.subr.bf16.mxu0 0
        %605 = vmatpush2.bf16.msra.mxu0 0
        %606 = vmatprep.subr.bf16.mxu0 0
        %607 = vmatpush2.bf16.msra.mxu0 0
        %608 = vmatprep.subr.bf16.mxu0 0
        %609 = vmatpush2.bf16.msra.mxu0 0
        %610 = vmatprep.subr.bf16.mxu0 0
        %611 = vmatpush2.bf16.msra.mxu0 0
        %612 = vmatprep.mubr.bf16.mxu0 0
        %613 = vmatmul.mubr.bf16.gmra.mxu0 %v471
        %v614 = vpop.f32.mrf.mxu0
        %v615 = vadd.f32 %v493, %v614
        %v616 = vpop.f32.mrf.mxu0
        %v617 = vadd.f32 %v497, %v616
        %v618 = vpop.f32.mrf.mxu0
        %v619 = vpop.f32.mrf.mxu0
        %620 = vdwg.mxu0
        %v621 = vmax.f32 %v615, 0.0
        %v622 = vmax.f32 %v617, 0.0
        %v623 = vpack.c.bf16 %v621, %v621
        %v624 = vpack.c.bf16 %v622, %v622
        %v625 = vld [vmem:[#allocation6] sm:$0xff]
        %v626 = vld [vmem:[#allocation6 + $0x8] sm:$0xff]
        %v627 = vld [vmem:[#allocation6 + $0x10] sm:$0xff]
        %v628 = vld [vmem:[#allocation6 + $0x18] sm:$0xff]
        %v629 = vld [vmem:[#allocation6 + $0x20] sm:$0xff]
        %v630 = vld [vmem:[#allocation6 + $0x28] sm:$0xff]
        %v631 = vld [vmem:[#allocation6 + $0x30] sm:$0xff]
        %v632 = vld [vmem:[#allocation6 + $0x38] sm:$0xff]
        %v633 = vld [vmem:[#allocation6 + $0x40] sm:$0xff]
        %v634 = vld [vmem:[#allocation6 + $0x48] sm:$0xff]
        %v635 = vld [vmem:[#allocation6 + $0x50] sm:$0xff]
        %v636 = vld [vmem:[#allocation6 + $0x58] sm:$0xff]
        %v637 = vld [vmem:[#allocation6 + $0x60] sm:$0xff]
        %v638 = vld [vmem:[#allocation6 + $0x68] sm:$0xff]
        %v639 = vld [vmem:[#allocation6 + $0x70] sm:$0xff]
        %v640 = vld [vmem:[#allocation6 + $0x78] sm:$0xff]
        %v641 = vld [vmem:[#allocation6 + $0x80] sm:$0xff]
        %v642 = vld [vmem:[#allocation6 + $0x88] sm:$0xff]
        %v643 = vld [vmem:[#allocation6 + $0x90] sm:$0xff]
        %v644 = vld [vmem:[#allocation6 + $0x98] sm:$0xff]
        %v645 = vld [vmem:[#allocation6 + $0xa0] sm:$0xff]
        %v646 = vld [vmem:[#allocation6 + $0xa8] sm:$0xff]
        %v647 = vld [vmem:[#allocation6 + $0xb0] sm:$0xff]
        %v648 = vld [vmem:[#allocation6 + $0xb8] sm:$0xff]
        %v649 = vld [vmem:[#allocation6 + $0xc0] sm:$0xff]
        %v650 = vld [vmem:[#allocation6 + $0xc8] sm:$0xff]
        %v651 = vld [vmem:[#allocation6 + $0xd0] sm:$0xff]
        %v652 = vld [vmem:[#allocation6 + $0xd8] sm:$0xff]
        %v653 = vld [vmem:[#allocation6 + $0xe0] sm:$0xff]
        %v654 = vld [vmem:[#allocation6 + $0xe8] sm:$0xff]
        %v655 = vld [vmem:[#allocation6 + $0xf0] sm:$0xff]
        %v656 = vld [vmem:[#allocation6 + $0xf8] sm:$0xff]
        %v657 = vld [vmem:[#allocation6 + $0x100] sm:$0xff]
        %v658 = vld [vmem:[#allocation6 + $0x108] sm:$0xff]
        %v659 = vld [vmem:[#allocation6 + $0x110] sm:$0xff]
        %v660 = vld [vmem:[#allocation6 + $0x118] sm:$0xff]
        %v661 = vld [vmem:[#allocation6 + $0x120] sm:$0xff]
        %v662 = vld [vmem:[#allocation6 + $0x128] sm:$0xff]
        %v663 = vld [vmem:[#allocation6 + $0x130] sm:$0xff]
        %v664 = vld [vmem:[#allocation6 + $0x138] sm:$0xff]
        %v665 = vld [vmem:[#allocation6 + $0x140] sm:$0xff]
        %v666 = vld [vmem:[#allocation6 + $0x148] sm:$0xff]
        %v667 = vld [vmem:[#allocation6 + $0x150] sm:$0xff]
        %v668 = vld [vmem:[#allocation6 + $0x158] sm:$0xff]
        %v669 = vld [vmem:[#allocation6 + $0x160] sm:$0xff]
        %v670 = vld [vmem:[#allocation6 + $0x168] sm:$0xff]
        %v671 = vld [vmem:[#allocation6 + $0x170] sm:$0xff]
        %v672 = vld [vmem:[#allocation6 + $0x178] sm:$0xff]
        %v673 = vld [vmem:[#allocation6 + $0x180] sm:$0xff]
        %v674 = vld [vmem:[#allocation6 + $0x188] sm:$0xff]
        %v675 = vld [vmem:[#allocation6 + $0x190] sm:$0xff]
        %v676 = vld [vmem:[#allocation6 + $0x198] sm:$0xff]
        %v677 = vld [vmem:[#allocation6 + $0x1a0] sm:$0xff]
        %v678 = vld [vmem:[#allocation6 + $0x1a8] sm:$0xff]
        %v679 = vld [vmem:[#allocation6 + $0x1b0] sm:$0xff]
        %v680 = vld [vmem:[#allocation6 + $0x1b8] sm:$0xff]
        %v681 = vld [vmem:[#allocation6 + $0x1c0] sm:$0xff]
        %v682 = vld [vmem:[#allocation6 + $0x1c8] sm:$0xff]
        %v683 = vld [vmem:[#allocation6 + $0x1d0] sm:$0xff]
        %v684 = vld [vmem:[#allocation6 + $0x1d8] sm:$0xff]
        %v685 = vld [vmem:[#allocation6 + $0x1e0] sm:$0xff]
        %v686 = vld [vmem:[#allocation6 + $0x1e8] sm:$0xff]
        %v687 = vld [vmem:[#allocation6 + $0x1f0] sm:$0xff]
        %v688 = vld [vmem:[#allocation6 + $0x1f8] sm:$0xff]
        %v689 = vld [vmem:[#allocation7] sm:$0xf]
        %v691 = vlaneseq
        %v692 = vshrl.u32 %v691, 7
        %v693 = vsub.s32 0, %v692
        %v694 = vrot.slane %v689, %v693
        %v695 = vlaneseq
        %v696 = vshrl.u32 %v695, 7
        %v697 = vsub.s32 1, %v696
        %v698 = vrot.slane %v689, %v697
        %v699 = vlaneseq
        %v700 = vshrl.u32 %v699, 7
        %v701 = vsub.s32 2, %v700
        %v702 = vrot.slane %v689, %v701
        %v703 = vlaneseq
        %v704 = vshrl.u32 %v703, 7
        %v705 = vsub.s32 3, %v704
        %v706 = vrot.slane %v689, %v705
        %v775 = vunpack.c.l.b16 %v625
        %v776 = vunpack.c.h.b16 %v625
        %v777 = vunpack.c.l.b16 %v626
        %v778 = vunpack.c.h.b16 %v626
        %v779 = vunpack.c.l.b16 %v627
        %v780 = vunpack.c.h.b16 %v627
        %v781 = vunpack.c.l.b16 %v628
        %v782 = vunpack.c.h.b16 %v628
        %v783 = vunpack.c.l.b16 %v629
        %v784 = vunpack.c.h.b16 %v629
        %v785 = vunpack.c.l.b16 %v630
        %v786 = vunpack.c.h.b16 %v630
        %v787 = vunpack.c.l.b16 %v631
        %v788 = vunpack.c.h.b16 %v631
        %v789 = vunpack.c.l.b16 %v632
        %v790 = vunpack.c.h.b16 %v632
        %v791 = vunpack.c.l.b16 %v633
        %v792 = vunpack.c.h.b16 %v633
        %v793 = vunpack.c.l.b16 %v634
        %v794 = vunpack.c.h.b16 %v634
        %v795 = vunpack.c.l.b16 %v635
        %v796 = vunpack.c.h.b16 %v635
        %v797 = vunpack.c.l.b16 %v636
        %v798 = vunpack.c.h.b16 %v636
        %v799 = vunpack.c.l.b16 %v637
        %v800 = vunpack.c.h.b16 %v637
        %v801 = vunpack.c.l.b16 %v638
        %v802 = vunpack.c.h.b16 %v638
        %v803 = vunpack.c.l.b16 %v639
        %v804 = vunpack.c.h.b16 %v639
        %v805 = vunpack.c.l.b16 %v640
        %v806 = vunpack.c.h.b16 %v640
        %v807 = vunpack.c.l.b16 %v641
        %v808 = vunpack.c.h.b16 %v641
        %v809 = vunpack.c.l.b16 %v642
        %v810 = vunpack.c.h.b16 %v642
        %v811 = vunpack.c.l.b16 %v643
        %v812 = vunpack.c.h.b16 %v643
        %v813 = vunpack.c.l.b16 %v644
        %v814 = vunpack.c.h.b16 %v644
        %v815 = vunpack.c.l.b16 %v645
        %v816 = vunpack.c.h.b16 %v645
        %v817 = vunpack.c.l.b16 %v646
        %v818 = vunpack.c.h.b16 %v646
        %v819 = vunpack.c.l.b16 %v647
        %v820 = vunpack.c.h.b16 %v647
        %v821 = vunpack.c.l.b16 %v648
        %v822 = vunpack.c.h.b16 %v648
        %v823 = vunpack.c.l.b16 %v649
        %v824 = vunpack.c.h.b16 %v649
        %v825 = vunpack.c.l.b16 %v650
        %v826 = vunpack.c.h.b16 %v650
        %v827 = vunpack.c.l.b16 %v651
        %v828 = vunpack.c.h.b16 %v651
        %v829 = vunpack.c.l.b16 %v652
        %v830 = vunpack.c.h.b16 %v652
        %v831 = vunpack.c.l.b16 %v653
        %v832 = vunpack.c.h.b16 %v653
        %v833 = vunpack.c.l.b16 %v654
        %v834 = vunpack.c.h.b16 %v654
        %v835 = vunpack.c.l.b16 %v655
        %v836 = vunpack.c.h.b16 %v655
        %v837 = vunpack.c.l.b16 %v656
        %v838 = vunpack.c.h.b16 %v656
        %v839 = vunpack.c.l.b16 %v657
        %v840 = vunpack.c.h.b16 %v657
        %v841 = vunpack.c.l.b16 %v658
        %v842 = vunpack.c.h.b16 %v658
        %v843 = vunpack.c.l.b16 %v659
        %v844 = vunpack.c.h.b16 %v659
        %v845 = vunpack.c.l.b16 %v660
        %v846 = vunpack.c.h.b16 %v660
        %v847 = vunpack.c.l.b16 %v661
        %v848 = vunpack.c.h.b16 %v661
        %v849 = vunpack.c.l.b16 %v662
        %v850 = vunpack.c.h.b16 %v662
        %v851 = vunpack.c.l.b16 %v663
        %v852 = vunpack.c.h.b16 %v663
        %v853 = vunpack.c.l.b16 %v664
        %v854 = vunpack.c.h.b16 %v664
        %v855 = vunpack.c.l.b16 %v665
        %v856 = vunpack.c.h.b16 %v665
        %v857 = vunpack.c.l.b16 %v666
        %v858 = vunpack.c.h.b16 %v666
        %v859 = vunpack.c.l.b16 %v667
        %v860 = vunpack.c.h.b16 %v667
        %v861 = vunpack.c.l.b16 %v668
        %v862 = vunpack.c.h.b16 %v668
        %v863 = vunpack.c.l.b16 %v669
        %v864 = vunpack.c.h.b16 %v669
        %v865 = vunpack.c.l.b16 %v670
        %v866 = vunpack.c.h.b16 %v670
        %v867 = vunpack.c.l.b16 %v671
        %v868 = vunpack.c.h.b16 %v671
        %v869 = vunpack.c.l.b16 %v672
        %v870 = vunpack.c.h.b16 %v672
        %v871 = vunpack.c.l.b16 %v673
        %v872 = vunpack.c.h.b16 %v673
        %v873 = vunpack.c.l.b16 %v674
        %v874 = vunpack.c.h.b16 %v674
        %v875 = vunpack.c.l.b16 %v675
        %v876 = vunpack.c.h.b16 %v675
        %v877 = vunpack.c.l.b16 %v676
        %v878 = vunpack.c.h.b16 %v676
        %v879 = vunpack.c.l.b16 %v677
        %v880 = vunpack.c.h.b16 %v677
        %v881 = vunpack.c.l.b16 %v678
        %v882 = vunpack.c.h.b16 %v678
        %v883 = vunpack.c.l.b16 %v679
        %v884 = vunpack.c.h.b16 %v679
        %v885 = vunpack.c.l.b16 %v680
        %v886 = vunpack.c.h.b16 %v680
        %v887 = vunpack.c.l.b16 %v681
        %v888 = vunpack.c.h.b16 %v681
        %v889 = vunpack.c.l.b16 %v682
        %v890 = vunpack.c.h.b16 %v682
        %v891 = vunpack.c.l.b16 %v683
        %v892 = vunpack.c.h.b16 %v683
        %v893 = vunpack.c.l.b16 %v684
        %v894 = vunpack.c.h.b16 %v684
        %v895 = vunpack.c.l.b16 %v685
        %v896 = vunpack.c.h.b16 %v685
        %v897 = vunpack.c.l.b16 %v686
        %v898 = vunpack.c.h.b16 %v686
        %v899 = vunpack.c.l.b16 %v687
        %v900 = vunpack.c.h.b16 %v687
        %v901 = vunpack.c.l.b16 %v688
        %v902 = vunpack.c.h.b16 %v688
        %v903 = vpack.c.b16 %v779, %v775
        %v904 = vpack.c.b16 %v780, %v776
        %v905 = vpack.c.b16 %v781, %v777
        %v906 = vpack.c.b16 %v782, %v778
        %v907 = vpack.c.b16 %v787, %v783
        %v908 = vpack.c.b16 %v788, %v784
        %v909 = vpack.c.b16 %v789, %v785
        %v910 = vpack.c.b16 %v790, %v786
        %v911 = vpack.c.b16 %v795, %v791
        %v912 = vpack.c.b16 %v796, %v792
        %v913 = vpack.c.b16 %v797, %v793
        %v914 = vpack.c.b16 %v798, %v794
        %v915 = vpack.c.b16 %v803, %v799
        %v916 = vpack.c.b16 %v804, %v800
        %v917 = vpack.c.b16 %v805, %v801
        %v918 = vpack.c.b16 %v806, %v802
        %v919 = vpack.c.b16 %v811, %v807
        %v920 = vpack.c.b16 %v812, %v808
        %v921 = vpack.c.b16 %v813, %v809
        %v922 = vpack.c.b16 %v814, %v810
        %v923 = vpack.c.b16 %v819, %v815
        %v924 = vpack.c.b16 %v820, %v816
        %v925 = vpack.c.b16 %v821, %v817
        %v926 = vpack.c.b16 %v822, %v818
        %v927 = vpack.c.b16 %v827, %v823
        %v928 = vpack.c.b16 %v828, %v824
        %v929 = vpack.c.b16 %v829, %v825
        %v930 = vpack.c.b16 %v830, %v826
        %v931 = vpack.c.b16 %v835, %v831
        %v932 = vpack.c.b16 %v836, %v832
        %v933 = vpack.c.b16 %v837, %v833
        %v934 = vpack.c.b16 %v838, %v834
        %v935 = vpack.c.b16 %v843, %v839
        %v936 = vpack.c.b16 %v844, %v840
        %v937 = vpack.c.b16 %v845, %v841
        %v938 = vpack.c.b16 %v846, %v842
        %v939 = vpack.c.b16 %v851, %v847
        %v940 = vpack.c.b16 %v852, %v848
        %v941 = vpack.c.b16 %v853, %v849
        %v942 = vpack.c.b16 %v854, %v850
        %v943 = vpack.c.b16 %v859, %v855
        %v944 = vpack.c.b16 %v860, %v856
        %v945 = vpack.c.b16 %v861, %v857
        %v946 = vpack.c.b16 %v862, %v858
        %v947 = vpack.c.b16 %v867, %v863
        %v948 = vpack.c.b16 %v868, %v864
        %v949 = vpack.c.b16 %v869, %v865
        %v950 = vpack.c.b16 %v870, %v866
        %v951 = vpack.c.b16 %v875, %v871
        %v952 = vpack.c.b16 %v876, %v872
        %v953 = vpack.c.b16 %v877, %v873
        %v954 = vpack.c.b16 %v878, %v874
        %v955 = vpack.c.b16 %v883, %v879
        %v956 = vpack.c.b16 %v884, %v880
        %v957 = vpack.c.b16 %v885, %v881
        %v958 = vpack.c.b16 %v886, %v882
        %v959 = vpack.c.b16 %v891, %v887
        %v960 = vpack.c.b16 %v892, %v888
        %v961 = vpack.c.b16 %v893, %v889
        %v962 = vpack.c.b16 %v894, %v890
        %v963 = vpack.c.b16 %v899, %v895
        %v964 = vpack.c.b16 %v900, %v896
        %v965 = vpack.c.b16 %v901, %v897
        %v966 = vpack.c.b16 %v902, %v898
        %1031 = vmatprep.subr.bf16.mxu0 %v932
        %1032 = vmatpush1.bf16.msra.mxu0 %v931
        %1033 = vmatprep.subr.bf16.mxu0 %v928
        %1034 = vmatpush1.bf16.msra.mxu0 %v927
        %1035 = vmatprep.subr.bf16.mxu0 %v924
        %1036 = vmatpush1.bf16.msra.mxu0 %v923
        %1037 = vmatprep.subr.bf16.mxu0 %v920
        %1038 = vmatpush1.bf16.msra.mxu0 %v919
        %1039 = vmatprep.subr.bf16.mxu0 %v916
        %1040 = vmatpush1.bf16.msra.mxu0 %v915
        %1041 = vmatprep.subr.bf16.mxu0 %v912
        %1042 = vmatpush1.bf16.msra.mxu0 %v911
        %1043 = vmatprep.subr.bf16.mxu0 %v908
        %1044 = vmatpush1.bf16.msra.mxu0 %v907
        %1045 = vmatprep.subr.bf16.mxu0 %v904
        %1046 = vmatpush1.bf16.msra.mxu0 %v903
        %1047 = vmatprep.subr.bf16.mxu0 %v964
        %1048 = vmatpush2.bf16.msra.mxu0 %v963
        %1049 = vmatprep.subr.bf16.mxu0 %v960
        %1050 = vmatpush2.bf16.msra.mxu0 %v959
        %1051 = vmatprep.subr.bf16.mxu0 %v956
        %1052 = vmatpush2.bf16.msra.mxu0 %v955
        %1053 = vmatprep.subr.bf16.mxu0 %v952
        %1054 = vmatpush2.bf16.msra.mxu0 %v951
        %1055 = vmatprep.subr.bf16.mxu0 %v948
        %1056 = vmatpush2.bf16.msra.mxu0 %v947
        %1057 = vmatprep.subr.bf16.mxu0 %v944
        %1058 = vmatpush2.bf16.msra.mxu0 %v943
        %1059 = vmatprep.subr.bf16.mxu0 %v940
        %1060 = vmatpush2.bf16.msra.mxu0 %v939
        %1061 = vmatprep.subr.bf16.mxu0 %v936
        %1062 = vmatpush2.bf16.msra.mxu0 %v935
        %1063 = vmatprep.mubr.bf16.mxu0 %v624
        %1064 = vmatmul.mubr.bf16.gmra.mxu0 %v623
        %v1065 = vpop.f32.mrf.mxu0
        %v1066 = vadd.f32 %v694, %v1065
        %v1067 = vpop.f32.mrf.mxu0
        %v1068 = vadd.f32 %v698, %v1067
        %v1069 = vpop.f32.mrf.mxu0
        %v1070 = vpop.f32.mrf.mxu0
        %1071 = vdwg.mxu0
        %1072 = vmatprep.subr.bf16.mxu0 %v934
        %1073 = vmatpush1.bf16.msra.mxu0 %v933
        %1074 = vmatprep.subr.bf16.mxu0 %v930
        %1075 = vmatpush1.bf16.msra.mxu0 %v929
        %1076 = vmatprep.subr.bf16.mxu0 %v926
        %1077 = vmatpush1.bf16.msra.mxu0 %v925
        %1078 = vmatprep.subr.bf16.mxu0 %v922
        %1079 = vmatpush1.bf16.msra.mxu0 %v921
        %1080 = vmatprep.subr.bf16.mxu0 %v918
        %1081 = vmatpush1.bf16.msra.mxu0 %v917
        %1082 = vmatprep.subr.bf16.mxu0 %v914
        %1083 = vmatpush1.bf16.msra.mxu0 %v913
        %1084 = vmatprep.subr.bf16.mxu0 %v910
        %1085 = vmatpush1.bf16.msra.mxu0 %v909
        %1086 = vmatprep.subr.bf16.mxu0 %v906
        %1087 = vmatpush1.bf16.msra.mxu0 %v905
        %1088 = vmatprep.subr.bf16.mxu0 %v966
        %1089 = vmatpush2.bf16.msra.mxu0 %v965
        %1090 = vmatprep.subr.bf16.mxu0 %v962
        %1091 = vmatpush2.bf16.msra.mxu0 %v961
        %1092 = vmatprep.subr.bf16.mxu0 %v958
        %1093 = vmatpush2.bf16.msra.mxu0 %v957
        %1094 = vmatprep.subr.bf16.mxu0 %v954
        %1095 = vmatpush2.bf16.msra.mxu0 %v953
        %1096 = vmatprep.subr.bf16.mxu0 %v950
        %1097 = vmatpush2.bf16.msra.mxu0 %v949
        %1098 = vmatprep.subr.bf16.mxu0 %v946
        %1099 = vmatpush2.bf16.msra.mxu0 %v945
        %1100 = vmatprep.subr.bf16.mxu0 %v942
        %1101 = vmatpush2.bf16.msra.mxu0 %v941
        %1102 = vmatprep.subr.bf16.mxu0 %v938
        %1103 = vmatpush2.bf16.msra.mxu0 %v937
        %1104 = vmatprep.mubr.bf16.mxu0 %v624
        %1105 = vmatmul.mubr.bf16.gmra.mxu0 %v623
        %v1106 = vpop.f32.mrf.mxu0
        %v1107 = vadd.f32 %v702, %v1106
        %v1108 = vpop.f32.mrf.mxu0
        %v1109 = vadd.f32 %v706, %v1108
        %v1110 = vpop.f32.mrf.mxu0
        %v1111 = vpop.f32.mrf.mxu0
        %1112 = vdwg.mxu0
        %v1113 = vmax.f32 %v1066, 0.0
        %v1114 = vmax.f32 %v1068, 0.0
        %v1115 = vmax.f32 %v1107, 0.0
        %v1116 = vmax.f32 %v1109, 0.0
        %v1117 = vpack.c.bf16 %v1113, %v1113
        %v1118 = vpack.c.bf16 %v1114, %v1114
        %v1119 = vpack.c.bf16 %v1115, %v1115
        %v1120 = vpack.c.bf16 %v1116, %v1116
        %v1121 = vld [vmem:[#allocation9] sm:$0xff]
        %v1122 = vld [vmem:[#allocation9 + $0x8] sm:$0xff]
        %v1123 = vld [vmem:[#allocation9 + $0x10] sm:$0xff]
        %v1124 = vld [vmem:[#allocation9 + $0x18] sm:$0xff]
        %v1125 = vld [vmem:[#allocation9 + $0x20] sm:$0xff]
        %v1126 = vld [vmem:[#allocation9 + $0x28] sm:$0xff]
        %v1127 = vld [vmem:[#allocation9 + $0x30] sm:$0xff]
        %v1128 = vld [vmem:[#allocation9 + $0x38] sm:$0xff]
        %v1129 = vld [vmem:[#allocation9 + $0x40] sm:$0xff]
        %v1130 = vld [vmem:[#allocation9 + $0x48] sm:$0xff]
        %v1131 = vld [vmem:[#allocation9 + $0x50] sm:$0xff]
        %v1132 = vld [vmem:[#allocation9 + $0x58] sm:$0xff]
        %v1133 = vld [vmem:[#allocation9 + $0x60] sm:$0xff]
        %v1134 = vld [vmem:[#allocation9 + $0x68] sm:$0xff]
        %v1135 = vld [vmem:[#allocation9 + $0x70] sm:$0xff]
        %v1136 = vld [vmem:[#allocation9 + $0x78] sm:$0xff]
        %v1137 = vld [vmem:[#allocation9 + $0x80] sm:$0xff]
        %v1138 = vld [vmem:[#allocation9 + $0x88] sm:$0xff]
        %v1139 = vld [vmem:[#allocation9 + $0x90] sm:$0xff]
        %v1140 = vld [vmem:[#allocation9 + $0x98] sm:$0xff]
        %v1141 = vld [vmem:[#allocation9 + $0xa0] sm:$0xff]
        %v1142 = vld [vmem:[#allocation9 + $0xa8] sm:$0xff]
        %v1143 = vld [vmem:[#allocation9 + $0xb0] sm:$0xff]
        %v1144 = vld [vmem:[#allocation9 + $0xb8] sm:$0xff]
        %v1145 = vld [vmem:[#allocation9 + $0xc0] sm:$0xff]
        %v1146 = vld [vmem:[#allocation9 + $0xc8] sm:$0xff]
        %v1147 = vld [vmem:[#allocation9 + $0xd0] sm:$0xff]
        %v1148 = vld [vmem:[#allocation9 + $0xd8] sm:$0xff]
        %v1149 = vld [vmem:[#allocation9 + $0xe0] sm:$0xff]
        %v1150 = vld [vmem:[#allocation9 + $0xe8] sm:$0xff]
        %v1151 = vld [vmem:[#allocation9 + $0xf0] sm:$0xff]
        %v1152 = vld [vmem:[#allocation9 + $0xf8] sm:$0xff]
        %v1153 = vld [vmem:[#allocation9 + $0x100] sm:$0xff]
        %v1154 = vld [vmem:[#allocation9 + $0x108] sm:$0xff]
        %v1155 = vld [vmem:[#allocation9 + $0x110] sm:$0xff]
        %v1156 = vld [vmem:[#allocation9 + $0x118] sm:$0xff]
        %v1157 = vld [vmem:[#allocation9 + $0x120] sm:$0xff]
        %v1158 = vld [vmem:[#allocation9 + $0x128] sm:$0xff]
        %v1159 = vld [vmem:[#allocation9 + $0x130] sm:$0xff]
        %v1160 = vld [vmem:[#allocation9 + $0x138] sm:$0xff]
        %v1161 = vld [vmem:[#allocation9 + $0x140] sm:$0xff]
        %v1162 = vld [vmem:[#allocation9 + $0x148] sm:$0xff]
        %v1163 = vld [vmem:[#allocation9 + $0x150] sm:$0xff]
        %v1164 = vld [vmem:[#allocation9 + $0x158] sm:$0xff]
        %v1165 = vld [vmem:[#allocation9 + $0x160] sm:$0xff]
        %v1166 = vld [vmem:[#allocation9 + $0x168] sm:$0xff]
        %v1167 = vld [vmem:[#allocation9 + $0x170] sm:$0xff]
        %v1168 = vld [vmem:[#allocation9 + $0x178] sm:$0xff]
        %v1169 = vld [vmem:[#allocation9 + $0x180] sm:$0xff]
        %v1170 = vld [vmem:[#allocation9 + $0x188] sm:$0xff]
        %v1171 = vld [vmem:[#allocation9 + $0x190] sm:$0xff]
        %v1172 = vld [vmem:[#allocation9 + $0x198] sm:$0xff]
        %v1173 = vld [vmem:[#allocation9 + $0x1a0] sm:$0xff]
        %v1174 = vld [vmem:[#allocation9 + $0x1a8] sm:$0xff]
        %v1175 = vld [vmem:[#allocation9 + $0x1b0] sm:$0xff]
        %v1176 = vld [vmem:[#allocation9 + $0x1b8] sm:$0xff]
        %v1177 = vld [vmem:[#allocation9 + $0x1c0] sm:$0xff]
        %v1178 = vld [vmem:[#allocation9 + $0x1c8] sm:$0xff]
        %v1179 = vld [vmem:[#allocation9 + $0x1d0] sm:$0xff]
        %v1180 = vld [vmem:[#allocation9 + $0x1d8] sm:$0xff]
        %v1181 = vld [vmem:[#allocation9 + $0x1e0] sm:$0xff]
        %v1182 = vld [vmem:[#allocation9 + $0x1e8] sm:$0xff]
        %v1183 = vld [vmem:[#allocation9 + $0x1f0] sm:$0xff]
        %v1184 = vld [vmem:[#allocation9 + $0x1f8] sm:$0xff]
        %v1185 = vld [vmem:[#allocation9 + $0x200] sm:$0xff]
        %v1186 = vld [vmem:[#allocation9 + $0x208] sm:$0xff]
        %v1187 = vld [vmem:[#allocation9 + $0x210] sm:$0xff]
        %v1188 = vld [vmem:[#allocation9 + $0x218] sm:$0xff]
        %v1189 = vld [vmem:[#allocation9 + $0x220] sm:$0xff]
        %v1190 = vld [vmem:[#allocation9 + $0x228] sm:$0xff]
        %v1191 = vld [vmem:[#allocation9 + $0x230] sm:$0xff]
        %v1192 = vld [vmem:[#allocation9 + $0x238] sm:$0xff]
        %v1193 = vld [vmem:[#allocation9 + $0x240] sm:$0xff]
        %v1194 = vld [vmem:[#allocation9 + $0x248] sm:$0xff]
        %v1195 = vld [vmem:[#allocation9 + $0x250] sm:$0xff]
        %v1196 = vld [vmem:[#allocation9 + $0x258] sm:$0xff]
        %v1197 = vld [vmem:[#allocation9 + $0x260] sm:$0xff]
        %v1198 = vld [vmem:[#allocation9 + $0x268] sm:$0xff]
        %v1199 = vld [vmem:[#allocation9 + $0x270] sm:$0xff]
        %v1200 = vld [vmem:[#allocation9 + $0x278] sm:$0xff]
        %v1201 = vld [vmem:[#allocation9 + $0x280] sm:$0xff]
        %v1202 = vld [vmem:[#allocation9 + $0x288] sm:$0xff]
        %v1203 = vld [vmem:[#allocation9 + $0x290] sm:$0xff]
        %v1204 = vld [vmem:[#allocation9 + $0x298] sm:$0xff]
        %v1205 = vld [vmem:[#allocation9 + $0x2a0] sm:$0xff]
        %v1206 = vld [vmem:[#allocation9 + $0x2a8] sm:$0xff]
        %v1207 = vld [vmem:[#allocation9 + $0x2b0] sm:$0xff]
        %v1208 = vld [vmem:[#allocation9 + $0x2b8] sm:$0xff]
        %v1209 = vld [vmem:[#allocation9 + $0x2c0] sm:$0xff]
        %v1210 = vld [vmem:[#allocation9 + $0x2c8] sm:$0xff]
        %v1211 = vld [vmem:[#allocation9 + $0x2d0] sm:$0xff]
        %v1212 = vld [vmem:[#allocation9 + $0x2d8] sm:$0xff]
        %v1213 = vld [vmem:[#allocation9 + $0x2e0] sm:$0xff]
        %v1214 = vld [vmem:[#allocation9 + $0x2e8] sm:$0xff]
        %v1215 = vld [vmem:[#allocation9 + $0x2f0] sm:$0xff]
        %v1216 = vld [vmem:[#allocation9 + $0x2f8] sm:$0xff]
        %v1217 = vld [vmem:[#allocation9 + $0x300] sm:$0xff]
        %v1218 = vld [vmem:[#allocation9 + $0x308] sm:$0xff]
        %v1219 = vld [vmem:[#allocation9 + $0x310] sm:$0xff]
        %v1220 = vld [vmem:[#allocation9 + $0x318] sm:$0xff]
        %v1221 = vld [vmem:[#allocation9 + $0x320] sm:$0xff]
        %v1222 = vld [vmem:[#allocation9 + $0x328] sm:$0xff]
        %v1223 = vld [vmem:[#allocation9 + $0x330] sm:$0xff]
        %v1224 = vld [vmem:[#allocation9 + $0x338] sm:$0xff]
        %v1225 = vld [vmem:[#allocation9 + $0x340] sm:$0xff]
        %v1226 = vld [vmem:[#allocation9 + $0x348] sm:$0xff]
        %v1227 = vld [vmem:[#allocation9 + $0x350] sm:$0xff]
        %v1228 = vld [vmem:[#allocation9 + $0x358] sm:$0xff]
        %v1229 = vld [vmem:[#allocation9 + $0x360] sm:$0xff]
        %v1230 = vld [vmem:[#allocation9 + $0x368] sm:$0xff]
        %v1231 = vld [vmem:[#allocation9 + $0x370] sm:$0xff]
        %v1232 = vld [vmem:[#allocation9 + $0x378] sm:$0xff]
        %v1233 = vld [vmem:[#allocation9 + $0x380] sm:$0xff]
        %v1234 = vld [vmem:[#allocation9 + $0x388] sm:$0xff]
        %v1235 = vld [vmem:[#allocation9 + $0x390] sm:$0xff]
        %v1236 = vld [vmem:[#allocation9 + $0x398] sm:$0xff]
        %v1237 = vld [vmem:[#allocation9 + $0x3a0] sm:$0xff]
        %v1238 = vld [vmem:[#allocation9 + $0x3a8] sm:$0xff]
        %v1239 = vld [vmem:[#allocation9 + $0x3b0] sm:$0xff]
        %v1240 = vld [vmem:[#allocation9 + $0x3b8] sm:$0xff]
        %v1241 = vld [vmem:[#allocation9 + $0x3c0] sm:$0xff]
        %v1242 = vld [vmem:[#allocation9 + $0x3c8] sm:$0xff]
        %v1243 = vld [vmem:[#allocation9 + $0x3d0] sm:$0xff]
        %v1244 = vld [vmem:[#allocation9 + $0x3d8] sm:$0xff]
        %v1245 = vld [vmem:[#allocation9 + $0x3e0] sm:$0xff]
        %v1246 = vld [vmem:[#allocation9 + $0x3e8] sm:$0xff]
        %v1247 = vld [vmem:[#allocation9 + $0x3f0] sm:$0xff]
        %v1248 = vld [vmem:[#allocation9 + $0x3f8] sm:$0xff]
        %v1249 = vld [vmem:[#allocation9 + $0x400] sm:$0xff]
        %v1250 = vld [vmem:[#allocation9 + $0x408] sm:$0xff]
        %v1251 = vld [vmem:[#allocation9 + $0x410] sm:$0xff]
        %v1252 = vld [vmem:[#allocation9 + $0x418] sm:$0xff]
        %v1253 = vld [vmem:[#allocation9 + $0x420] sm:$0xff]
        %v1254 = vld [vmem:[#allocation9 + $0x428] sm:$0xff]
        %v1255 = vld [vmem:[#allocation9 + $0x430] sm:$0xff]
        %v1256 = vld [vmem:[#allocation9 + $0x438] sm:$0xff]
        %v1257 = vld [vmem:[#allocation9 + $0x440] sm:$0xff]
        %v1258 = vld [vmem:[#allocation9 + $0x448] sm:$0xff]
        %v1259 = vld [vmem:[#allocation9 + $0x450] sm:$0xff]
        %v1260 = vld [vmem:[#allocation9 + $0x458] sm:$0xff]
        %v1261 = vld [vmem:[#allocation9 + $0x460] sm:$0xff]
        %v1262 = vld [vmem:[#allocation9 + $0x468] sm:$0xff]
        %v1263 = vld [vmem:[#allocation9 + $0x470] sm:$0xff]
        %v1264 = vld [vmem:[#allocation9 + $0x478] sm:$0xff]
        %v1265 = vld [vmem:[#allocation9 + $0x480] sm:$0xff]
        %v1266 = vld [vmem:[#allocation9 + $0x488] sm:$0xff]
        %v1267 = vld [vmem:[#allocation9 + $0x490] sm:$0xff]
        %v1268 = vld [vmem:[#allocation9 + $0x498] sm:$0xff]
        %v1269 = vld [vmem:[#allocation9 + $0x4a0] sm:$0xff]
        %v1270 = vld [vmem:[#allocation9 + $0x4a8] sm:$0xff]
        %v1271 = vld [vmem:[#allocation9 + $0x4b0] sm:$0xff]
        %v1272 = vld [vmem:[#allocation9 + $0x4b8] sm:$0xff]
        %v1273 = vld [vmem:[#allocation9 + $0x4c0] sm:$0xff]
        %v1274 = vld [vmem:[#allocation9 + $0x4c8] sm:$0xff]
        %v1275 = vld [vmem:[#allocation9 + $0x4d0] sm:$0xff]
        %v1276 = vld [vmem:[#allocation9 + $0x4d8] sm:$0xff]
        %v1277 = vld [vmem:[#allocation9 + $0x4e0] sm:$0xff]
        %v1278 = vld [vmem:[#allocation9 + $0x4e8] sm:$0xff]
        %v1279 = vld [vmem:[#allocation9 + $0x4f0] sm:$0xff]
        %v1280 = vld [vmem:[#allocation9 + $0x4f8] sm:$0xff]
        %v1281 = vld [vmem:[#allocation9 + $0x500] sm:$0xff]
        %v1282 = vld [vmem:[#allocation9 + $0x508] sm:$0xff]
        %v1283 = vld [vmem:[#allocation9 + $0x510] sm:$0xff]
        %v1284 = vld [vmem:[#allocation9 + $0x518] sm:$0xff]
        %v1285 = vld [vmem:[#allocation9 + $0x520] sm:$0xff]
        %v1286 = vld [vmem:[#allocation9 + $0x528] sm:$0xff]
        %v1287 = vld [vmem:[#allocation9 + $0x530] sm:$0xff]
        %v1288 = vld [vmem:[#allocation9 + $0x538] sm:$0xff]
        %v1289 = vld [vmem:[#allocation9 + $0x540] sm:$0xff]
        %v1290 = vld [vmem:[#allocation9 + $0x548] sm:$0xff]
        %v1291 = vld [vmem:[#allocation9 + $0x550] sm:$0xff]
        %v1292 = vld [vmem:[#allocation9 + $0x558] sm:$0xff]
        %v1293 = vld [vmem:[#allocation9 + $0x560] sm:$0xff]
        %v1294 = vld [vmem:[#allocation9 + $0x568] sm:$0xff]
        %v1295 = vld [vmem:[#allocation9 + $0x570] sm:$0xff]
        %v1296 = vld [vmem:[#allocation9 + $0x578] sm:$0xff]
        %v1297 = vld [vmem:[#allocation9 + $0x580] sm:$0xff]
        %v1298 = vld [vmem:[#allocation9 + $0x588] sm:$0xff]
        %v1299 = vld [vmem:[#allocation9 + $0x590] sm:$0xff]
        %v1300 = vld [vmem:[#allocation9 + $0x598] sm:$0xff]
        %v1301 = vld [vmem:[#allocation9 + $0x5a0] sm:$0xff]
        %v1302 = vld [vmem:[#allocation9 + $0x5a8] sm:$0xff]
        %v1303 = vld [vmem:[#allocation9 + $0x5b0] sm:$0xff]
        %v1304 = vld [vmem:[#allocation9 + $0x5b8] sm:$0xff]
        %v1305 = vld [vmem:[#allocation9 + $0x5c0] sm:$0xff]
        %v1306 = vld [vmem:[#allocation9 + $0x5c8] sm:$0xff]
        %v1307 = vld [vmem:[#allocation9 + $0x5d0] sm:$0xff]
        %v1308 = vld [vmem:[#allocation9 + $0x5d8] sm:$0xff]
        %v1309 = vld [vmem:[#allocation9 + $0x5e0] sm:$0xff]
        %v1310 = vld [vmem:[#allocation9 + $0x5e8] sm:$0xff]
        %v1311 = vld [vmem:[#allocation9 + $0x5f0] sm:$0xff]
        %v1312 = vld [vmem:[#allocation9 + $0x5f8] sm:$0xff]
        %v1313 = vld [vmem:[#allocation9 + $0x600] sm:$0xff]
        %v1314 = vld [vmem:[#allocation9 + $0x608] sm:$0xff]
        %v1315 = vld [vmem:[#allocation9 + $0x610] sm:$0xff]
        %v1316 = vld [vmem:[#allocation9 + $0x618] sm:$0xff]
        %v1317 = vld [vmem:[#allocation9 + $0x620] sm:$0xff]
        %v1318 = vld [vmem:[#allocation9 + $0x628] sm:$0xff]
        %v1319 = vld [vmem:[#allocation9 + $0x630] sm:$0xff]
        %v1320 = vld [vmem:[#allocation9 + $0x638] sm:$0xff]
        %v1321 = vld [vmem:[#allocation9 + $0x640] sm:$0xff]
        %v1322 = vld [vmem:[#allocation9 + $0x648] sm:$0xff]
        %v1323 = vld [vmem:[#allocation9 + $0x650] sm:$0xff]
        %v1324 = vld [vmem:[#allocation9 + $0x658] sm:$0xff]
        %v1325 = vld [vmem:[#allocation9 + $0x660] sm:$0xff]
        %v1326 = vld [vmem:[#allocation9 + $0x668] sm:$0xff]
        %v1327 = vld [vmem:[#allocation9 + $0x670] sm:$0xff]
        %v1328 = vld [vmem:[#allocation9 + $0x678] sm:$0xff]
        %v1329 = vld [vmem:[#allocation9 + $0x680] sm:$0xff]
        %v1330 = vld [vmem:[#allocation9 + $0x688] sm:$0xff]
        %v1331 = vld [vmem:[#allocation9 + $0x690] sm:$0xff]
        %v1332 = vld [vmem:[#allocation9 + $0x698] sm:$0xff]
        %v1333 = vld [vmem:[#allocation9 + $0x6a0] sm:$0xff]
        %v1334 = vld [vmem:[#allocation9 + $0x6a8] sm:$0xff]
        %v1335 = vld [vmem:[#allocation9 + $0x6b0] sm:$0xff]
        %v1336 = vld [vmem:[#allocation9 + $0x6b8] sm:$0xff]
        %v1337 = vld [vmem:[#allocation9 + $0x6c0] sm:$0xff]
        %v1338 = vld [vmem:[#allocation9 + $0x6c8] sm:$0xff]
        %v1339 = vld [vmem:[#allocation9 + $0x6d0] sm:$0xff]
        %v1340 = vld [vmem:[#allocation9 + $0x6d8] sm:$0xff]
        %v1341 = vld [vmem:[#allocation9 + $0x6e0] sm:$0xff]
        %v1342 = vld [vmem:[#allocation9 + $0x6e8] sm:$0xff]
        %v1343 = vld [vmem:[#allocation9 + $0x6f0] sm:$0xff]
        %v1344 = vld [vmem:[#allocation9 + $0x6f8] sm:$0xff]
        %v1345 = vld [vmem:[#allocation9 + $0x700] sm:$0xff]
        %v1346 = vld [vmem:[#allocation9 + $0x708] sm:$0xff]
        %v1347 = vld [vmem:[#allocation9 + $0x710] sm:$0xff]
        %v1348 = vld [vmem:[#allocation9 + $0x718] sm:$0xff]
        %v1349 = vld [vmem:[#allocation9 + $0x720] sm:$0xff]
        %v1350 = vld [vmem:[#allocation9 + $0x728] sm:$0xff]
        %v1351 = vld [vmem:[#allocation9 + $0x730] sm:$0xff]
        %v1352 = vld [vmem:[#allocation9 + $0x738] sm:$0xff]
        %v1353 = vld [vmem:[#allocation9 + $0x740] sm:$0xff]
        %v1354 = vld [vmem:[#allocation9 + $0x748] sm:$0xff]
        %v1355 = vld [vmem:[#allocation9 + $0x750] sm:$0xff]
        %v1356 = vld [vmem:[#allocation9 + $0x758] sm:$0xff]
        %v1357 = vld [vmem:[#allocation9 + $0x760] sm:$0xff]
        %v1358 = vld [vmem:[#allocation9 + $0x768] sm:$0xff]
        %v1359 = vld [vmem:[#allocation9 + $0x770] sm:$0xff]
        %v1360 = vld [vmem:[#allocation9 + $0x778] sm:$0xff]
        %v1361 = vld [vmem:[#allocation9 + $0x780] sm:$0xff]
        %v1362 = vld [vmem:[#allocation9 + $0x788] sm:$0xff]
        %v1363 = vld [vmem:[#allocation9 + $0x790] sm:$0xff]
        %v1364 = vld [vmem:[#allocation9 + $0x798] sm:$0xff]
        %v1365 = vld [vmem:[#allocation9 + $0x7a0] sm:$0xff]
        %v1366 = vld [vmem:[#allocation9 + $0x7a8] sm:$0xff]
        %v1367 = vld [vmem:[#allocation9 + $0x7b0] sm:$0xff]
        %v1368 = vld [vmem:[#allocation9 + $0x7b8] sm:$0xff]
        %v1369 = vld [vmem:[#allocation9 + $0x7c0] sm:$0xff]
        %v1370 = vld [vmem:[#allocation9 + $0x7c8] sm:$0xff]
        %v1371 = vld [vmem:[#allocation9 + $0x7d0] sm:$0xff]
        %v1372 = vld [vmem:[#allocation9 + $0x7d8] sm:$0xff]
        %v1373 = vld [vmem:[#allocation9 + $0x7e0] sm:$0xff]
        %v1374 = vld [vmem:[#allocation9 + $0x7e8] sm:$0xff]
        %v1375 = vld [vmem:[#allocation9 + $0x7f0] sm:$0xff]
        %v1376 = vld [vmem:[#allocation9 + $0x7f8] sm:$0xff]
        %v1377 = vld [vmem:[#allocation10] sm:$0xff]
        %v1379 = vlaneseq
        %v1380 = vshrl.u32 %v1379, 7
        %v1381 = vsub.s32 0, %v1380
        %v1382 = vrot.slane %v1377, %v1381
        %v1383 = vlaneseq
        %v1384 = vshrl.u32 %v1383, 7
        %v1385 = vsub.s32 1, %v1384
        %v1386 = vrot.slane %v1377, %v1385
        %v1387 = vlaneseq
        %v1388 = vshrl.u32 %v1387, 7
        %v1389 = vsub.s32 2, %v1388
        %v1390 = vrot.slane %v1377, %v1389
        %v1391 = vlaneseq
        %v1392 = vshrl.u32 %v1391, 7
        %v1393 = vsub.s32 3, %v1392
        %v1394 = vrot.slane %v1377, %v1393
        %v1395 = vlaneseq
        %v1396 = vshrl.u32 %v1395, 7
        %v1397 = vsub.s32 4, %v1396
        %v1398 = vrot.slane %v1377, %v1397
        %v1399 = vlaneseq
        %v1400 = vshrl.u32 %v1399, 7
        %v1401 = vsub.s32 5, %v1400
        %v1402 = vrot.slane %v1377, %v1401
        %v1403 = vlaneseq
        %v1404 = vshrl.u32 %v1403, 7
        %v1405 = vsub.s32 6, %v1404
        %v1406 = vrot.slane %v1377, %v1405
        %v1407 = vlaneseq
        %v1408 = vshrl.u32 %v1407, 7
        %v1409 = vsub.s32 7, %v1408
        %v1410 = vrot.slane %v1377, %v1409
        %v1675 = vunpack.c.l.b16 %v1121
        %v1676 = vunpack.c.h.b16 %v1121
        %v1677 = vunpack.c.l.b16 %v1122
        %v1678 = vunpack.c.h.b16 %v1122
        %v1679 = vunpack.c.l.b16 %v1123
        %v1680 = vunpack.c.h.b16 %v1123
        %v1681 = vunpack.c.l.b16 %v1124
        %v1682 = vunpack.c.h.b16 %v1124
        %v1683 = vunpack.c.l.b16 %v1125
        %v1684 = vunpack.c.h.b16 %v1125
        %v1685 = vunpack.c.l.b16 %v1126
        %v1686 = vunpack.c.h.b16 %v1126
        %v1687 = vunpack.c.l.b16 %v1127
        %v1688 = vunpack.c.h.b16 %v1127
        %v1689 = vunpack.c.l.b16 %v1128
        %v1690 = vunpack.c.h.b16 %v1128
        %v1691 = vunpack.c.l.b16 %v1129
        %v1692 = vunpack.c.h.b16 %v1129
        %v1693 = vunpack.c.l.b16 %v1130
        %v1694 = vunpack.c.h.b16 %v1130
        %v1695 = vunpack.c.l.b16 %v1131
        %v1696 = vunpack.c.h.b16 %v1131
        %v1697 = vunpack.c.l.b16 %v1132
        %v1698 = vunpack.c.h.b16 %v1132
        %v1699 = vunpack.c.l.b16 %v1133
        %v1700 = vunpack.c.h.b16 %v1133
        %v1701 = vunpack.c.l.b16 %v1134
        %v1702 = vunpack.c.h.b16 %v1134
        %v1703 = vunpack.c.l.b16 %v1135
        %v1704 = vunpack.c.h.b16 %v1135
        %v1705 = vunpack.c.l.b16 %v1136
        %v1706 = vunpack.c.h.b16 %v1136
        %v1707 = vunpack.c.l.b16 %v1137
        %v1708 = vunpack.c.h.b16 %v1137
        %v1709 = vunpack.c.l.b16 %v1138
        %v1710 = vunpack.c.h.b16 %v1138
        %v1711 = vunpack.c.l.b16 %v1139
        %v1712 = vunpack.c.h.b16 %v1139
        %v1713 = vunpack.c.l.b16 %v1140
        %v1714 = vunpack.c.h.b16 %v1140
        %v1715 = vunpack.c.l.b16 %v1141
        %v1716 = vunpack.c.h.b16 %v1141
        %v1717 = vunpack.c.l.b16 %v1142
        %v1718 = vunpack.c.h.b16 %v1142
        %v1719 = vunpack.c.l.b16 %v1143
        %v1720 = vunpack.c.h.b16 %v1143
        %v1721 = vunpack.c.l.b16 %v1144
        %v1722 = vunpack.c.h.b16 %v1144
        %v1723 = vunpack.c.l.b16 %v1145
        %v1724 = vunpack.c.h.b16 %v1145
        %v1725 = vunpack.c.l.b16 %v1146
        %v1726 = vunpack.c.h.b16 %v1146
        %v1727 = vunpack.c.l.b16 %v1147
        %v1728 = vunpack.c.h.b16 %v1147
        %v1729 = vunpack.c.l.b16 %v1148
        %v1730 = vunpack.c.h.b16 %v1148
        %v1731 = vunpack.c.l.b16 %v1149
        %v1732 = vunpack.c.h.b16 %v1149
        %v1733 = vunpack.c.l.b16 %v1150
        %v1734 = vunpack.c.h.b16 %v1150
        %v1735 = vunpack.c.l.b16 %v1151
        %v1736 = vunpack.c.h.b16 %v1151
        %v1737 = vunpack.c.l.b16 %v1152
        %v1738 = vunpack.c.h.b16 %v1152
        %v1739 = vunpack.c.l.b16 %v1153
        %v1740 = vunpack.c.h.b16 %v1153
        %v1741 = vunpack.c.l.b16 %v1154
        %v1742 = vunpack.c.h.b16 %v1154
        %v1743 = vunpack.c.l.b16 %v1155
        %v1744 = vunpack.c.h.b16 %v1155
        %v1745 = vunpack.c.l.b16 %v1156
        %v1746 = vunpack.c.h.b16 %v1156
        %v1747 = vunpack.c.l.b16 %v1157
        %v1748 = vunpack.c.h.b16 %v1157
        %v1749 = vunpack.c.l.b16 %v1158
        %v1750 = vunpack.c.h.b16 %v1158
        %v1751 = vunpack.c.l.b16 %v1159
        %v1752 = vunpack.c.h.b16 %v1159
        %v1753 = vunpack.c.l.b16 %v1160
        %v1754 = vunpack.c.h.b16 %v1160
        %v1755 = vunpack.c.l.b16 %v1161
        %v1756 = vunpack.c.h.b16 %v1161
        %v1757 = vunpack.c.l.b16 %v1162
        %v1758 = vunpack.c.h.b16 %v1162
        %v1759 = vunpack.c.l.b16 %v1163
        %v1760 = vunpack.c.h.b16 %v1163
        %v1761 = vunpack.c.l.b16 %v1164
        %v1762 = vunpack.c.h.b16 %v1164
        %v1763 = vunpack.c.l.b16 %v1165
        %v1764 = vunpack.c.h.b16 %v1165
        %v1765 = vunpack.c.l.b16 %v1166
        %v1766 = vunpack.c.h.b16 %v1166
        %v1767 = vunpack.c.l.b16 %v1167
        %v1768 = vunpack.c.h.b16 %v1167
        %v1769 = vunpack.c.l.b16 %v1168
        %v1770 = vunpack.c.h.b16 %v1168
        %v1771 = vunpack.c.l.b16 %v1169
        %v1772 = vunpack.c.h.b16 %v1169
        %v1773 = vunpack.c.l.b16 %v1170
        %v1774 = vunpack.c.h.b16 %v1170
        %v1775 = vunpack.c.l.b16 %v1171
        %v1776 = vunpack.c.h.b16 %v1171
        %v1777 = vunpack.c.l.b16 %v1172
        %v1778 = vunpack.c.h.b16 %v1172
        %v1779 = vunpack.c.l.b16 %v1173
        %v1780 = vunpack.c.h.b16 %v1173
        %v1781 = vunpack.c.l.b16 %v1174
        %v1782 = vunpack.c.h.b16 %v1174
        %v1783 = vunpack.c.l.b16 %v1175
        %v1784 = vunpack.c.h.b16 %v1175
        %v1785 = vunpack.c.l.b16 %v1176
        %v1786 = vunpack.c.h.b16 %v1176
        %v1787 = vunpack.c.l.b16 %v1177
        %v1788 = vunpack.c.h.b16 %v1177
        %v1789 = vunpack.c.l.b16 %v1178
        %v1790 = vunpack.c.h.b16 %v1178
        %v1791 = vunpack.c.l.b16 %v1179
        %v1792 = vunpack.c.h.b16 %v1179
        %v1793 = vunpack.c.l.b16 %v1180
        %v1794 = vunpack.c.h.b16 %v1180
        %v1795 = vunpack.c.l.b16 %v1181
        %v1796 = vunpack.c.h.b16 %v1181
        %v1797 = vunpack.c.l.b16 %v1182
        %v1798 = vunpack.c.h.b16 %v1182
        %v1799 = vunpack.c.l.b16 %v1183
        %v1800 = vunpack.c.h.b16 %v1183
        %v1801 = vunpack.c.l.b16 %v1184
        %v1802 = vunpack.c.h.b16 %v1184
        %v1803 = vunpack.c.l.b16 %v1185
        %v1804 = vunpack.c.h.b16 %v1185
        %v1805 = vunpack.c.l.b16 %v1186
        %v1806 = vunpack.c.h.b16 %v1186
        %v1807 = vunpack.c.l.b16 %v1187
        %v1808 = vunpack.c.h.b16 %v1187
        %v1809 = vunpack.c.l.b16 %v1188
        %v1810 = vunpack.c.h.b16 %v1188
        %v1811 = vunpack.c.l.b16 %v1189
        %v1812 = vunpack.c.h.b16 %v1189
        %v1813 = vunpack.c.l.b16 %v1190
        %v1814 = vunpack.c.h.b16 %v1190
        %v1815 = vunpack.c.l.b16 %v1191
        %v1816 = vunpack.c.h.b16 %v1191
        %v1817 = vunpack.c.l.b16 %v1192
        %v1818 = vunpack.c.h.b16 %v1192
        %v1819 = vunpack.c.l.b16 %v1193
        %v1820 = vunpack.c.h.b16 %v1193
        %v1821 = vunpack.c.l.b16 %v1194
        %v1822 = vunpack.c.h.b16 %v1194
        %v1823 = vunpack.c.l.b16 %v1195
        %v1824 = vunpack.c.h.b16 %v1195
        %v1825 = vunpack.c.l.b16 %v1196
        %v1826 = vunpack.c.h.b16 %v1196
        %v1827 = vunpack.c.l.b16 %v1197
        %v1828 = vunpack.c.h.b16 %v1197
        %v1829 = vunpack.c.l.b16 %v1198
        %v1830 = vunpack.c.h.b16 %v1198
        %v1831 = vunpack.c.l.b16 %v1199
        %v1832 = vunpack.c.h.b16 %v1199
        %v1833 = vunpack.c.l.b16 %v1200
        %v1834 = vunpack.c.h.b16 %v1200
        %v1835 = vunpack.c.l.b16 %v1201
        %v1836 = vunpack.c.h.b16 %v1201
        %v1837 = vunpack.c.l.b16 %v1202
        %v1838 = vunpack.c.h.b16 %v1202
        %v1839 = vunpack.c.l.b16 %v1203
        %v1840 = vunpack.c.h.b16 %v1203
        %v1841 = vunpack.c.l.b16 %v1204
        %v1842 = vunpack.c.h.b16 %v1204
        %v1843 = vunpack.c.l.b16 %v1205
        %v1844 = vunpack.c.h.b16 %v1205
        %v1845 = vunpack.c.l.b16 %v1206
        %v1846 = vunpack.c.h.b16 %v1206
        %v1847 = vunpack.c.l.b16 %v1207
        %v1848 = vunpack.c.h.b16 %v1207
        %v1849 = vunpack.c.l.b16 %v1208
        %v1850 = vunpack.c.h.b16 %v1208
        %v1851 = vunpack.c.l.b16 %v1209
        %v1852 = vunpack.c.h.b16 %v1209
        %v1853 = vunpack.c.l.b16 %v1210
        %v1854 = vunpack.c.h.b16 %v1210
        %v1855 = vunpack.c.l.b16 %v1211
        %v1856 = vunpack.c.h.b16 %v1211
        %v1857 = vunpack.c.l.b16 %v1212
        %v1858 = vunpack.c.h.b16 %v1212
        %v1859 = vunpack.c.l.b16 %v1213
        %v1860 = vunpack.c.h.b16 %v1213
        %v1861 = vunpack.c.l.b16 %v1214
        %v1862 = vunpack.c.h.b16 %v1214
        %v1863 = vunpack.c.l.b16 %v1215
        %v1864 = vunpack.c.h.b16 %v1215
        %v1865 = vunpack.c.l.b16 %v1216
        %v1866 = vunpack.c.h.b16 %v1216
        %v1867 = vunpack.c.l.b16 %v1217
        %v1868 = vunpack.c.h.b16 %v1217
        %v1869 = vunpack.c.l.b16 %v1218
        %v1870 = vunpack.c.h.b16 %v1218
        %v1871 = vunpack.c.l.b16 %v1219
        %v1872 = vunpack.c.h.b16 %v1219
        %v1873 = vunpack.c.l.b16 %v1220
        %v1874 = vunpack.c.h.b16 %v1220
        %v1875 = vunpack.c.l.b16 %v1221
        %v1876 = vunpack.c.h.b16 %v1221
        %v1877 = vunpack.c.l.b16 %v1222
        %v1878 = vunpack.c.h.b16 %v1222
        %v1879 = vunpack.c.l.b16 %v1223
        %v1880 = vunpack.c.h.b16 %v1223
        %v1881 = vunpack.c.l.b16 %v1224
        %v1882 = vunpack.c.h.b16 %v1224
        %v1883 = vunpack.c.l.b16 %v1225
        %v1884 = vunpack.c.h.b16 %v1225
        %v1885 = vunpack.c.l.b16 %v1226
        %v1886 = vunpack.c.h.b16 %v1226
        %v1887 = vunpack.c.l.b16 %v1227
        %v1888 = vunpack.c.h.b16 %v1227
        %v1889 = vunpack.c.l.b16 %v1228
        %v1890 = vunpack.c.h.b16 %v1228
        %v1891 = vunpack.c.l.b16 %v1229
        %v1892 = vunpack.c.h.b16 %v1229
        %v1893 = vunpack.c.l.b16 %v1230
        %v1894 = vunpack.c.h.b16 %v1230
        %v1895 = vunpack.c.l.b16 %v1231
        %v1896 = vunpack.c.h.b16 %v1231
        %v1897 = vunpack.c.l.b16 %v1232
        %v1898 = vunpack.c.h.b16 %v1232
        %v1899 = vunpack.c.l.b16 %v1233
        %v1900 = vunpack.c.h.b16 %v1233
        %v1901 = vunpack.c.l.b16 %v1234
        %v1902 = vunpack.c.h.b16 %v1234
        %v1903 = vunpack.c.l.b16 %v1235
        %v1904 = vunpack.c.h.b16 %v1235
        %v1905 = vunpack.c.l.b16 %v1236
        %v1906 = vunpack.c.h.b16 %v1236
        %v1907 = vunpack.c.l.b16 %v1237
        %v1908 = vunpack.c.h.b16 %v1237
        %v1909 = vunpack.c.l.b16 %v1238
        %v1910 = vunpack.c.h.b16 %v1238
        %v1911 = vunpack.c.l.b16 %v1239
        %v1912 = vunpack.c.h.b16 %v1239
        %v1913 = vunpack.c.l.b16 %v1240
        %v1914 = vunpack.c.h.b16 %v1240
        %v1915 = vunpack.c.l.b16 %v1241
        %v1916 = vunpack.c.h.b16 %v1241
        %v1917 = vunpack.c.l.b16 %v1242
        %v1918 = vunpack.c.h.b16 %v1242
        %v1919 = vunpack.c.l.b16 %v1243
        %v1920 = vunpack.c.h.b16 %v1243
        %v1921 = vunpack.c.l.b16 %v1244
        %v1922 = vunpack.c.h.b16 %v1244
        %v1923 = vunpack.c.l.b16 %v1245
        %v1924 = vunpack.c.h.b16 %v1245
        %v1925 = vunpack.c.l.b16 %v1246
        %v1926 = vunpack.c.h.b16 %v1246
        %v1927 = vunpack.c.l.b16 %v1247
        %v1928 = vunpack.c.h.b16 %v1247
        %v1929 = vunpack.c.l.b16 %v1248
        %v1930 = vunpack.c.h.b16 %v1248
        %v1931 = vunpack.c.l.b16 %v1249
        %v1932 = vunpack.c.h.b16 %v1249
        %v1933 = vunpack.c.l.b16 %v1250
        %v1934 = vunpack.c.h.b16 %v1250
        %v1935 = vunpack.c.l.b16 %v1251
        %v1936 = vunpack.c.h.b16 %v1251
        %v1937 = vunpack.c.l.b16 %v1252
        %v1938 = vunpack.c.h.b16 %v1252
        %v1939 = vunpack.c.l.b16 %v1253
        %v1940 = vunpack.c.h.b16 %v1253
        %v1941 = vunpack.c.l.b16 %v1254
        %v1942 = vunpack.c.h.b16 %v1254
        %v1943 = vunpack.c.l.b16 %v1255
        %v1944 = vunpack.c.h.b16 %v1255
        %v1945 = vunpack.c.l.b16 %v1256
        %v1946 = vunpack.c.h.b16 %v1256
        %v1947 = vunpack.c.l.b16 %v1257
        %v1948 = vunpack.c.h.b16 %v1257
        %v1949 = vunpack.c.l.b16 %v1258
        %v1950 = vunpack.c.h.b16 %v1258
        %v1951 = vunpack.c.l.b16 %v1259
        %v1952 = vunpack.c.h.b16 %v1259
        %v1953 = vunpack.c.l.b16 %v1260
        %v1954 = vunpack.c.h.b16 %v1260
        %v1955 = vunpack.c.l.b16 %v1261
        %v1956 = vunpack.c.h.b16 %v1261
        %v1957 = vunpack.c.l.b16 %v1262
        %v1958 = vunpack.c.h.b16 %v1262
        %v1959 = vunpack.c.l.b16 %v1263
        %v1960 = vunpack.c.h.b16 %v1263
        %v1961 = vunpack.c.l.b16 %v1264
        %v1962 = vunpack.c.h.b16 %v1264
        %v1963 = vunpack.c.l.b16 %v1265
        %v1964 = vunpack.c.h.b16 %v1265
        %v1965 = vunpack.c.l.b16 %v1266
        %v1966 = vunpack.c.h.b16 %v1266
        %v1967 = vunpack.c.l.b16 %v1267
        %v1968 = vunpack.c.h.b16 %v1267
        %v1969 = vunpack.c.l.b16 %v1268
        %v1970 = vunpack.c.h.b16 %v1268
        %v1971 = vunpack.c.l.b16 %v1269
        %v1972 = vunpack.c.h.b16 %v1269
        %v1973 = vunpack.c.l.b16 %v1270
        %v1974 = vunpack.c.h.b16 %v1270
        %v1975 = vunpack.c.l.b16 %v1271
        %v1976 = vunpack.c.h.b16 %v1271
        %v1977 = vunpack.c.l.b16 %v1272
        %v1978 = vunpack.c.h.b16 %v1272
        %v1979 = vunpack.c.l.b16 %v1273
        %v1980 = vunpack.c.h.b16 %v1273
        %v1981 = vunpack.c.l.b16 %v1274
        %v1982 = vunpack.c.h.b16 %v1274
        %v1983 = vunpack.c.l.b16 %v1275
        %v1984 = vunpack.c.h.b16 %v1275
        %v1985 = vunpack.c.l.b16 %v1276
        %v1986 = vunpack.c.h.b16 %v1276
        %v1987 = vunpack.c.l.b16 %v1277
        %v1988 = vunpack.c.h.b16 %v1277
        %v1989 = vunpack.c.l.b16 %v1278
        %v1990 = vunpack.c.h.b16 %v1278
        %v1991 = vunpack.c.l.b16 %v1279
        %v1992 = vunpack.c.h.b16 %v1279
        %v1993 = vunpack.c.l.b16 %v1280
        %v1994 = vunpack.c.h.b16 %v1280
        %v1995 = vunpack.c.l.b16 %v1281
        %v1996 = vunpack.c.h.b16 %v1281
        %v1997 = vunpack.c.l.b16 %v1282
        %v1998 = vunpack.c.h.b16 %v1282
        %v1999 = vunpack.c.l.b16 %v1283
        %v2000 = vunpack.c.h.b16 %v1283
        %v2001 = vunpack.c.l.b16 %v1284
        %v2002 = vunpack.c.h.b16 %v1284
        %v2003 = vunpack.c.l.b16 %v1285
        %v2004 = vunpack.c.h.b16 %v1285
        %v2005 = vunpack.c.l.b16 %v1286
        %v2006 = vunpack.c.h.b16 %v1286
        %v2007 = vunpack.c.l.b16 %v1287
        %v2008 = vunpack.c.h.b16 %v1287
        %v2009 = vunpack.c.l.b16 %v1288
        %v2010 = vunpack.c.h.b16 %v1288
        %v2011 = vunpack.c.l.b16 %v1289
        %v2012 = vunpack.c.h.b16 %v1289
        %v2013 = vunpack.c.l.b16 %v1290
        %v2014 = vunpack.c.h.b16 %v1290
        %v2015 = vunpack.c.l.b16 %v1291
        %v2016 = vunpack.c.h.b16 %v1291
        %v2017 = vunpack.c.l.b16 %v1292
        %v2018 = vunpack.c.h.b16 %v1292
        %v2019 = vunpack.c.l.b16 %v1293
        %v2020 = vunpack.c.h.b16 %v1293
        %v2021 = vunpack.c.l.b16 %v1294
        %v2022 = vunpack.c.h.b16 %v1294
        %v2023 = vunpack.c.l.b16 %v1295
        %v2024 = vunpack.c.h.b16 %v1295
        %v2025 = vunpack.c.l.b16 %v1296
        %v2026 = vunpack.c.h.b16 %v1296
        %v2027 = vunpack.c.l.b16 %v1297
        %v2028 = vunpack.c.h.b16 %v1297
        %v2029 = vunpack.c.l.b16 %v1298
        %v2030 = vunpack.c.h.b16 %v1298
        %v2031 = vunpack.c.l.b16 %v1299
        %v2032 = vunpack.c.h.b16 %v1299
        %v2033 = vunpack.c.l.b16 %v1300
        %v2034 = vunpack.c.h.b16 %v1300
        %v2035 = vunpack.c.l.b16 %v1301
        %v2036 = vunpack.c.h.b16 %v1301
        %v2037 = vunpack.c.l.b16 %v1302
        %v2038 = vunpack.c.h.b16 %v1302
        %v2039 = vunpack.c.l.b16 %v1303
        %v2040 = vunpack.c.h.b16 %v1303
        %v2041 = vunpack.c.l.b16 %v1304
        %v2042 = vunpack.c.h.b16 %v1304
        %v2043 = vunpack.c.l.b16 %v1305
        %v2044 = vunpack.c.h.b16 %v1305
        %v2045 = vunpack.c.l.b16 %v1306
        %v2046 = vunpack.c.h.b16 %v1306
        %v2047 = vunpack.c.l.b16 %v1307
        %v2048 = vunpack.c.h.b16 %v1307
        %v2049 = vunpack.c.l.b16 %v1308
        %v2050 = vunpack.c.h.b16 %v1308
        %v2051 = vunpack.c.l.b16 %v1309
        %v2052 = vunpack.c.h.b16 %v1309
        %v2053 = vunpack.c.l.b16 %v1310
        %v2054 = vunpack.c.h.b16 %v1310
        %v2055 = vunpack.c.l.b16 %v1311
        %v2056 = vunpack.c.h.b16 %v1311
        %v2057 = vunpack.c.l.b16 %v1312
        %v2058 = vunpack.c.h.b16 %v1312
        %v2059 = vunpack.c.l.b16 %v1313
        %v2060 = vunpack.c.h.b16 %v1313
        %v2061 = vunpack.c.l.b16 %v1314
        %v2062 = vunpack.c.h.b16 %v1314
        %v2063 = vunpack.c.l.b16 %v1315
        %v2064 = vunpack.c.h.b16 %v1315
        %v2065 = vunpack.c.l.b16 %v1316
        %v2066 = vunpack.c.h.b16 %v1316
        %v2067 = vunpack.c.l.b16 %v1317
        %v2068 = vunpack.c.h.b16 %v1317
        %v2069 = vunpack.c.l.b16 %v1318
        %v2070 = vunpack.c.h.b16 %v1318
        %v2071 = vunpack.c.l.b16 %v1319
        %v2072 = vunpack.c.h.b16 %v1319
        %v2073 = vunpack.c.l.b16 %v1320
        %v2074 = vunpack.c.h.b16 %v1320
        %v2075 = vunpack.c.l.b16 %v1321
        %v2076 = vunpack.c.h.b16 %v1321
        %v2077 = vunpack.c.l.b16 %v1322
        %v2078 = vunpack.c.h.b16 %v1322
        %v2079 = vunpack.c.l.b16 %v1323
        %v2080 = vunpack.c.h.b16 %v1323
        %v2081 = vunpack.c.l.b16 %v1324
        %v2082 = vunpack.c.h.b16 %v1324
        %v2083 = vunpack.c.l.b16 %v1325
        %v2084 = vunpack.c.h.b16 %v1325
        %v2085 = vunpack.c.l.b16 %v1326
        %v2086 = vunpack.c.h.b16 %v1326
        %v2087 = vunpack.c.l.b16 %v1327
        %v2088 = vunpack.c.h.b16 %v1327
        %v2089 = vunpack.c.l.b16 %v1328
        %v2090 = vunpack.c.h.b16 %v1328
        %v2091 = vunpack.c.l.b16 %v1329
        %v2092 = vunpack.c.h.b16 %v1329
        %v2093 = vunpack.c.l.b16 %v1330
        %v2094 = vunpack.c.h.b16 %v1330
        %v2095 = vunpack.c.l.b16 %v1331
        %v2096 = vunpack.c.h.b16 %v1331
        %v2097 = vunpack.c.l.b16 %v1332
        %v2098 = vunpack.c.h.b16 %v1332
        %v2099 = vunpack.c.l.b16 %v1333
        %v2100 = vunpack.c.h.b16 %v1333
        %v2101 = vunpack.c.l.b16 %v1334
        %v2102 = vunpack.c.h.b16 %v1334
        %v2103 = vunpack.c.l.b16 %v1335
        %v2104 = vunpack.c.h.b16 %v1335
        %v2105 = vunpack.c.l.b16 %v1336
        %v2106 = vunpack.c.h.b16 %v1336
        %v2107 = vunpack.c.l.b16 %v1337
        %v2108 = vunpack.c.h.b16 %v1337
        %v2109 = vunpack.c.l.b16 %v1338
        %v2110 = vunpack.c.h.b16 %v1338
        %v2111 = vunpack.c.l.b16 %v1339
        %v2112 = vunpack.c.h.b16 %v1339
        %v2113 = vunpack.c.l.b16 %v1340
        %v2114 = vunpack.c.h.b16 %v1340
        %v2115 = vunpack.c.l.b16 %v1341
        %v2116 = vunpack.c.h.b16 %v1341
        %v2117 = vunpack.c.l.b16 %v1342
        %v2118 = vunpack.c.h.b16 %v1342
        %v2119 = vunpack.c.l.b16 %v1343
        %v2120 = vunpack.c.h.b16 %v1343
        %v2121 = vunpack.c.l.b16 %v1344
        %v2122 = vunpack.c.h.b16 %v1344
        %v2123 = vunpack.c.l.b16 %v1345
        %v2124 = vunpack.c.h.b16 %v1345
        %v2125 = vunpack.c.l.b16 %v1346
        %v2126 = vunpack.c.h.b16 %v1346
        %v2127 = vunpack.c.l.b16 %v1347
        %v2128 = vunpack.c.h.b16 %v1347
        %v2129 = vunpack.c.l.b16 %v1348
        %v2130 = vunpack.c.h.b16 %v1348
        %v2131 = vunpack.c.l.b16 %v1349
        %v2132 = vunpack.c.h.b16 %v1349
        %v2133 = vunpack.c.l.b16 %v1350
        %v2134 = vunpack.c.h.b16 %v1350
        %v2135 = vunpack.c.l.b16 %v1351
        %v2136 = vunpack.c.h.b16 %v1351
        %v2137 = vunpack.c.l.b16 %v1352
        %v2138 = vunpack.c.h.b16 %v1352
        %v2139 = vunpack.c.l.b16 %v1353
        %v2140 = vunpack.c.h.b16 %v1353
        %v2141 = vunpack.c.l.b16 %v1354
        %v2142 = vunpack.c.h.b16 %v1354
        %v2143 = vunpack.c.l.b16 %v1355
        %v2144 = vunpack.c.h.b16 %v1355
        %v2145 = vunpack.c.l.b16 %v1356
        %v2146 = vunpack.c.h.b16 %v1356
        %v2147 = vunpack.c.l.b16 %v1357
        %v2148 = vunpack.c.h.b16 %v1357
        %v2149 = vunpack.c.l.b16 %v1358
        %v2150 = vunpack.c.h.b16 %v1358
        %v2151 = vunpack.c.l.b16 %v1359
        %v2152 = vunpack.c.h.b16 %v1359
        %v2153 = vunpack.c.l.b16 %v1360
        %v2154 = vunpack.c.h.b16 %v1360
        %v2155 = vunpack.c.l.b16 %v1361
        %v2156 = vunpack.c.h.b16 %v1361
        %v2157 = vunpack.c.l.b16 %v1362
        %v2158 = vunpack.c.h.b16 %v1362
        %v2159 = vunpack.c.l.b16 %v1363
        %v2160 = vunpack.c.h.b16 %v1363
        %v2161 = vunpack.c.l.b16 %v1364
        %v2162 = vunpack.c.h.b16 %v1364
        %v2163 = vunpack.c.l.b16 %v1365
        %v2164 = vunpack.c.h.b16 %v1365
        %v2165 = vunpack.c.l.b16 %v1366
        %v2166 = vunpack.c.h.b16 %v1366
        %v2167 = vunpack.c.l.b16 %v1367
        %v2168 = vunpack.c.h.b16 %v1367
        %v2169 = vunpack.c.l.b16 %v1368
        %v2170 = vunpack.c.h.b16 %v1368
        %v2171 = vunpack.c.l.b16 %v1369
        %v2172 = vunpack.c.h.b16 %v1369
        %v2173 = vunpack.c.l.b16 %v1370
        %v2174 = vunpack.c.h.b16 %v1370
        %v2175 = vunpack.c.l.b16 %v1371
        %v2176 = vunpack.c.h.b16 %v1371
        %v2177 = vunpack.c.l.b16 %v1372
        %v2178 = vunpack.c.h.b16 %v1372
        %v2179 = vunpack.c.l.b16 %v1373
        %v2180 = vunpack.c.h.b16 %v1373
        %v2181 = vunpack.c.l.b16 %v1374
        %v2182 = vunpack.c.h.b16 %v1374
        %v2183 = vunpack.c.l.b16 %v1375
        %v2184 = vunpack.c.h.b16 %v1375
        %v2185 = vunpack.c.l.b16 %v1376
        %v2186 = vunpack.c.h.b16 %v1376
        %v2187 = vpack.c.b16 %v1683, %v1675
        %v2188 = vpack.c.b16 %v1684, %v1676
        %v2189 = vpack.c.b16 %v1685, %v1677
        %v2190 = vpack.c.b16 %v1686, %v1678
        %v2191 = vpack.c.b16 %v1687, %v1679
        %v2192 = vpack.c.b16 %v1688, %v1680
        %v2193 = vpack.c.b16 %v1689, %v1681
        %v2194 = vpack.c.b16 %v1690, %v1682
        %v2195 = vpack.c.b16 %v1699, %v1691
        %v2196 = vpack.c.b16 %v1700, %v1692
        %v2197 = vpack.c.b16 %v1701, %v1693
        %v2198 = vpack.c.b16 %v1702, %v1694
        %v2199 = vpack.c.b16 %v1703, %v1695
        %v2200 = vpack.c.b16 %v1704, %v1696
        %v2201 = vpack.c.b16 %v1705, %v1697
        %v2202 = vpack.c.b16 %v1706, %v1698
        %v2203 = vpack.c.b16 %v1715, %v1707
        %v2204 = vpack.c.b16 %v1716, %v1708
        %v2205 = vpack.c.b16 %v1717, %v1709
        %v2206 = vpack.c.b16 %v1718, %v1710
        %v2207 = vpack.c.b16 %v1719, %v1711
        %v2208 = vpack.c.b16 %v1720, %v1712
        %v2209 = vpack.c.b16 %v1721, %v1713
        %v2210 = vpack.c.b16 %v1722, %v1714
        %v2211 = vpack.c.b16 %v1731, %v1723
        %v2212 = vpack.c.b16 %v1732, %v1724
        %v2213 = vpack.c.b16 %v1733, %v1725
        %v2214 = vpack.c.b16 %v1734, %v1726
        %v2215 = vpack.c.b16 %v1735, %v1727
        %v2216 = vpack.c.b16 %v1736, %v1728
        %v2217 = vpack.c.b16 %v1737, %v1729
        %v2218 = vpack.c.b16 %v1738, %v1730
        %v2219 = vpack.c.b16 %v1747, %v1739
        %v2220 = vpack.c.b16 %v1748, %v1740
        %v2221 = vpack.c.b16 %v1749, %v1741
        %v2222 = vpack.c.b16 %v1750, %v1742
        %v2223 = vpack.c.b16 %v1751, %v1743
        %v2224 = vpack.c.b16 %v1752, %v1744
        %v2225 = vpack.c.b16 %v1753, %v1745
        %v2226 = vpack.c.b16 %v1754, %v1746
        %v2227 = vpack.c.b16 %v1763, %v1755
        %v2228 = vpack.c.b16 %v1764, %v1756
        %v2229 = vpack.c.b16 %v1765, %v1757
        %v2230 = vpack.c.b16 %v1766, %v1758
        %v2231 = vpack.c.b16 %v1767, %v1759
        %v2232 = vpack.c.b16 %v1768, %v1760
        %v2233 = vpack.c.b16 %v1769, %v1761
        %v2234 = vpack.c.b16 %v1770, %v1762
        %v2235 = vpack.c.b16 %v1779, %v1771
        %v2236 = vpack.c.b16 %v1780, %v1772
        %v2237 = vpack.c.b16 %v1781, %v1773
        %v2238 = vpack.c.b16 %v1782, %v1774
        %v2239 = vpack.c.b16 %v1783, %v1775
        %v2240 = vpack.c.b16 %v1784, %v1776
        %v2241 = vpack.c.b16 %v1785, %v1777
        %v2242 = vpack.c.b16 %v1786, %v1778
        %v2243 = vpack.c.b16 %v1795, %v1787
        %v2244 = vpack.c.b16 %v1796, %v1788
        %v2245 = vpack.c.b16 %v1797, %v1789
        %v2246 = vpack.c.b16 %v1798, %v1790
        %v2247 = vpack.c.b16 %v1799, %v1791
        %v2248 = vpack.c.b16 %v1800, %v1792
        %v2249 = vpack.c.b16 %v1801, %v1793
        %v2250 = vpack.c.b16 %v1802, %v1794
        %v2251 = vpack.c.b16 %v1811, %v1803
        %v2252 = vpack.c.b16 %v1812, %v1804
        %v2253 = vpack.c.b16 %v1813, %v1805
        %v2254 = vpack.c.b16 %v1814, %v1806
        %v2255 = vpack.c.b16 %v1815, %v1807
        %v2256 = vpack.c.b16 %v1816, %v1808
        %v2257 = vpack.c.b16 %v1817, %v1809
        %v2258 = vpack.c.b16 %v1818, %v1810
        %v2259 = vpack.c.b16 %v1827, %v1819
        %v2260 = vpack.c.b16 %v1828, %v1820
        %v2261 = vpack.c.b16 %v1829, %v1821
        %v2262 = vpack.c.b16 %v1830, %v1822
        %v2263 = vpack.c.b16 %v1831, %v1823
        %v2264 = vpack.c.b16 %v1832, %v1824
        %v2265 = vpack.c.b16 %v1833, %v1825
        %v2266 = vpack.c.b16 %v1834, %v1826
        %v2267 = vpack.c.b16 %v1843, %v1835
        %v2268 = vpack.c.b16 %v1844, %v1836
        %v2269 = vpack.c.b16 %v1845, %v1837
        %v2270 = vpack.c.b16 %v1846, %v1838
        %v2271 = vpack.c.b16 %v1847, %v1839
        %v2272 = vpack.c.b16 %v1848, %v1840
        %v2273 = vpack.c.b16 %v1849, %v1841
        %v2274 = vpack.c.b16 %v1850, %v1842
        %v2275 = vpack.c.b16 %v1859, %v1851
        %v2276 = vpack.c.b16 %v1860, %v1852
        %v2277 = vpack.c.b16 %v1861, %v1853
        %v2278 = vpack.c.b16 %v1862, %v1854
        %v2279 = vpack.c.b16 %v1863, %v1855
        %v2280 = vpack.c.b16 %v1864, %v1856
        %v2281 = vpack.c.b16 %v1865, %v1857
        %v2282 = vpack.c.b16 %v1866, %v1858
        %v2283 = vpack.c.b16 %v1875, %v1867
        %v2284 = vpack.c.b16 %v1876, %v1868
        %v2285 = vpack.c.b16 %v1877, %v1869
        %v2286 = vpack.c.b16 %v1878, %v1870
        %v2287 = vpack.c.b16 %v1879, %v1871
        %v2288 = vpack.c.b16 %v1880, %v1872
        %v2289 = vpack.c.b16 %v1881, %v1873
        %v2290 = vpack.c.b16 %v1882, %v1874
        %v2291 = vpack.c.b16 %v1891, %v1883
        %v2292 = vpack.c.b16 %v1892, %v1884
        %v2293 = vpack.c.b16 %v1893, %v1885
        %v2294 = vpack.c.b16 %v1894, %v1886
        %v2295 = vpack.c.b16 %v1895, %v1887
        %v2296 = vpack.c.b16 %v1896, %v1888
        %v2297 = vpack.c.b16 %v1897, %v1889
        %v2298 = vpack.c.b16 %v1898, %v1890
        %v2299 = vpack.c.b16 %v1907, %v1899
        %v2300 = vpack.c.b16 %v1908, %v1900
        %v2301 = vpack.c.b16 %v1909, %v1901
        %v2302 = vpack.c.b16 %v1910, %v1902
        %v2303 = vpack.c.b16 %v1911, %v1903
        %v2304 = vpack.c.b16 %v1912, %v1904
        %v2305 = vpack.c.b16 %v1913, %v1905
        %v2306 = vpack.c.b16 %v1914, %v1906
        %v2307 = vpack.c.b16 %v1923, %v1915
        %v2308 = vpack.c.b16 %v1924, %v1916
        %v2309 = vpack.c.b16 %v1925, %v1917
        %v2310 = vpack.c.b16 %v1926, %v1918
        %v2311 = vpack.c.b16 %v1927, %v1919
        %v2312 = vpack.c.b16 %v1928, %v1920
        %v2313 = vpack.c.b16 %v1929, %v1921
        %v2314 = vpack.c.b16 %v1930, %v1922
        %v2315 = vpack.c.b16 %v1939, %v1931
        %v2316 = vpack.c.b16 %v1940, %v1932
        %v2317 = vpack.c.b16 %v1941, %v1933
        %v2318 = vpack.c.b16 %v1942, %v1934
        %v2319 = vpack.c.b16 %v1943, %v1935
        %v2320 = vpack.c.b16 %v1944, %v1936
        %v2321 = vpack.c.b16 %v1945, %v1937
        %v2322 = vpack.c.b16 %v1946, %v1938
        %v2323 = vpack.c.b16 %v1955, %v1947
        %v2324 = vpack.c.b16 %v1956, %v1948
        %v2325 = vpack.c.b16 %v1957, %v1949
        %v2326 = vpack.c.b16 %v1958, %v1950
        %v2327 = vpack.c.b16 %v1959, %v1951
        %v2328 = vpack.c.b16 %v1960, %v1952
        %v2329 = vpack.c.b16 %v1961, %v1953
        %v2330 = vpack.c.b16 %v1962, %v1954
        %v2331 = vpack.c.b16 %v1971, %v1963
        %v2332 = vpack.c.b16 %v1972, %v1964
        %v2333 = vpack.c.b16 %v1973, %v1965
        %v2334 = vpack.c.b16 %v1974, %v1966
        %v2335 = vpack.c.b16 %v1975, %v1967
        %v2336 = vpack.c.b16 %v1976, %v1968
        %v2337 = vpack.c.b16 %v1977, %v1969
        %v2338 = vpack.c.b16 %v1978, %v1970
        %v2339 = vpack.c.b16 %v1987, %v1979
        %v2340 = vpack.c.b16 %v1988, %v1980
        %v2341 = vpack.c.b16 %v1989, %v1981
        %v2342 = vpack.c.b16 %v1990, %v1982
        %v2343 = vpack.c.b16 %v1991, %v1983
        %v2344 = vpack.c.b16 %v1992, %v1984
        %v2345 = vpack.c.b16 %v1993, %v1985
        %v2346 = vpack.c.b16 %v1994, %v1986
        %v2347 = vpack.c.b16 %v2003, %v1995
        %v2348 = vpack.c.b16 %v2004, %v1996
        %v2349 = vpack.c.b16 %v2005, %v1997
        %v2350 = vpack.c.b16 %v2006, %v1998
        %v2351 = vpack.c.b16 %v2007, %v1999
        %v2352 = vpack.c.b16 %v2008, %v2000
        %v2353 = vpack.c.b16 %v2009, %v2001
        %v2354 = vpack.c.b16 %v2010, %v2002
        %v2355 = vpack.c.b16 %v2019, %v2011
        %v2356 = vpack.c.b16 %v2020, %v2012
        %v2357 = vpack.c.b16 %v2021, %v2013
        %v2358 = vpack.c.b16 %v2022, %v2014
        %v2359 = vpack.c.b16 %v2023, %v2015
        %v2360 = vpack.c.b16 %v2024, %v2016
        %v2361 = vpack.c.b16 %v2025, %v2017
        %v2362 = vpack.c.b16 %v2026, %v2018
        %v2363 = vpack.c.b16 %v2035, %v2027
        %v2364 = vpack.c.b16 %v2036, %v2028
        %v2365 = vpack.c.b16 %v2037, %v2029
        %v2366 = vpack.c.b16 %v2038, %v2030
        %v2367 = vpack.c.b16 %v2039, %v2031
        %v2368 = vpack.c.b16 %v2040, %v2032
        %v2369 = vpack.c.b16 %v2041, %v2033
        %v2370 = vpack.c.b16 %v2042, %v2034
        %v2371 = vpack.c.b16 %v2051, %v2043
        %v2372 = vpack.c.b16 %v2052, %v2044
        %v2373 = vpack.c.b16 %v2053, %v2045
        %v2374 = vpack.c.b16 %v2054, %v2046
        %v2375 = vpack.c.b16 %v2055, %v2047
        %v2376 = vpack.c.b16 %v2056, %v2048
        %v2377 = vpack.c.b16 %v2057, %v2049
        %v2378 = vpack.c.b16 %v2058, %v2050
        %v2379 = vpack.c.b16 %v2067, %v2059
        %v2380 = vpack.c.b16 %v2068, %v2060
        %v2381 = vpack.c.b16 %v2069, %v2061
        %v2382 = vpack.c.b16 %v2070, %v2062
        %v2383 = vpack.c.b16 %v2071, %v2063
        %v2384 = vpack.c.b16 %v2072, %v2064
        %v2385 = vpack.c.b16 %v2073, %v2065
        %v2386 = vpack.c.b16 %v2074, %v2066
        %v2387 = vpack.c.b16 %v2083, %v2075
        %v2388 = vpack.c.b16 %v2084, %v2076
        %v2389 = vpack.c.b16 %v2085, %v2077
        %v2390 = vpack.c.b16 %v2086, %v2078
        %v2391 = vpack.c.b16 %v2087, %v2079
        %v2392 = vpack.c.b16 %v2088, %v2080
        %v2393 = vpack.c.b16 %v2089, %v2081
        %v2394 = vpack.c.b16 %v2090, %v2082
        %v2395 = vpack.c.b16 %v2099, %v2091
        %v2396 = vpack.c.b16 %v2100, %v2092
        %v2397 = vpack.c.b16 %v2101, %v2093
        %v2398 = vpack.c.b16 %v2102, %v2094
        %v2399 = vpack.c.b16 %v2103, %v2095
        %v2400 = vpack.c.b16 %v2104, %v2096
        %v2401 = vpack.c.b16 %v2105, %v2097
        %v2402 = vpack.c.b16 %v2106, %v2098
        %v2403 = vpack.c.b16 %v2115, %v2107
        %v2404 = vpack.c.b16 %v2116, %v2108
        %v2405 = vpack.c.b16 %v2117, %v2109
        %v2406 = vpack.c.b16 %v2118, %v2110
        %v2407 = vpack.c.b16 %v2119, %v2111
        %v2408 = vpack.c.b16 %v2120, %v2112
        %v2409 = vpack.c.b16 %v2121, %v2113
        %v2410 = vpack.c.b16 %v2122, %v2114
        %v2411 = vpack.c.b16 %v2131, %v2123
        %v2412 = vpack.c.b16 %v2132, %v2124
        %v2413 = vpack.c.b16 %v2133, %v2125
        %v2414 = vpack.c.b16 %v2134, %v2126
        %v2415 = vpack.c.b16 %v2135, %v2127
        %v2416 = vpack.c.b16 %v2136, %v2128
        %v2417 = vpack.c.b16 %v2137, %v2129
        %v2418 = vpack.c.b16 %v2138, %v2130
        %v2419 = vpack.c.b16 %v2147, %v2139
        %v2420 = vpack.c.b16 %v2148, %v2140
        %v2421 = vpack.c.b16 %v2149, %v2141
        %v2422 = vpack.c.b16 %v2150, %v2142
        %v2423 = vpack.c.b16 %v2151, %v2143
        %v2424 = vpack.c.b16 %v2152, %v2144
        %v2425 = vpack.c.b16 %v2153, %v2145
        %v2426 = vpack.c.b16 %v2154, %v2146
        %v2427 = vpack.c.b16 %v2163, %v2155
        %v2428 = vpack.c.b16 %v2164, %v2156
        %v2429 = vpack.c.b16 %v2165, %v2157
        %v2430 = vpack.c.b16 %v2166, %v2158
        %v2431 = vpack.c.b16 %v2167, %v2159
        %v2432 = vpack.c.b16 %v2168, %v2160
        %v2433 = vpack.c.b16 %v2169, %v2161
        %v2434 = vpack.c.b16 %v2170, %v2162
        %v2435 = vpack.c.b16 %v2179, %v2171
        %v2436 = vpack.c.b16 %v2180, %v2172
        %v2437 = vpack.c.b16 %v2181, %v2173
        %v2438 = vpack.c.b16 %v2182, %v2174
        %v2439 = vpack.c.b16 %v2183, %v2175
        %v2440 = vpack.c.b16 %v2184, %v2176
        %v2441 = vpack.c.b16 %v2185, %v2177
        %v2442 = vpack.c.b16 %v2186, %v2178
        %2699 = vmatprep.subr.bf16.mxu0 %v2244
        %2700 = vmatpush1.bf16.msra.mxu0 %v2243
        %2701 = vmatprep.subr.bf16.mxu0 %v2236
        %2702 = vmatpush1.bf16.msra.mxu0 %v2235
        %2703 = vmatprep.subr.bf16.mxu0 %v2228
        %2704 = vmatpush1.bf16.msra.mxu0 %v2227
        %2705 = vmatprep.subr.bf16.mxu0 %v2220
        %2706 = vmatpush1.bf16.msra.mxu0 %v2219
        %2707 = vmatprep.subr.bf16.mxu0 %v2212
        %2708 = vmatpush1.bf16.msra.mxu0 %v2211
        %2709 = vmatprep.subr.bf16.mxu0 %v2204
        %2710 = vmatpush1.bf16.msra.mxu0 %v2203
        %2711 = vmatprep.subr.bf16.mxu0 %v2196
        %2712 = vmatpush1.bf16.msra.mxu0 %v2195
        %2713 = vmatprep.subr.bf16.mxu0 %v2188
        %2714 = vmatpush1.bf16.msra.mxu0 %v2187
        %2715 = vmatprep.subr.bf16.mxu0 %v2308
        %2716 = vmatpush2.bf16.msra.mxu0 %v2307
        %2717 = vmatprep.subr.bf16.mxu0 %v2300
        %2718 = vmatpush2.bf16.msra.mxu0 %v2299
        %2719 = vmatprep.subr.bf16.mxu0 %v2292
        %2720 = vmatpush2.bf16.msra.mxu0 %v2291
        %2721 = vmatprep.subr.bf16.mxu0 %v2284
        %2722 = vmatpush2.bf16.msra.mxu0 %v2283
        %2723 = vmatprep.subr.bf16.mxu0 %v2276
        %2724 = vmatpush2.bf16.msra.mxu0 %v2275
        %2725 = vmatprep.subr.bf16.mxu0 %v2268
        %2726 = vmatpush2.bf16.msra.mxu0 %v2267
        %2727 = vmatprep.subr.bf16.mxu0 %v2260
        %2728 = vmatpush2.bf16.msra.mxu0 %v2259
        %2729 = vmatprep.subr.bf16.mxu0 %v2252
        %2730 = vmatpush2.bf16.msra.mxu0 %v2251
        %2731 = vmatprep.mubr.bf16.mxu0 %v1118
        %2732 = vmatmul.mubr.bf16.gmra.mxu0 %v1117
        %v2733 = vpop.f32.mrf.mxu0
        %v2734 = vadd.f32 %v1382, %v2733
        %v2735 = vpop.f32.mrf.mxu0
        %v2736 = vadd.f32 %v1386, %v2735
        %v2737 = vpop.f32.mrf.mxu0
        %v2738 = vpop.f32.mrf.mxu0
        %2739 = vdwg.mxu0
        %2740 = vmatprep.subr.bf16.mxu0 %v2372
        %2741 = vmatpush1.bf16.msra.mxu0 %v2371
        %2742 = vmatprep.subr.bf16.mxu0 %v2364
        %2743 = vmatpush1.bf16.msra.mxu0 %v2363
        %2744 = vmatprep.subr.bf16.mxu0 %v2356
        %2745 = vmatpush1.bf16.msra.mxu0 %v2355
        %2746 = vmatprep.subr.bf16.mxu0 %v2348
        %2747 = vmatpush1.bf16.msra.mxu0 %v2347
        %2748 = vmatprep.subr.bf16.mxu0 %v2340
        %2749 = vmatpush1.bf16.msra.mxu0 %v2339
        %2750 = vmatprep.subr.bf16.mxu0 %v2332
        %2751 = vmatpush1.bf16.msra.mxu0 %v2331
        %2752 = vmatprep.subr.bf16.mxu0 %v2324
        %2753 = vmatpush1.bf16.msra.mxu0 %v2323
        %2754 = vmatprep.subr.bf16.mxu0 %v2316
        %2755 = vmatpush1.bf16.msra.mxu0 %v2315
        %2756 = vmatprep.subr.bf16.mxu0 %v2436
        %2757 = vmatpush2.bf16.msra.mxu0 %v2435
        %2758 = vmatprep.subr.bf16.mxu0 %v2428
        %2759 = vmatpush2.bf16.msra.mxu0 %v2427
        %2760 = vmatprep.subr.bf16.mxu0 %v2420
        %2761 = vmatpush2.bf16.msra.mxu0 %v2419
        %2762 = vmatprep.subr.bf16.mxu0 %v2412
        %2763 = vmatpush2.bf16.msra.mxu0 %v2411
        %2764 = vmatprep.subr.bf16.mxu0 %v2404
        %2765 = vmatpush2.bf16.msra.mxu0 %v2403
        %2766 = vmatprep.subr.bf16.mxu0 %v2396
        %2767 = vmatpush2.bf16.msra.mxu0 %v2395
        %2768 = vmatprep.subr.bf16.mxu0 %v2388
        %2769 = vmatpush2.bf16.msra.mxu0 %v2387
        %2770 = vmatprep.subr.bf16.mxu0 %v2380
        %2771 = vmatpush2.bf16.msra.mxu0 %v2379
        %2772 = vmatprep.mubr.bf16.mxu0 %v1120
        %2773 = vmatmul.mubr.bf16.gmra.mxu0 %v1119
        %v2774 = vpop.f32.mrf.mxu0
        %v2775 = vadd.f32 %v2734, %v2774
        %v2776 = vpop.f32.mrf.mxu0
        %v2777 = vadd.f32 %v2736, %v2776
        %v2778 = vpop.f32.mrf.mxu0
        %v2779 = vpop.f32.mrf.mxu0
        %2780 = vdwg.mxu0
        %2781 = vmatprep.subr.bf16.mxu0 %v2246
        %2782 = vmatpush1.bf16.msra.mxu0 %v2245
        %2783 = vmatprep.subr.bf16.mxu0 %v2238
        %2784 = vmatpush1.bf16.msra.mxu0 %v2237
        %2785 = vmatprep.subr.bf16.mxu0 %v2230
        %2786 = vmatpush1.bf16.msra.mxu0 %v2229
        %2787 = vmatprep.subr.bf16.mxu0 %v2222
        %2788 = vmatpush1.bf16.msra.mxu0 %v2221
        %2789 = vmatprep.subr.bf16.mxu0 %v2214
        %2790 = vmatpush1.bf16.msra.mxu0 %v2213
        %2791 = vmatprep.subr.bf16.mxu0 %v2206
        %2792 = vmatpush1.bf16.msra.mxu0 %v2205
        %2793 = vmatprep.subr.bf16.mxu0 %v2198
        %2794 = vmatpush1.bf16.msra.mxu0 %v2197
        %2795 = vmatprep.subr.bf16.mxu0 %v2190
        %2796 = vmatpush1.bf16.msra.mxu0 %v2189
        %2797 = vmatprep.subr.bf16.mxu0 %v2310
        %2798 = vmatpush2.bf16.msra.mxu0 %v2309
        %2799 = vmatprep.subr.bf16.mxu0 %v2302
        %2800 = vmatpush2.bf16.msra.mxu0 %v2301
        %2801 = vmatprep.subr.bf16.mxu0 %v2294
        %2802 = vmatpush2.bf16.msra.mxu0 %v2293
        %2803 = vmatprep.subr.bf16.mxu0 %v2286
        %2804 = vmatpush2.bf16.msra.mxu0 %v2285
        %2805 = vmatprep.subr.bf16.mxu0 %v2278
        %2806 = vmatpush2.bf16.msra.mxu0 %v2277
        %2807 = vmatprep.subr.bf16.mxu0 %v2270
        %2808 = vmatpush2.bf16.msra.mxu0 %v2269
        %2809 = vmatprep.subr.bf16.mxu0 %v2262
        %2810 = vmatpush2.bf16.msra.mxu0 %v2261
        %2811 = vmatprep.subr.bf16.mxu0 %v2254
        %2812 = vmatpush2.bf16.msra.mxu0 %v2253
        %2813 = vmatprep.mubr.bf16.mxu0 %v1118
        %2814 = vmatmul.mubr.bf16.gmra.mxu0 %v1117
        %v2815 = vpop.f32.mrf.mxu0
        %v2816 = vadd.f32 %v1390, %v2815
        %v2817 = vpop.f32.mrf.mxu0
        %v2818 = vadd.f32 %v1394, %v2817
        %v2819 = vpop.f32.mrf.mxu0
        %v2820 = vpop.f32.mrf.mxu0
        %2821 = vdwg.mxu0
        %2822 = vmatprep.subr.bf16.mxu0 %v2374
        %2823 = vmatpush1.bf16.msra.mxu0 %v2373
        %2824 = vmatprep.subr.bf16.mxu0 %v2366
        %2825 = vmatpush1.bf16.msra.mxu0 %v2365
        %2826 = vmatprep.subr.bf16.mxu0 %v2358
        %2827 = vmatpush1.bf16.msra.mxu0 %v2357
        %2828 = vmatprep.subr.bf16.mxu0 %v2350
        %2829 = vmatpush1.bf16.msra.mxu0 %v2349
        %2830 = vmatprep.subr.bf16.mxu0 %v2342
        %2831 = vmatpush1.bf16.msra.mxu0 %v2341
        %2832 = vmatprep.subr.bf16.mxu0 %v2334
        %2833 = vmatpush1.bf16.msra.mxu0 %v2333
        %2834 = vmatprep.subr.bf16.mxu0 %v2326
        %2835 = vmatpush1.bf16.msra.mxu0 %v2325
        %2836 = vmatprep.subr.bf16.mxu0 %v2318
        %2837 = vmatpush1.bf16.msra.mxu0 %v2317
        %2838 = vmatprep.subr.bf16.mxu0 %v2438
        %2839 = vmatpush2.bf16.msra.mxu0 %v2437
        %2840 = vmatprep.subr.bf16.mxu0 %v2430
        %2841 = vmatpush2.bf16.msra.mxu0 %v2429
        %2842 = vmatprep.subr.bf16.mxu0 %v2422
        %2843 = vmatpush2.bf16.msra.mxu0 %v2421
        %2844 = vmatprep.subr.bf16.mxu0 %v2414
        %2845 = vmatpush2.bf16.msra.mxu0 %v2413
        %2846 = vmatprep.subr.bf16.mxu0 %v2406
        %2847 = vmatpush2.bf16.msra.mxu0 %v2405
        %2848 = vmatprep.subr.bf16.mxu0 %v2398
        %2849 = vmatpush2.bf16.msra.mxu0 %v2397
        %2850 = vmatprep.subr.bf16.mxu0 %v2390
        %2851 = vmatpush2.bf16.msra.mxu0 %v2389
        %2852 = vmatprep.subr.bf16.mxu0 %v2382
        %2853 = vmatpush2.bf16.msra.mxu0 %v2381
        %2854 = vmatprep.mubr.bf16.mxu0 %v1120
        %2855 = vmatmul.mubr.bf16.gmra.mxu0 %v1119
        %v2856 = vpop.f32.mrf.mxu0
        %v2857 = vadd.f32 %v2816, %v2856
        %v2858 = vpop.f32.mrf.mxu0
        %v2859 = vadd.f32 %v2818, %v2858
        %v2860 = vpop.f32.mrf.mxu0
        %v2861 = vpop.f32.mrf.mxu0
        %2862 = vdwg.mxu0
        %2863 = vmatprep.subr.bf16.mxu0 %v2248
        %2864 = vmatpush1.bf16.msra.mxu0 %v2247
        %2865 = vmatprep.subr.bf16.mxu0 %v2240
        %2866 = vmatpush1.bf16.msra.mxu0 %v2239
        %2867 = vmatprep.subr.bf16.mxu0 %v2232
        %2868 = vmatpush1.bf16.msra.mxu0 %v2231
        %2869 = vmatprep.subr.bf16.mxu0 %v2224
        %2870 = vmatpush1.bf16.msra.mxu0 %v2223
        %2871 = vmatprep.subr.bf16.mxu0 %v2216
        %2872 = vmatpush1.bf16.msra.mxu0 %v2215
        %2873 = vmatprep.subr.bf16.mxu0 %v2208
        %2874 = vmatpush1.bf16.msra.mxu0 %v2207
        %2875 = vmatprep.subr.bf16.mxu0 %v2200
        %2876 = vmatpush1.bf16.msra.mxu0 %v2199
        %2877 = vmatprep.subr.bf16.mxu0 %v2192
        %2878 = vmatpush1.bf16.msra.mxu0 %v2191
        %2879 = vmatprep.subr.bf16.mxu0 %v2312
        %2880 = vmatpush2.bf16.msra.mxu0 %v2311
        %2881 = vmatprep.subr.bf16.mxu0 %v2304
        %2882 = vmatpush2.bf16.msra.mxu0 %v2303
        %2883 = vmatprep.subr.bf16.mxu0 %v2296
        %2884 = vmatpush2.bf16.msra.mxu0 %v2295
        %2885 = vmatprep.subr.bf16.mxu0 %v2288
        %2886 = vmatpush2.bf16.msra.mxu0 %v2287
        %2887 = vmatprep.subr.bf16.mxu0 %v2280
        %2888 = vmatpush2.bf16.msra.mxu0 %v2279
        %2889 = vmatprep.subr.bf16.mxu0 %v2272
        %2890 = vmatpush2.bf16.msra.mxu0 %v2271
        %2891 = vmatprep.subr.bf16.mxu0 %v2264
        %2892 = vmatpush2.bf16.msra.mxu0 %v2263
        %2893 = vmatprep.subr.bf16.mxu0 %v2256
        %2894 = vmatpush2.bf16.msra.mxu0 %v2255
        %2895 = vmatprep.mubr.bf16.mxu0 %v1118
        %2896 = vmatmul.mubr.bf16.gmra.mxu0 %v1117
        %v2897 = vpop.f32.mrf.mxu0
        %v2898 = vadd.f32 %v1398, %v2897
        %v2899 = vpop.f32.mrf.mxu0
        %v2900 = vadd.f32 %v1402, %v2899
        %v2901 = vpop.f32.mrf.mxu0
        %v2902 = vpop.f32.mrf.mxu0
        %2903 = vdwg.mxu0
        %2904 = vmatprep.subr.bf16.mxu0 %v2376
        %2905 = vmatpush1.bf16.msra.mxu0 %v2375
        %2906 = vmatprep.subr.bf16.mxu0 %v2368
        %2907 = vmatpush1.bf16.msra.mxu0 %v2367
        %2908 = vmatprep.subr.bf16.mxu0 %v2360
        %2909 = vmatpush1.bf16.msra.mxu0 %v2359
        %2910 = vmatprep.subr.bf16.mxu0 %v2352
        %2911 = vmatpush1.bf16.msra.mxu0 %v2351
        %2912 = vmatprep.subr.bf16.mxu0 %v2344
        %2913 = vmatpush1.bf16.msra.mxu0 %v2343
        %2914 = vmatprep.subr.bf16.mxu0 %v2336
        %2915 = vmatpush1.bf16.msra.mxu0 %v2335
        %2916 = vmatprep.subr.bf16.mxu0 %v2328
        %2917 = vmatpush1.bf16.msra.mxu0 %v2327
        %2918 = vmatprep.subr.bf16.mxu0 %v2320
        %2919 = vmatpush1.bf16.msra.mxu0 %v2319
        %2920 = vmatprep.subr.bf16.mxu0 %v2440
        %2921 = vmatpush2.bf16.msra.mxu0 %v2439
        %2922 = vmatprep.subr.bf16.mxu0 %v2432
        %2923 = vmatpush2.bf16.msra.mxu0 %v2431
        %2924 = vmatprep.subr.bf16.mxu0 %v2424
        %2925 = vmatpush2.bf16.msra.mxu0 %v2423
        %2926 = vmatprep.subr.bf16.mxu0 %v2416
        %2927 = vmatpush2.bf16.msra.mxu0 %v2415
        %2928 = vmatprep.subr.bf16.mxu0 %v2408
        %2929 = vmatpush2.bf16.msra.mxu0 %v2407
        %2930 = vmatprep.subr.bf16.mxu0 %v2400
        %2931 = vmatpush2.bf16.msra.mxu0 %v2399
        %2932 = vmatprep.subr.bf16.mxu0 %v2392
        %2933 = vmatpush2.bf16.msra.mxu0 %v2391
        %2934 = vmatprep.subr.bf16.mxu0 %v2384
        %2935 = vmatpush2.bf16.msra.mxu0 %v2383
        %2936 = vmatprep.mubr.bf16.mxu0 %v1120
        %2937 = vmatmul.mubr.bf16.gmra.mxu0 %v1119
        %v2938 = vpop.f32.mrf.mxu0
        %v2939 = vadd.f32 %v2898, %v2938
        %v2940 = vpop.f32.mrf.mxu0
        %v2941 = vadd.f32 %v2900, %v2940
        %v2942 = vpop.f32.mrf.mxu0
        %v2943 = vpop.f32.mrf.mxu0
        %2944 = vdwg.mxu0
        %2945 = vmatprep.subr.bf16.mxu0 %v2250
        %2946 = vmatpush1.bf16.msra.mxu0 %v2249
        %2947 = vmatprep.subr.bf16.mxu0 %v2242
        %2948 = vmatpush1.bf16.msra.mxu0 %v2241
        %2949 = vmatprep.subr.bf16.mxu0 %v2234
        %2950 = vmatpush1.bf16.msra.mxu0 %v2233
        %2951 = vmatprep.subr.bf16.mxu0 %v2226
        %2952 = vmatpush1.bf16.msra.mxu0 %v2225
        %2953 = vmatprep.subr.bf16.mxu0 %v2218
        %2954 = vmatpush1.bf16.msra.mxu0 %v2217
        %2955 = vmatprep.subr.bf16.mxu0 %v2210
        %2956 = vmatpush1.bf16.msra.mxu0 %v2209
        %2957 = vmatprep.subr.bf16.mxu0 %v2202
        %2958 = vmatpush1.bf16.msra.mxu0 %v2201
        %2959 = vmatprep.subr.bf16.mxu0 %v2194
        %2960 = vmatpush1.bf16.msra.mxu0 %v2193
        %2961 = vmatprep.subr.bf16.mxu0 %v2314
        %2962 = vmatpush2.bf16.msra.mxu0 %v2313
        %2963 = vmatprep.subr.bf16.mxu0 %v2306
        %2964 = vmatpush2.bf16.msra.mxu0 %v2305
        %2965 = vmatprep.subr.bf16.mxu0 %v2298
        %2966 = vmatpush2.bf16.msra.mxu0 %v2297
        %2967 = vmatprep.subr.bf16.mxu0 %v2290
        %2968 = vmatpush2.bf16.msra.mxu0 %v2289
        %2969 = vmatprep.subr.bf16.mxu0 %v2282
        %2970 = vmatpush2.bf16.msra.mxu0 %v2281
        %2971 = vmatprep.subr.bf16.mxu0 %v2274
        %2972 = vmatpush2.bf16.msra.mxu0 %v2273
        %2973 = vmatprep.subr.bf16.mxu0 %v2266
        %2974 = vmatpush2.bf16.msra.mxu0 %v2265
        %2975 = vmatprep.subr.bf16.mxu0 %v2258
        %2976 = vmatpush2.bf16.msra.mxu0 %v2257
        %2977 = vmatprep.mubr.bf16.mxu0 %v1118
        %2978 = vmatmul.mubr.bf16.gmra.mxu0 %v1117
        %v2979 = vpop.f32.mrf.mxu0
        %v2980 = vadd.f32 %v1406, %v2979
        %v2981 = vpop.f32.mrf.mxu0
        %v2982 = vadd.f32 %v1410, %v2981
        %v2983 = vpop.f32.mrf.mxu0
        %v2984 = vpop.f32.mrf.mxu0
        %2985 = vdwg.mxu0
        %2986 = vmatprep.subr.bf16.mxu0 %v2378
        %2987 = vmatpush1.bf16.msra.mxu0 %v2377
        %2988 = vmatprep.subr.bf16.mxu0 %v2370
        %2989 = vmatpush1.bf16.msra.mxu0 %v2369
        %2990 = vmatprep.subr.bf16.mxu0 %v2362
        %2991 = vmatpush1.bf16.msra.mxu0 %v2361
        %2992 = vmatprep.subr.bf16.mxu0 %v2354
        %2993 = vmatpush1.bf16.msra.mxu0 %v2353
        %2994 = vmatprep.subr.bf16.mxu0 %v2346
        %2995 = vmatpush1.bf16.msra.mxu0 %v2345
        %2996 = vmatprep.subr.bf16.mxu0 %v2338
        %2997 = vmatpush1.bf16.msra.mxu0 %v2337
        %2998 = vmatprep.subr.bf16.mxu0 %v2330
        %2999 = vmatpush1.bf16.msra.mxu0 %v2329
        %3000 = vmatprep.subr.bf16.mxu0 %v2322
        %3001 = vmatpush1.bf16.msra.mxu0 %v2321
        %3002 = vmatprep.subr.bf16.mxu0 %v2442
        %3003 = vmatpush2.bf16.msra.mxu0 %v2441
        %3004 = vmatprep.subr.bf16.mxu0 %v2434
        %3005 = vmatpush2.bf16.msra.mxu0 %v2433
        %3006 = vmatprep.subr.bf16.mxu0 %v2426
        %3007 = vmatpush2.bf16.msra.mxu0 %v2425
        %3008 = vmatprep.subr.bf16.mxu0 %v2418
        %3009 = vmatpush2.bf16.msra.mxu0 %v2417
        %3010 = vmatprep.subr.bf16.mxu0 %v2410
        %3011 = vmatpush2.bf16.msra.mxu0 %v2409
        %3012 = vmatprep.subr.bf16.mxu0 %v2402
        %3013 = vmatpush2.bf16.msra.mxu0 %v2401
        %3014 = vmatprep.subr.bf16.mxu0 %v2394
        %3015 = vmatpush2.bf16.msra.mxu0 %v2393
        %3016 = vmatprep.subr.bf16.mxu0 %v2386
        %3017 = vmatpush2.bf16.msra.mxu0 %v2385
        %3018 = vmatprep.mubr.bf16.mxu0 %v1120
        %3019 = vmatmul.mubr.bf16.gmra.mxu0 %v1119
        %v3020 = vpop.f32.mrf.mxu0
        %v3021 = vadd.f32 %v2980, %v3020
        %v3022 = vpop.f32.mrf.mxu0
        %v3023 = vadd.f32 %v2982, %v3022
        %v3024 = vpop.f32.mrf.mxu0
        %v3025 = vpop.f32.mrf.mxu0
        %3026 = vdwg.mxu0
        %v3027 = vmax.f32 %v2775, 0.0
        %v3028 = vmax.f32 %v2777, 0.0
        %v3029 = vmax.f32 %v2857, 0.0
        %v3030 = vmax.f32 %v2859, 0.0
        %v3031 = vmax.f32 %v2939, 0.0
        %v3032 = vmax.f32 %v2941, 0.0
        %v3033 = vmax.f32 %v3021, 0.0
        %v3034 = vmax.f32 %v3023, 0.0
        %v3035 = vpack.c.bf16 %v3027, %v3027
        %v3036 = vpack.c.bf16 %v3028, %v3028
        %v3037 = vpack.c.bf16 %v3029, %v3029
        %v3038 = vpack.c.bf16 %v3030, %v3030
        %v3039 = vpack.c.bf16 %v3031, %v3031
        %v3040 = vpack.c.bf16 %v3032, %v3032
        %v3041 = vpack.c.bf16 %v3033, %v3033
        %v3042 = vpack.c.bf16 %v3034, %v3034
        %v3043 = vld [vmem:[%s413] sm:$0xff]
        %v3044 = vld [vmem:[%s413 + $0x8] sm:$0xff]
        %v3045 = vld [vmem:[%s413 + $0x10] sm:$0xff]
        %v3046 = vld [vmem:[%s413 + $0x18] sm:$0xff]
        %v3047 = vld [vmem:[%s413 + $0x20] sm:$0xff]
        %v3048 = vld [vmem:[%s413 + $0x28] sm:$0xff]
        %v3049 = vld [vmem:[%s413 + $0x30] sm:$0xff]
        %v3050 = vld [vmem:[%s413 + $0x38] sm:$0xff]
        %v3051 = vld [vmem:[%s413 + $0x40] sm:$0xff]
        %v3052 = vld [vmem:[%s413 + $0x48] sm:$0xff]
        %v3053 = vld [vmem:[%s413 + $0x50] sm:$0xff]
        %v3054 = vld [vmem:[%s413 + $0x58] sm:$0xff]
        %v3055 = vld [vmem:[%s413 + $0x60] sm:$0xff]
        %v3056 = vld [vmem:[%s413 + $0x68] sm:$0xff]
        %v3057 = vld [vmem:[%s413 + $0x70] sm:$0xff]
        %v3058 = vld [vmem:[%s413 + $0x78] sm:$0xff]
        %v3059 = vld [vmem:[%s413 + $0x80] sm:$0xff]
        %v3060 = vld [vmem:[%s413 + $0x88] sm:$0xff]
        %v3061 = vld [vmem:[%s413 + $0x90] sm:$0xff]
        %v3062 = vld [vmem:[%s413 + $0x98] sm:$0xff]
        %v3063 = vld [vmem:[%s413 + $0xa0] sm:$0xff]
        %v3064 = vld [vmem:[%s413 + $0xa8] sm:$0xff]
        %v3065 = vld [vmem:[%s413 + $0xb0] sm:$0xff]
        %v3066 = vld [vmem:[%s413 + $0xb8] sm:$0xff]
        %v3067 = vld [vmem:[%s413 + $0xc0] sm:$0xff]
        %v3068 = vld [vmem:[%s413 + $0xc8] sm:$0xff]
        %v3069 = vld [vmem:[%s413 + $0xd0] sm:$0xff]
        %v3070 = vld [vmem:[%s413 + $0xd8] sm:$0xff]
        %v3071 = vld [vmem:[%s413 + $0xe0] sm:$0xff]
        %v3072 = vld [vmem:[%s413 + $0xe8] sm:$0xff]
        %v3073 = vld [vmem:[%s413 + $0xf0] sm:$0xff]
        %v3074 = vld [vmem:[%s413 + $0xf8] sm:$0xff]
        %v3075 = vld [vmem:[%s413 + $0x100] sm:$0xff]
        %v3076 = vld [vmem:[%s413 + $0x108] sm:$0xff]
        %v3077 = vld [vmem:[%s413 + $0x110] sm:$0xff]
        %v3078 = vld [vmem:[%s413 + $0x118] sm:$0xff]
        %v3079 = vld [vmem:[%s413 + $0x120] sm:$0xff]
        %v3080 = vld [vmem:[%s413 + $0x128] sm:$0xff]
        %v3081 = vld [vmem:[%s413 + $0x130] sm:$0xff]
        %v3082 = vld [vmem:[%s413 + $0x138] sm:$0xff]
        %v3083 = vld [vmem:[%s413 + $0x140] sm:$0xff]
        %v3084 = vld [vmem:[%s413 + $0x148] sm:$0xff]
        %v3085 = vld [vmem:[%s413 + $0x150] sm:$0xff]
        %v3086 = vld [vmem:[%s413 + $0x158] sm:$0xff]
        %v3087 = vld [vmem:[%s413 + $0x160] sm:$0xff]
        %v3088 = vld [vmem:[%s413 + $0x168] sm:$0xff]
        %v3089 = vld [vmem:[%s413 + $0x170] sm:$0xff]
        %v3090 = vld [vmem:[%s413 + $0x178] sm:$0xff]
        %v3091 = vld [vmem:[%s413 + $0x180] sm:$0xff]
        %v3092 = vld [vmem:[%s413 + $0x188] sm:$0xff]
        %v3093 = vld [vmem:[%s413 + $0x190] sm:$0xff]
        %v3094 = vld [vmem:[%s413 + $0x198] sm:$0xff]
        %v3095 = vld [vmem:[%s413 + $0x1a0] sm:$0xff]
        %v3096 = vld [vmem:[%s413 + $0x1a8] sm:$0xff]
        %v3097 = vld [vmem:[%s413 + $0x1b0] sm:$0xff]
        %v3098 = vld [vmem:[%s413 + $0x1b8] sm:$0xff]
        %v3099 = vld [vmem:[%s413 + $0x1c0] sm:$0xff]
        %v3100 = vld [vmem:[%s413 + $0x1c8] sm:$0xff]
        %v3101 = vld [vmem:[%s413 + $0x1d0] sm:$0xff]
        %v3102 = vld [vmem:[%s413 + $0x1d8] sm:$0xff]
        %v3103 = vld [vmem:[%s413 + $0x1e0] sm:$0xff]
        %v3104 = vld [vmem:[%s413 + $0x1e8] sm:$0xff]
        %v3105 = vld [vmem:[%s413 + $0x1f0] sm:$0xff]
        %v3106 = vld [vmem:[%s413 + $0x1f8] sm:$0xff]
        %v3107 = vld [vmem:[%s413 + $0x200] sm:$0xff]
        %v3108 = vld [vmem:[%s413 + $0x208] sm:$0xff]
        %v3109 = vld [vmem:[%s413 + $0x210] sm:$0xff]
        %v3110 = vld [vmem:[%s413 + $0x218] sm:$0xff]
        %v3111 = vld [vmem:[%s413 + $0x220] sm:$0xff]
        %v3112 = vld [vmem:[%s413 + $0x228] sm:$0xff]
        %v3113 = vld [vmem:[%s413 + $0x230] sm:$0xff]
        %v3114 = vld [vmem:[%s413 + $0x238] sm:$0xff]
        %v3115 = vld [vmem:[%s413 + $0x240] sm:$0xff]
        %v3116 = vld [vmem:[%s413 + $0x248] sm:$0xff]
        %v3117 = vld [vmem:[%s413 + $0x250] sm:$0xff]
        %v3118 = vld [vmem:[%s413 + $0x258] sm:$0xff]
        %v3119 = vld [vmem:[%s413 + $0x260] sm:$0xff]
        %v3120 = vld [vmem:[%s413 + $0x268] sm:$0xff]
        %v3121 = vld [vmem:[%s413 + $0x270] sm:$0xff]
        %v3122 = vld [vmem:[%s413 + $0x278] sm:$0xff]
        %v3123 = vld [vmem:[%s413 + $0x280] sm:$0xff]
        %v3124 = vld [vmem:[%s413 + $0x288] sm:$0xff]
        %v3125 = vld [vmem:[%s413 + $0x290] sm:$0xff]
        %v3126 = vld [vmem:[%s413 + $0x298] sm:$0xff]
        %v3127 = vld [vmem:[%s413 + $0x2a0] sm:$0xff]
        %v3128 = vld [vmem:[%s413 + $0x2a8] sm:$0xff]
        %v3129 = vld [vmem:[%s413 + $0x2b0] sm:$0xff]
        %v3130 = vld [vmem:[%s413 + $0x2b8] sm:$0xff]
        %v3131 = vld [vmem:[%s413 + $0x2c0] sm:$0xff]
        %v3132 = vld [vmem:[%s413 + $0x2c8] sm:$0xff]
        %v3133 = vld [vmem:[%s413 + $0x2d0] sm:$0xff]
        %v3134 = vld [vmem:[%s413 + $0x2d8] sm:$0xff]
        %v3135 = vld [vmem:[%s413 + $0x2e0] sm:$0xff]
        %v3136 = vld [vmem:[%s413 + $0x2e8] sm:$0xff]
        %v3137 = vld [vmem:[%s413 + $0x2f0] sm:$0xff]
        %v3138 = vld [vmem:[%s413 + $0x2f8] sm:$0xff]
        %v3139 = vld [vmem:[%s413 + $0x300] sm:$0xff]
        %v3140 = vld [vmem:[%s413 + $0x308] sm:$0xff]
        %v3141 = vld [vmem:[%s413 + $0x310] sm:$0xff]
        %v3142 = vld [vmem:[%s413 + $0x318] sm:$0xff]
        %v3143 = vld [vmem:[%s413 + $0x320] sm:$0xff]
        %v3144 = vld [vmem:[%s413 + $0x328] sm:$0xff]
        %v3145 = vld [vmem:[%s413 + $0x330] sm:$0xff]
        %v3146 = vld [vmem:[%s413 + $0x338] sm:$0xff]
        %v3147 = vld [vmem:[%s413 + $0x340] sm:$0xff]
        %v3148 = vld [vmem:[%s413 + $0x348] sm:$0xff]
        %v3149 = vld [vmem:[%s413 + $0x350] sm:$0xff]
        %v3150 = vld [vmem:[%s413 + $0x358] sm:$0xff]
        %v3151 = vld [vmem:[%s413 + $0x360] sm:$0xff]
        %v3152 = vld [vmem:[%s413 + $0x368] sm:$0xff]
        %v3153 = vld [vmem:[%s413 + $0x370] sm:$0xff]
        %v3154 = vld [vmem:[%s413 + $0x378] sm:$0xff]
        %v3155 = vld [vmem:[%s413 + $0x380] sm:$0xff]
        %v3156 = vld [vmem:[%s413 + $0x388] sm:$0xff]
        %v3157 = vld [vmem:[%s413 + $0x390] sm:$0xff]
        %v3158 = vld [vmem:[%s413 + $0x398] sm:$0xff]
        %v3159 = vld [vmem:[%s413 + $0x3a0] sm:$0xff]
        %v3160 = vld [vmem:[%s413 + $0x3a8] sm:$0xff]
        %v3161 = vld [vmem:[%s413 + $0x3b0] sm:$0xff]
        %v3162 = vld [vmem:[%s413 + $0x3b8] sm:$0xff]
        %v3163 = vld [vmem:[%s413 + $0x3c0] sm:$0xff]
        %v3164 = vld [vmem:[%s413 + $0x3c8] sm:$0xff]
        %v3165 = vld [vmem:[%s413 + $0x3d0] sm:$0xff]
        %v3166 = vld [vmem:[%s413 + $0x3d8] sm:$0xff]
        %v3167 = vld [vmem:[%s413 + $0x3e0] sm:$0xff]
        %v3168 = vld [vmem:[%s413 + $0x3e8] sm:$0xff]
        %v3169 = vld [vmem:[%s413 + $0x3f0] sm:$0xff]
        %v3170 = vld [vmem:[%s413 + $0x3f8] sm:$0xff]
        %v3171 = vld [vmem:[%s413 + $0x400] sm:$0xff]
        %v3172 = vld [vmem:[%s413 + $0x408] sm:$0xff]
        %v3173 = vld [vmem:[%s413 + $0x410] sm:$0xff]
        %v3174 = vld [vmem:[%s413 + $0x418] sm:$0xff]
        %v3175 = vld [vmem:[%s413 + $0x420] sm:$0xff]
        %v3176 = vld [vmem:[%s413 + $0x428] sm:$0xff]
        %v3177 = vld [vmem:[%s413 + $0x430] sm:$0xff]
        %v3178 = vld [vmem:[%s413 + $0x438] sm:$0xff]
        %v3179 = vld [vmem:[%s413 + $0x440] sm:$0xff]
        %v3180 = vld [vmem:[%s413 + $0x448] sm:$0xff]
        %v3181 = vld [vmem:[%s413 + $0x450] sm:$0xff]
        %v3182 = vld [vmem:[%s413 + $0x458] sm:$0xff]
        %v3183 = vld [vmem:[%s413 + $0x460] sm:$0xff]
        %v3184 = vld [vmem:[%s413 + $0x468] sm:$0xff]
        %v3185 = vld [vmem:[%s413 + $0x470] sm:$0xff]
        %v3186 = vld [vmem:[%s413 + $0x478] sm:$0xff]
        %v3187 = vld [vmem:[%s413 + $0x480] sm:$0xff]
        %v3188 = vld [vmem:[%s413 + $0x488] sm:$0xff]
        %v3189 = vld [vmem:[%s413 + $0x490] sm:$0xff]
        %v3190 = vld [vmem:[%s413 + $0x498] sm:$0xff]
        %v3191 = vld [vmem:[%s413 + $0x4a0] sm:$0xff]
        %v3192 = vld [vmem:[%s413 + $0x4a8] sm:$0xff]
        %v3193 = vld [vmem:[%s413 + $0x4b0] sm:$0xff]
        %v3194 = vld [vmem:[%s413 + $0x4b8] sm:$0xff]
        %v3195 = vld [vmem:[%s413 + $0x4c0] sm:$0xff]
        %v3196 = vld [vmem:[%s413 + $0x4c8] sm:$0xff]
        %v3197 = vld [vmem:[%s413 + $0x4d0] sm:$0xff]
        %v3198 = vld [vmem:[%s413 + $0x4d8] sm:$0xff]
        %v3199 = vld [vmem:[%s413 + $0x4e0] sm:$0xff]
        %v3200 = vld [vmem:[%s413 + $0x4e8] sm:$0xff]
        %v3201 = vld [vmem:[%s413 + $0x4f0] sm:$0xff]
        %v3202 = vld [vmem:[%s413 + $0x4f8] sm:$0xff]
        %v3203 = vld [vmem:[%s413 + $0x500] sm:$0xff]
        %v3204 = vld [vmem:[%s413 + $0x508] sm:$0xff]
        %v3205 = vld [vmem:[%s413 + $0x510] sm:$0xff]
        %v3206 = vld [vmem:[%s413 + $0x518] sm:$0xff]
        %v3207 = vld [vmem:[%s413 + $0x520] sm:$0xff]
        %v3208 = vld [vmem:[%s413 + $0x528] sm:$0xff]
        %v3209 = vld [vmem:[%s413 + $0x530] sm:$0xff]
        %v3210 = vld [vmem:[%s413 + $0x538] sm:$0xff]
        %v3211 = vld [vmem:[%s413 + $0x540] sm:$0xff]
        %v3212 = vld [vmem:[%s413 + $0x548] sm:$0xff]
        %v3213 = vld [vmem:[%s413 + $0x550] sm:$0xff]
        %v3214 = vld [vmem:[%s413 + $0x558] sm:$0xff]
        %v3215 = vld [vmem:[%s413 + $0x560] sm:$0xff]
        %v3216 = vld [vmem:[%s413 + $0x568] sm:$0xff]
        %v3217 = vld [vmem:[%s413 + $0x570] sm:$0xff]
        %v3218 = vld [vmem:[%s413 + $0x578] sm:$0xff]
        %v3219 = vld [vmem:[%s413 + $0x580] sm:$0xff]
        %v3220 = vld [vmem:[%s413 + $0x588] sm:$0xff]
        %v3221 = vld [vmem:[%s413 + $0x590] sm:$0xff]
        %v3222 = vld [vmem:[%s413 + $0x598] sm:$0xff]
        %v3223 = vld [vmem:[%s413 + $0x5a0] sm:$0xff]
        %v3224 = vld [vmem:[%s413 + $0x5a8] sm:$0xff]
        %v3225 = vld [vmem:[%s413 + $0x5b0] sm:$0xff]
        %v3226 = vld [vmem:[%s413 + $0x5b8] sm:$0xff]
        %v3227 = vld [vmem:[%s413 + $0x5c0] sm:$0xff]
        %v3228 = vld [vmem:[%s413 + $0x5c8] sm:$0xff]
        %v3229 = vld [vmem:[%s413 + $0x5d0] sm:$0xff]
        %v3230 = vld [vmem:[%s413 + $0x5d8] sm:$0xff]
        %v3231 = vld [vmem:[%s413 + $0x5e0] sm:$0xff]
        %v3232 = vld [vmem:[%s413 + $0x5e8] sm:$0xff]
        %v3233 = vld [vmem:[%s413 + $0x5f0] sm:$0xff]
        %v3234 = vld [vmem:[%s413 + $0x5f8] sm:$0xff]
        %v3235 = vld [vmem:[%s413 + $0x600] sm:$0xff]
        %v3236 = vld [vmem:[%s413 + $0x608] sm:$0xff]
        %v3237 = vld [vmem:[%s413 + $0x610] sm:$0xff]
        %v3238 = vld [vmem:[%s413 + $0x618] sm:$0xff]
        %v3239 = vld [vmem:[%s413 + $0x620] sm:$0xff]
        %v3240 = vld [vmem:[%s413 + $0x628] sm:$0xff]
        %v3241 = vld [vmem:[%s413 + $0x630] sm:$0xff]
        %v3242 = vld [vmem:[%s413 + $0x638] sm:$0xff]
        %v3243 = vld [vmem:[%s413 + $0x640] sm:$0xff]
        %v3244 = vld [vmem:[%s413 + $0x648] sm:$0xff]
        %v3245 = vld [vmem:[%s413 + $0x650] sm:$0xff]
        %v3246 = vld [vmem:[%s413 + $0x658] sm:$0xff]
        %v3247 = vld [vmem:[%s413 + $0x660] sm:$0xff]
        %v3248 = vld [vmem:[%s413 + $0x668] sm:$0xff]
        %v3249 = vld [vmem:[%s413 + $0x670] sm:$0xff]
        %v3250 = vld [vmem:[%s413 + $0x678] sm:$0xff]
        %v3251 = vld [vmem:[%s413 + $0x680] sm:$0xff]
        %v3252 = vld [vmem:[%s413 + $0x688] sm:$0xff]
        %v3253 = vld [vmem:[%s413 + $0x690] sm:$0xff]
        %v3254 = vld [vmem:[%s413 + $0x698] sm:$0xff]
        %v3255 = vld [vmem:[%s413 + $0x6a0] sm:$0xff]
        %v3256 = vld [vmem:[%s413 + $0x6a8] sm:$0xff]
        %v3257 = vld [vmem:[%s413 + $0x6b0] sm:$0xff]
        %v3258 = vld [vmem:[%s413 + $0x6b8] sm:$0xff]
        %v3259 = vld [vmem:[%s413 + $0x6c0] sm:$0xff]
        %v3260 = vld [vmem:[%s413 + $0x6c8] sm:$0xff]
        %v3261 = vld [vmem:[%s413 + $0x6d0] sm:$0xff]
        %v3262 = vld [vmem:[%s413 + $0x6d8] sm:$0xff]
        %v3263 = vld [vmem:[%s413 + $0x6e0] sm:$0xff]
        %v3264 = vld [vmem:[%s413 + $0x6e8] sm:$0xff]
        %v3265 = vld [vmem:[%s413 + $0x6f0] sm:$0xff]
        %v3266 = vld [vmem:[%s413 + $0x6f8] sm:$0xff]
        %v3267 = vld [vmem:[%s413 + $0x700] sm:$0xff]
        %v3268 = vld [vmem:[%s413 + $0x708] sm:$0xff]
        %v3269 = vld [vmem:[%s413 + $0x710] sm:$0xff]
        %v3270 = vld [vmem:[%s413 + $0x718] sm:$0xff]
        %v3271 = vld [vmem:[%s413 + $0x720] sm:$0xff]
        %v3272 = vld [vmem:[%s413 + $0x728] sm:$0xff]
        %v3273 = vld [vmem:[%s413 + $0x730] sm:$0xff]
        %v3274 = vld [vmem:[%s413 + $0x738] sm:$0xff]
        %v3275 = vld [vmem:[%s413 + $0x740] sm:$0xff]
        %v3276 = vld [vmem:[%s413 + $0x748] sm:$0xff]
        %v3277 = vld [vmem:[%s413 + $0x750] sm:$0xff]
        %v3278 = vld [vmem:[%s413 + $0x758] sm:$0xff]
        %v3279 = vld [vmem:[%s413 + $0x760] sm:$0xff]
        %v3280 = vld [vmem:[%s413 + $0x768] sm:$0xff]
        %v3281 = vld [vmem:[%s413 + $0x770] sm:$0xff]
        %v3282 = vld [vmem:[%s413 + $0x778] sm:$0xff]
        %v3283 = vld [vmem:[%s413 + $0x780] sm:$0xff]
        %v3284 = vld [vmem:[%s413 + $0x788] sm:$0xff]
        %v3285 = vld [vmem:[%s413 + $0x790] sm:$0xff]
        %v3286 = vld [vmem:[%s413 + $0x798] sm:$0xff]
        %v3287 = vld [vmem:[%s413 + $0x7a0] sm:$0xff]
        %v3288 = vld [vmem:[%s413 + $0x7a8] sm:$0xff]
        %v3289 = vld [vmem:[%s413 + $0x7b0] sm:$0xff]
        %v3290 = vld [vmem:[%s413 + $0x7b8] sm:$0xff]
        %v3291 = vld [vmem:[%s413 + $0x7c0] sm:$0xff]
        %v3292 = vld [vmem:[%s413 + $0x7c8] sm:$0xff]
        %v3293 = vld [vmem:[%s413 + $0x7d0] sm:$0xff]
        %v3294 = vld [vmem:[%s413 + $0x7d8] sm:$0xff]
        %v3295 = vld [vmem:[%s413 + $0x7e0] sm:$0xff]
        %v3296 = vld [vmem:[%s413 + $0x7e8] sm:$0xff]
        %v3297 = vld [vmem:[%s413 + $0x7f0] sm:$0xff]
        %v3298 = vld [vmem:[%s413 + $0x7f8] sm:$0xff]
        %v3299 = vld [vmem:[%s413 + $0x800] sm:$0xff]
        %v3300 = vld [vmem:[%s413 + $0x808] sm:$0xff]
        %v3301 = vld [vmem:[%s413 + $0x810] sm:$0xff]
        %v3302 = vld [vmem:[%s413 + $0x818] sm:$0xff]
        %v3303 = vld [vmem:[%s413 + $0x820] sm:$0xff]
        %v3304 = vld [vmem:[%s413 + $0x828] sm:$0xff]
        %v3305 = vld [vmem:[%s413 + $0x830] sm:$0xff]
        %v3306 = vld [vmem:[%s413 + $0x838] sm:$0xff]
        %v3307 = vld [vmem:[%s413 + $0x840] sm:$0xff]
        %v3308 = vld [vmem:[%s413 + $0x848] sm:$0xff]
        %v3309 = vld [vmem:[%s413 + $0x850] sm:$0xff]
        %v3310 = vld [vmem:[%s413 + $0x858] sm:$0xff]
        %v3311 = vld [vmem:[%s413 + $0x860] sm:$0xff]
        %v3312 = vld [vmem:[%s413 + $0x868] sm:$0xff]
        %v3313 = vld [vmem:[%s413 + $0x870] sm:$0xff]
        %v3314 = vld [vmem:[%s413 + $0x878] sm:$0xff]
        %v3315 = vld [vmem:[%s413 + $0x880] sm:$0xff]
        %v3316 = vld [vmem:[%s413 + $0x888] sm:$0xff]
        %v3317 = vld [vmem:[%s413 + $0x890] sm:$0xff]
        %v3318 = vld [vmem:[%s413 + $0x898] sm:$0xff]
        %v3319 = vld [vmem:[%s413 + $0x8a0] sm:$0xff]
        %v3320 = vld [vmem:[%s413 + $0x8a8] sm:$0xff]
        %v3321 = vld [vmem:[%s413 + $0x8b0] sm:$0xff]
        %v3322 = vld [vmem:[%s413 + $0x8b8] sm:$0xff]
        %v3323 = vld [vmem:[%s413 + $0x8c0] sm:$0xff]
        %v3324 = vld [vmem:[%s413 + $0x8c8] sm:$0xff]
        %v3325 = vld [vmem:[%s413 + $0x8d0] sm:$0xff]
        %v3326 = vld [vmem:[%s413 + $0x8d8] sm:$0xff]
        %v3327 = vld [vmem:[%s413 + $0x8e0] sm:$0xff]
        %v3328 = vld [vmem:[%s413 + $0x8e8] sm:$0xff]
        %v3329 = vld [vmem:[%s413 + $0x8f0] sm:$0xff]
        %v3330 = vld [vmem:[%s413 + $0x8f8] sm:$0xff]
        %v3331 = vld [vmem:[%s413 + $0x900] sm:$0xff]
        %v3332 = vld [vmem:[%s413 + $0x908] sm:$0xff]
        %v3333 = vld [vmem:[%s413 + $0x910] sm:$0xff]
        %v3334 = vld [vmem:[%s413 + $0x918] sm:$0xff]
        %v3335 = vld [vmem:[%s413 + $0x920] sm:$0xff]
        %v3336 = vld [vmem:[%s413 + $0x928] sm:$0xff]
        %v3337 = vld [vmem:[%s413 + $0x930] sm:$0xff]
        %v3338 = vld [vmem:[%s413 + $0x938] sm:$0xff]
        %v3339 = vld [vmem:[%s413 + $0x940] sm:$0xff]
        %v3340 = vld [vmem:[%s413 + $0x948] sm:$0xff]
        %v3341 = vld [vmem:[%s413 + $0x950] sm:$0xff]
        %v3342 = vld [vmem:[%s413 + $0x958] sm:$0xff]
        %v3343 = vld [vmem:[%s413 + $0x960] sm:$0xff]
        %v3344 = vld [vmem:[%s413 + $0x968] sm:$0xff]
        %v3345 = vld [vmem:[%s413 + $0x970] sm:$0xff]
        %v3346 = vld [vmem:[%s413 + $0x978] sm:$0xff]
        %v3347 = vld [vmem:[%s413 + $0x980] sm:$0xff]
        %v3348 = vld [vmem:[%s413 + $0x988] sm:$0xff]
        %v3349 = vld [vmem:[%s413 + $0x990] sm:$0xff]
        %v3350 = vld [vmem:[%s413 + $0x998] sm:$0xff]
        %v3351 = vld [vmem:[%s413 + $0x9a0] sm:$0xff]
        %v3352 = vld [vmem:[%s413 + $0x9a8] sm:$0xff]
        %v3353 = vld [vmem:[%s413 + $0x9b0] sm:$0xff]
        %v3354 = vld [vmem:[%s413 + $0x9b8] sm:$0xff]
        %v3355 = vld [vmem:[%s413 + $0x9c0] sm:$0xff]
        %v3356 = vld [vmem:[%s413 + $0x9c8] sm:$0xff]
        %v3357 = vld [vmem:[%s413 + $0x9d0] sm:$0xff]
        %v3358 = vld [vmem:[%s413 + $0x9d8] sm:$0xff]
        %v3359 = vld [vmem:[%s413 + $0x9e0] sm:$0xff]
        %v3360 = vld [vmem:[%s413 + $0x9e8] sm:$0xff]
        %v3361 = vld [vmem:[%s413 + $0x9f0] sm:$0xff]
        %v3362 = vld [vmem:[%s413 + $0x9f8] sm:$0xff]
        %v3363 = vld [vmem:[%s413 + $0xa00] sm:$0xff]
        %v3364 = vld [vmem:[%s413 + $0xa08] sm:$0xff]
        %v3365 = vld [vmem:[%s413 + $0xa10] sm:$0xff]
        %v3366 = vld [vmem:[%s413 + $0xa18] sm:$0xff]
        %v3367 = vld [vmem:[%s413 + $0xa20] sm:$0xff]
        %v3368 = vld [vmem:[%s413 + $0xa28] sm:$0xff]
        %v3369 = vld [vmem:[%s413 + $0xa30] sm:$0xff]
        %v3370 = vld [vmem:[%s413 + $0xa38] sm:$0xff]
        %v3371 = vld [vmem:[%s413 + $0xa40] sm:$0xff]
        %v3372 = vld [vmem:[%s413 + $0xa48] sm:$0xff]
        %v3373 = vld [vmem:[%s413 + $0xa50] sm:$0xff]
        %v3374 = vld [vmem:[%s413 + $0xa58] sm:$0xff]
        %v3375 = vld [vmem:[%s413 + $0xa60] sm:$0xff]
        %v3376 = vld [vmem:[%s413 + $0xa68] sm:$0xff]
        %v3377 = vld [vmem:[%s413 + $0xa70] sm:$0xff]
        %v3378 = vld [vmem:[%s413 + $0xa78] sm:$0xff]
        %v3379 = vld [vmem:[%s413 + $0xa80] sm:$0xff]
        %v3380 = vld [vmem:[%s413 + $0xa88] sm:$0xff]
        %v3381 = vld [vmem:[%s413 + $0xa90] sm:$0xff]
        %v3382 = vld [vmem:[%s413 + $0xa98] sm:$0xff]
        %v3383 = vld [vmem:[%s413 + $0xaa0] sm:$0xff]
        %v3384 = vld [vmem:[%s413 + $0xaa8] sm:$0xff]
        %v3385 = vld [vmem:[%s413 + $0xab0] sm:$0xff]
        %v3386 = vld [vmem:[%s413 + $0xab8] sm:$0xff]
        %v3387 = vld [vmem:[%s413 + $0xac0] sm:$0xff]
        %v3388 = vld [vmem:[%s413 + $0xac8] sm:$0xff]
        %v3389 = vld [vmem:[%s413 + $0xad0] sm:$0xff]
        %v3390 = vld [vmem:[%s413 + $0xad8] sm:$0xff]
        %v3391 = vld [vmem:[%s413 + $0xae0] sm:$0xff]
        %v3392 = vld [vmem:[%s413 + $0xae8] sm:$0xff]
        %v3393 = vld [vmem:[%s413 + $0xaf0] sm:$0xff]
        %v3394 = vld [vmem:[%s413 + $0xaf8] sm:$0xff]
        %v3395 = vld [vmem:[%s413 + $0xb00] sm:$0xff]
        %v3396 = vld [vmem:[%s413 + $0xb08] sm:$0xff]
        %v3397 = vld [vmem:[%s413 + $0xb10] sm:$0xff]
        %v3398 = vld [vmem:[%s413 + $0xb18] sm:$0xff]
        %v3399 = vld [vmem:[%s413 + $0xb20] sm:$0xff]
        %v3400 = vld [vmem:[%s413 + $0xb28] sm:$0xff]
        %v3401 = vld [vmem:[%s413 + $0xb30] sm:$0xff]
        %v3402 = vld [vmem:[%s413 + $0xb38] sm:$0xff]
        %v3403 = vld [vmem:[%s413 + $0xb40] sm:$0xff]
        %v3404 = vld [vmem:[%s413 + $0xb48] sm:$0xff]
        %v3405 = vld [vmem:[%s413 + $0xb50] sm:$0xff]
        %v3406 = vld [vmem:[%s413 + $0xb58] sm:$0xff]
        %v3407 = vld [vmem:[%s413 + $0xb60] sm:$0xff]
        %v3408 = vld [vmem:[%s413 + $0xb68] sm:$0xff]
        %v3409 = vld [vmem:[%s413 + $0xb70] sm:$0xff]
        %v3410 = vld [vmem:[%s413 + $0xb78] sm:$0xff]
        %v3411 = vld [vmem:[%s413 + $0xb80] sm:$0xff]
        %v3412 = vld [vmem:[%s413 + $0xb88] sm:$0xff]
        %v3413 = vld [vmem:[%s413 + $0xb90] sm:$0xff]
        %v3414 = vld [vmem:[%s413 + $0xb98] sm:$0xff]
        %v3415 = vld [vmem:[%s413 + $0xba0] sm:$0xff]
        %v3416 = vld [vmem:[%s413 + $0xba8] sm:$0xff]
        %v3417 = vld [vmem:[%s413 + $0xbb0] sm:$0xff]
        %v3418 = vld [vmem:[%s413 + $0xbb8] sm:$0xff]
        %v3419 = vld [vmem:[%s413 + $0xbc0] sm:$0xff]
        %v3420 = vld [vmem:[%s413 + $0xbc8] sm:$0xff]
        %v3421 = vld [vmem:[%s413 + $0xbd0] sm:$0xff]
        %v3422 = vld [vmem:[%s413 + $0xbd8] sm:$0xff]
        %v3423 = vld [vmem:[%s413 + $0xbe0] sm:$0xff]
        %v3424 = vld [vmem:[%s413 + $0xbe8] sm:$0xff]
        %v3425 = vld [vmem:[%s413 + $0xbf0] sm:$0xff]
        %v3426 = vld [vmem:[%s413 + $0xbf8] sm:$0xff]
        %v3427 = vld [vmem:[%s413 + $0xc00] sm:$0xff]
        %v3428 = vld [vmem:[%s413 + $0xc08] sm:$0xff]
        %v3429 = vld [vmem:[%s413 + $0xc10] sm:$0xff]
        %v3430 = vld [vmem:[%s413 + $0xc18] sm:$0xff]
        %v3431 = vld [vmem:[%s413 + $0xc20] sm:$0xff]
        %v3432 = vld [vmem:[%s413 + $0xc28] sm:$0xff]
        %v3433 = vld [vmem:[%s413 + $0xc30] sm:$0xff]
        %v3434 = vld [vmem:[%s413 + $0xc38] sm:$0xff]
        %v3435 = vld [vmem:[%s413 + $0xc40] sm:$0xff]
        %v3436 = vld [vmem:[%s413 + $0xc48] sm:$0xff]
        %v3437 = vld [vmem:[%s413 + $0xc50] sm:$0xff]
        %v3438 = vld [vmem:[%s413 + $0xc58] sm:$0xff]
        %v3439 = vld [vmem:[%s413 + $0xc60] sm:$0xff]
        %v3440 = vld [vmem:[%s413 + $0xc68] sm:$0xff]
        %v3441 = vld [vmem:[%s413 + $0xc70] sm:$0xff]
        %v3442 = vld [vmem:[%s413 + $0xc78] sm:$0xff]
        %v3443 = vld [vmem:[%s413 + $0xc80] sm:$0xff]
        %v3444 = vld [vmem:[%s413 + $0xc88] sm:$0xff]
        %v3445 = vld [vmem:[%s413 + $0xc90] sm:$0xff]
        %v3446 = vld [vmem:[%s413 + $0xc98] sm:$0xff]
        %v3447 = vld [vmem:[%s413 + $0xca0] sm:$0xff]
        %v3448 = vld [vmem:[%s413 + $0xca8] sm:$0xff]
        %v3449 = vld [vmem:[%s413 + $0xcb0] sm:$0xff]
        %v3450 = vld [vmem:[%s413 + $0xcb8] sm:$0xff]
        %v3451 = vld [vmem:[%s413 + $0xcc0] sm:$0xff]
        %v3452 = vld [vmem:[%s413 + $0xcc8] sm:$0xff]
        %v3453 = vld [vmem:[%s413 + $0xcd0] sm:$0xff]
        %v3454 = vld [vmem:[%s413 + $0xcd8] sm:$0xff]
        %v3455 = vld [vmem:[%s413 + $0xce0] sm:$0xff]
        %v3456 = vld [vmem:[%s413 + $0xce8] sm:$0xff]
        %v3457 = vld [vmem:[%s413 + $0xcf0] sm:$0xff]
        %v3458 = vld [vmem:[%s413 + $0xcf8] sm:$0xff]
        %v3459 = vld [vmem:[%s413 + $0xd00] sm:$0xff]
        %v3460 = vld [vmem:[%s413 + $0xd08] sm:$0xff]
        %v3461 = vld [vmem:[%s413 + $0xd10] sm:$0xff]
        %v3462 = vld [vmem:[%s413 + $0xd18] sm:$0xff]
        %v3463 = vld [vmem:[%s413 + $0xd20] sm:$0xff]
        %v3464 = vld [vmem:[%s413 + $0xd28] sm:$0xff]
        %v3465 = vld [vmem:[%s413 + $0xd30] sm:$0xff]
        %v3466 = vld [vmem:[%s413 + $0xd38] sm:$0xff]
        %v3467 = vld [vmem:[%s413 + $0xd40] sm:$0xff]
        %v3468 = vld [vmem:[%s413 + $0xd48] sm:$0xff]
        %v3469 = vld [vmem:[%s413 + $0xd50] sm:$0xff]
        %v3470 = vld [vmem:[%s413 + $0xd58] sm:$0xff]
        %v3471 = vld [vmem:[%s413 + $0xd60] sm:$0xff]
        %v3472 = vld [vmem:[%s413 + $0xd68] sm:$0xff]
        %v3473 = vld [vmem:[%s413 + $0xd70] sm:$0xff]
        %v3474 = vld [vmem:[%s413 + $0xd78] sm:$0xff]
        %v3475 = vld [vmem:[%s413 + $0xd80] sm:$0xff]
        %v3476 = vld [vmem:[%s413 + $0xd88] sm:$0xff]
        %v3477 = vld [vmem:[%s413 + $0xd90] sm:$0xff]
        %v3478 = vld [vmem:[%s413 + $0xd98] sm:$0xff]
        %v3479 = vld [vmem:[%s413 + $0xda0] sm:$0xff]
        %v3480 = vld [vmem:[%s413 + $0xda8] sm:$0xff]
        %v3481 = vld [vmem:[%s413 + $0xdb0] sm:$0xff]
        %v3482 = vld [vmem:[%s413 + $0xdb8] sm:$0xff]
        %v3483 = vld [vmem:[%s413 + $0xdc0] sm:$0xff]
        %v3484 = vld [vmem:[%s413 + $0xdc8] sm:$0xff]
        %v3485 = vld [vmem:[%s413 + $0xdd0] sm:$0xff]
        %v3486 = vld [vmem:[%s413 + $0xdd8] sm:$0xff]
        %v3487 = vld [vmem:[%s413 + $0xde0] sm:$0xff]
        %v3488 = vld [vmem:[%s413 + $0xde8] sm:$0xff]
        %v3489 = vld [vmem:[%s413 + $0xdf0] sm:$0xff]
        %v3490 = vld [vmem:[%s413 + $0xdf8] sm:$0xff]
        %v3491 = vld [vmem:[%s413 + $0xe00] sm:$0xff]
        %v3492 = vld [vmem:[%s413 + $0xe08] sm:$0xff]
        %v3493 = vld [vmem:[%s413 + $0xe10] sm:$0xff]
        %v3494 = vld [vmem:[%s413 + $0xe18] sm:$0xff]
        %v3495 = vld [vmem:[%s413 + $0xe20] sm:$0xff]
        %v3496 = vld [vmem:[%s413 + $0xe28] sm:$0xff]
        %v3497 = vld [vmem:[%s413 + $0xe30] sm:$0xff]
        %v3498 = vld [vmem:[%s413 + $0xe38] sm:$0xff]
        %v3499 = vld [vmem:[%s413 + $0xe40] sm:$0xff]
        %v3500 = vld [vmem:[%s413 + $0xe48] sm:$0xff]
        %v3501 = vld [vmem:[%s413 + $0xe50] sm:$0xff]
        %v3502 = vld [vmem:[%s413 + $0xe58] sm:$0xff]
        %v3503 = vld [vmem:[%s413 + $0xe60] sm:$0xff]
        %v3504 = vld [vmem:[%s413 + $0xe68] sm:$0xff]
        %v3505 = vld [vmem:[%s413 + $0xe70] sm:$0xff]
        %v3506 = vld [vmem:[%s413 + $0xe78] sm:$0xff]
        %v3507 = vld [vmem:[%s413 + $0xe80] sm:$0xff]
        %v3508 = vld [vmem:[%s413 + $0xe88] sm:$0xff]
        %v3509 = vld [vmem:[%s413 + $0xe90] sm:$0xff]
        %v3510 = vld [vmem:[%s413 + $0xe98] sm:$0xff]
        %v3511 = vld [vmem:[%s413 + $0xea0] sm:$0xff]
        %v3512 = vld [vmem:[%s413 + $0xea8] sm:$0xff]
        %v3513 = vld [vmem:[%s413 + $0xeb0] sm:$0xff]
        %v3514 = vld [vmem:[%s413 + $0xeb8] sm:$0xff]
        %v3515 = vld [vmem:[%s413 + $0xec0] sm:$0xff]
        %v3516 = vld [vmem:[%s413 + $0xec8] sm:$0xff]
        %v3517 = vld [vmem:[%s413 + $0xed0] sm:$0xff]
        %v3518 = vld [vmem:[%s413 + $0xed8] sm:$0xff]
        %v3519 = vld [vmem:[%s413 + $0xee0] sm:$0xff]
        %v3520 = vld [vmem:[%s413 + $0xee8] sm:$0xff]
        %v3521 = vld [vmem:[%s413 + $0xef0] sm:$0xff]
        %v3522 = vld [vmem:[%s413 + $0xef8] sm:$0xff]
        %v3523 = vld [vmem:[%s413 + $0xf00] sm:$0xff]
        %v3524 = vld [vmem:[%s413 + $0xf08] sm:$0xff]
        %v3525 = vld [vmem:[%s413 + $0xf10] sm:$0xff]
        %v3526 = vld [vmem:[%s413 + $0xf18] sm:$0xff]
        %v3527 = vld [vmem:[%s413 + $0xf20] sm:$0xff]
        %v3528 = vld [vmem:[%s413 + $0xf28] sm:$0xff]
        %v3529 = vld [vmem:[%s413 + $0xf30] sm:$0xff]
        %v3530 = vld [vmem:[%s413 + $0xf38] sm:$0xff]
        %v3531 = vld [vmem:[%s413 + $0xf40] sm:$0xff]
        %v3532 = vld [vmem:[%s413 + $0xf48] sm:$0xff]
        %v3533 = vld [vmem:[%s413 + $0xf50] sm:$0xff]
        %v3534 = vld [vmem:[%s413 + $0xf58] sm:$0xff]
        %v3535 = vld [vmem:[%s413 + $0xf60] sm:$0xff]
        %v3536 = vld [vmem:[%s413 + $0xf68] sm:$0xff]
        %v3537 = vld [vmem:[%s413 + $0xf70] sm:$0xff]
        %v3538 = vld [vmem:[%s413 + $0xf78] sm:$0xff]
        %v3539 = vld [vmem:[%s413 + $0xf80] sm:$0xff]
        %v3540 = vld [vmem:[%s413 + $0xf88] sm:$0xff]
        %v3541 = vld [vmem:[%s413 + $0xf90] sm:$0xff]
        %v3542 = vld [vmem:[%s413 + $0xf98] sm:$0xff]
        %v3543 = vld [vmem:[%s413 + $0xfa0] sm:$0xff]
        %v3544 = vld [vmem:[%s413 + $0xfa8] sm:$0xff]
        %v3545 = vld [vmem:[%s413 + $0xfb0] sm:$0xff]
        %v3546 = vld [vmem:[%s413 + $0xfb8] sm:$0xff]
        %v3547 = vld [vmem:[%s413 + $0xfc0] sm:$0xff]
        %v3548 = vld [vmem:[%s413 + $0xfc8] sm:$0xff]
        %v3549 = vld [vmem:[%s413 + $0xfd0] sm:$0xff]
        %v3550 = vld [vmem:[%s413 + $0xfd8] sm:$0xff]
        %v3551 = vld [vmem:[%s413 + $0xfe0] sm:$0xff]
        %v3552 = vld [vmem:[%s413 + $0xfe8] sm:$0xff]
        %v3553 = vld [vmem:[%s413 + $0xff0] sm:$0xff]
        %v3554 = vld [vmem:[%s413 + $0xff8] sm:$0xff]
        %v3555 = vld [vmem:[%s422] sm:$0xff]
        %v3557 = vlaneseq
        %v3558 = vshrl.u32 %v3557, 7
        %v3559 = vsub.s32 0, %v3558
        %v3560 = vrot.slane %v3555, %v3559
        %v3561 = vlaneseq
        %v3562 = vshrl.u32 %v3561, 7
        %v3563 = vsub.s32 1, %v3562
        %v3564 = vrot.slane %v3555, %v3563
        %v3565 = vlaneseq
        %v3566 = vshrl.u32 %v3565, 7
        %v3567 = vsub.s32 2, %v3566
        %v3568 = vrot.slane %v3555, %v3567
        %v3569 = vlaneseq
        %v3570 = vshrl.u32 %v3569, 7
        %v3571 = vsub.s32 3, %v3570
        %v3572 = vrot.slane %v3555, %v3571
        %v3573 = vlaneseq
        %v3574 = vshrl.u32 %v3573, 7
        %v3575 = vsub.s32 4, %v3574
        %v3576 = vrot.slane %v3555, %v3575
        %v3577 = vlaneseq
        %v3578 = vshrl.u32 %v3577, 7
        %v3579 = vsub.s32 5, %v3578
        %v3580 = vrot.slane %v3555, %v3579
        %v3581 = vlaneseq
        %v3582 = vshrl.u32 %v3581, 7
        %v3583 = vsub.s32 6, %v3582
        %v3584 = vrot.slane %v3555, %v3583
        %v3585 = vlaneseq
        %v3586 = vshrl.u32 %v3585, 7
        %v3587 = vsub.s32 7, %v3586
        %v3588 = vrot.slane %v3555, %v3587
        %v4109 = vunpack.c.l.b16 %v3043
        %v4110 = vunpack.c.h.b16 %v3043
        %v4111 = vunpack.c.l.b16 %v3044
        %v4112 = vunpack.c.h.b16 %v3044
        %v4113 = vunpack.c.l.b16 %v3045
        %v4114 = vunpack.c.h.b16 %v3045
        %v4115 = vunpack.c.l.b16 %v3046
        %v4116 = vunpack.c.h.b16 %v3046
        %v4117 = vunpack.c.l.b16 %v3047
        %v4118 = vunpack.c.h.b16 %v3047
        %v4119 = vunpack.c.l.b16 %v3048
        %v4120 = vunpack.c.h.b16 %v3048
        %v4121 = vunpack.c.l.b16 %v3049
        %v4122 = vunpack.c.h.b16 %v3049
        %v4123 = vunpack.c.l.b16 %v3050
        %v4124 = vunpack.c.h.b16 %v3050
        %v4125 = vunpack.c.l.b16 %v3051
        %v4126 = vunpack.c.h.b16 %v3051
        %v4127 = vunpack.c.l.b16 %v3052
        %v4128 = vunpack.c.h.b16 %v3052
        %v4129 = vunpack.c.l.b16 %v3053
        %v4130 = vunpack.c.h.b16 %v3053
        %v4131 = vunpack.c.l.b16 %v3054
        %v4132 = vunpack.c.h.b16 %v3054
        %v4133 = vunpack.c.l.b16 %v3055
        %v4134 = vunpack.c.h.b16 %v3055
        %v4135 = vunpack.c.l.b16 %v3056
        %v4136 = vunpack.c.h.b16 %v3056
        %v4137 = vunpack.c.l.b16 %v3057
        %v4138 = vunpack.c.h.b16 %v3057
        %v4139 = vunpack.c.l.b16 %v3058
        %v4140 = vunpack.c.h.b16 %v3058
        %v4141 = vunpack.c.l.b16 %v3059
        %v4142 = vunpack.c.h.b16 %v3059
        %v4143 = vunpack.c.l.b16 %v3060
        %v4144 = vunpack.c.h.b16 %v3060
        %v4145 = vunpack.c.l.b16 %v3061
        %v4146 = vunpack.c.h.b16 %v3061
        %v4147 = vunpack.c.l.b16 %v3062
        %v4148 = vunpack.c.h.b16 %v3062
        %v4149 = vunpack.c.l.b16 %v3063
        %v4150 = vunpack.c.h.b16 %v3063
        %v4151 = vunpack.c.l.b16 %v3064
        %v4152 = vunpack.c.h.b16 %v3064
        %v4153 = vunpack.c.l.b16 %v3065
        %v4154 = vunpack.c.h.b16 %v3065
        %v4155 = vunpack.c.l.b16 %v3066
        %v4156 = vunpack.c.h.b16 %v3066
        %v4157 = vunpack.c.l.b16 %v3067
        %v4158 = vunpack.c.h.b16 %v3067
        %v4159 = vunpack.c.l.b16 %v3068
        %v4160 = vunpack.c.h.b16 %v3068
        %v4161 = vunpack.c.l.b16 %v3069
        %v4162 = vunpack.c.h.b16 %v3069
        %v4163 = vunpack.c.l.b16 %v3070
        %v4164 = vunpack.c.h.b16 %v3070
        %v4165 = vunpack.c.l.b16 %v3071
        %v4166 = vunpack.c.h.b16 %v3071
        %v4167 = vunpack.c.l.b16 %v3072
        %v4168 = vunpack.c.h.b16 %v3072
        %v4169 = vunpack.c.l.b16 %v3073
        %v4170 = vunpack.c.h.b16 %v3073
        %v4171 = vunpack.c.l.b16 %v3074
        %v4172 = vunpack.c.h.b16 %v3074
        %v4173 = vunpack.c.l.b16 %v3075
        %v4174 = vunpack.c.h.b16 %v3075
        %v4175 = vunpack.c.l.b16 %v3076
        %v4176 = vunpack.c.h.b16 %v3076
        %v4177 = vunpack.c.l.b16 %v3077
        %v4178 = vunpack.c.h.b16 %v3077
        %v4179 = vunpack.c.l.b16 %v3078
        %v4180 = vunpack.c.h.b16 %v3078
        %v4181 = vunpack.c.l.b16 %v3079
        %v4182 = vunpack.c.h.b16 %v3079
        %v4183 = vunpack.c.l.b16 %v3080
        %v4184 = vunpack.c.h.b16 %v3080
        %v4185 = vunpack.c.l.b16 %v3081
        %v4186 = vunpack.c.h.b16 %v3081
        %v4187 = vunpack.c.l.b16 %v3082
        %v4188 = vunpack.c.h.b16 %v3082
        %v4189 = vunpack.c.l.b16 %v3083
        %v4190 = vunpack.c.h.b16 %v3083
        %v4191 = vunpack.c.l.b16 %v3084
        %v4192 = vunpack.c.h.b16 %v3084
        %v4193 = vunpack.c.l.b16 %v3085
        %v4194 = vunpack.c.h.b16 %v3085
        %v4195 = vunpack.c.l.b16 %v3086
        %v4196 = vunpack.c.h.b16 %v3086
        %v4197 = vunpack.c.l.b16 %v3087
        %v4198 = vunpack.c.h.b16 %v3087
        %v4199 = vunpack.c.l.b16 %v3088
        %v4200 = vunpack.c.h.b16 %v3088
        %v4201 = vunpack.c.l.b16 %v3089
        %v4202 = vunpack.c.h.b16 %v3089
        %v4203 = vunpack.c.l.b16 %v3090
        %v4204 = vunpack.c.h.b16 %v3090
        %v4205 = vunpack.c.l.b16 %v3091
        %v4206 = vunpack.c.h.b16 %v3091
        %v4207 = vunpack.c.l.b16 %v3092
        %v4208 = vunpack.c.h.b16 %v3092
        %v4209 = vunpack.c.l.b16 %v3093
        %v4210 = vunpack.c.h.b16 %v3093
        %v4211 = vunpack.c.l.b16 %v3094
        %v4212 = vunpack.c.h.b16 %v3094
        %v4213 = vunpack.c.l.b16 %v3095
        %v4214 = vunpack.c.h.b16 %v3095
        %v4215 = vunpack.c.l.b16 %v3096
        %v4216 = vunpack.c.h.b16 %v3096
        %v4217 = vunpack.c.l.b16 %v3097
        %v4218 = vunpack.c.h.b16 %v3097
        %v4219 = vunpack.c.l.b16 %v3098
        %v4220 = vunpack.c.h.b16 %v3098
        %v4221 = vunpack.c.l.b16 %v3099
        %v4222 = vunpack.c.h.b16 %v3099
        %v4223 = vunpack.c.l.b16 %v3100
        %v4224 = vunpack.c.h.b16 %v3100
        %v4225 = vunpack.c.l.b16 %v3101
        %v4226 = vunpack.c.h.b16 %v3101
        %v4227 = vunpack.c.l.b16 %v3102
        %v4228 = vunpack.c.h.b16 %v3102
        %v4229 = vunpack.c.l.b16 %v3103
        %v4230 = vunpack.c.h.b16 %v3103
        %v4231 = vunpack.c.l.b16 %v3104
        %v4232 = vunpack.c.h.b16 %v3104
        %v4233 = vunpack.c.l.b16 %v3105
        %v4234 = vunpack.c.h.b16 %v3105
        %v4235 = vunpack.c.l.b16 %v3106
        %v4236 = vunpack.c.h.b16 %v3106
        %v4237 = vunpack.c.l.b16 %v3107
        %v4238 = vunpack.c.h.b16 %v3107
        %v4239 = vunpack.c.l.b16 %v3108
        %v4240 = vunpack.c.h.b16 %v3108
        %v4241 = vunpack.c.l.b16 %v3109
        %v4242 = vunpack.c.h.b16 %v3109
        %v4243 = vunpack.c.l.b16 %v3110
        %v4244 = vunpack.c.h.b16 %v3110
        %v4245 = vunpack.c.l.b16 %v3111
        %v4246 = vunpack.c.h.b16 %v3111
        %v4247 = vunpack.c.l.b16 %v3112
        %v4248 = vunpack.c.h.b16 %v3112
        %v4249 = vunpack.c.l.b16 %v3113
        %v4250 = vunpack.c.h.b16 %v3113
        %v4251 = vunpack.c.l.b16 %v3114
        %v4252 = vunpack.c.h.b16 %v3114
        %v4253 = vunpack.c.l.b16 %v3115
        %v4254 = vunpack.c.h.b16 %v3115
        %v4255 = vunpack.c.l.b16 %v3116
        %v4256 = vunpack.c.h.b16 %v3116
        %v4257 = vunpack.c.l.b16 %v3117
        %v4258 = vunpack.c.h.b16 %v3117
        %v4259 = vunpack.c.l.b16 %v3118
        %v4260 = vunpack.c.h.b16 %v3118
        %v4261 = vunpack.c.l.b16 %v3119
        %v4262 = vunpack.c.h.b16 %v3119
        %v4263 = vunpack.c.l.b16 %v3120
        %v4264 = vunpack.c.h.b16 %v3120
        %v4265 = vunpack.c.l.b16 %v3121
        %v4266 = vunpack.c.h.b16 %v3121
        %v4267 = vunpack.c.l.b16 %v3122
        %v4268 = vunpack.c.h.b16 %v3122
        %v4269 = vunpack.c.l.b16 %v3123
        %v4270 = vunpack.c.h.b16 %v3123
        %v4271 = vunpack.c.l.b16 %v3124
        %v4272 = vunpack.c.h.b16 %v3124
        %v4273 = vunpack.c.l.b16 %v3125
        %v4274 = vunpack.c.h.b16 %v3125
        %v4275 = vunpack.c.l.b16 %v3126
        %v4276 = vunpack.c.h.b16 %v3126
        %v4277 = vunpack.c.l.b16 %v3127
        %v4278 = vunpack.c.h.b16 %v3127
        %v4279 = vunpack.c.l.b16 %v3128
        %v4280 = vunpack.c.h.b16 %v3128
        %v4281 = vunpack.c.l.b16 %v3129
        %v4282 = vunpack.c.h.b16 %v3129
        %v4283 = vunpack.c.l.b16 %v3130
        %v4284 = vunpack.c.h.b16 %v3130
        %v4285 = vunpack.c.l.b16 %v3131
        %v4286 = vunpack.c.h.b16 %v3131
        %v4287 = vunpack.c.l.b16 %v3132
        %v4288 = vunpack.c.h.b16 %v3132
        %v4289 = vunpack.c.l.b16 %v3133
        %v4290 = vunpack.c.h.b16 %v3133
        %v4291 = vunpack.c.l.b16 %v3134
        %v4292 = vunpack.c.h.b16 %v3134
        %v4293 = vunpack.c.l.b16 %v3135
        %v4294 = vunpack.c.h.b16 %v3135
        %v4295 = vunpack.c.l.b16 %v3136
        %v4296 = vunpack.c.h.b16 %v3136
        %v4297 = vunpack.c.l.b16 %v3137
        %v4298 = vunpack.c.h.b16 %v3137
        %v4299 = vunpack.c.l.b16 %v3138
        %v4300 = vunpack.c.h.b16 %v3138
        %v4301 = vunpack.c.l.b16 %v3139
        %v4302 = vunpack.c.h.b16 %v3139
        %v4303 = vunpack.c.l.b16 %v3140
        %v4304 = vunpack.c.h.b16 %v3140
        %v4305 = vunpack.c.l.b16 %v3141
        %v4306 = vunpack.c.h.b16 %v3141
        %v4307 = vunpack.c.l.b16 %v3142
        %v4308 = vunpack.c.h.b16 %v3142
        %v4309 = vunpack.c.l.b16 %v3143
        %v4310 = vunpack.c.h.b16 %v3143
        %v4311 = vunpack.c.l.b16 %v3144
        %v4312 = vunpack.c.h.b16 %v3144
        %v4313 = vunpack.c.l.b16 %v3145
        %v4314 = vunpack.c.h.b16 %v3145
        %v4315 = vunpack.c.l.b16 %v3146
        %v4316 = vunpack.c.h.b16 %v3146
        %v4317 = vunpack.c.l.b16 %v3147
        %v4318 = vunpack.c.h.b16 %v3147
        %v4319 = vunpack.c.l.b16 %v3148
        %v4320 = vunpack.c.h.b16 %v3148
        %v4321 = vunpack.c.l.b16 %v3149
        %v4322 = vunpack.c.h.b16 %v3149
        %v4323 = vunpack.c.l.b16 %v3150
        %v4324 = vunpack.c.h.b16 %v3150
        %v4325 = vunpack.c.l.b16 %v3151
        %v4326 = vunpack.c.h.b16 %v3151
        %v4327 = vunpack.c.l.b16 %v3152
        %v4328 = vunpack.c.h.b16 %v3152
        %v4329 = vunpack.c.l.b16 %v3153
        %v4330 = vunpack.c.h.b16 %v3153
        %v4331 = vunpack.c.l.b16 %v3154
        %v4332 = vunpack.c.h.b16 %v3154
        %v4333 = vunpack.c.l.b16 %v3155
        %v4334 = vunpack.c.h.b16 %v3155
        %v4335 = vunpack.c.l.b16 %v3156
        %v4336 = vunpack.c.h.b16 %v3156
        %v4337 = vunpack.c.l.b16 %v3157
        %v4338 = vunpack.c.h.b16 %v3157
        %v4339 = vunpack.c.l.b16 %v3158
        %v4340 = vunpack.c.h.b16 %v3158
        %v4341 = vunpack.c.l.b16 %v3159
        %v4342 = vunpack.c.h.b16 %v3159
        %v4343 = vunpack.c.l.b16 %v3160
        %v4344 = vunpack.c.h.b16 %v3160
        %v4345 = vunpack.c.l.b16 %v3161
        %v4346 = vunpack.c.h.b16 %v3161
        %v4347 = vunpack.c.l.b16 %v3162
        %v4348 = vunpack.c.h.b16 %v3162
        %v4349 = vunpack.c.l.b16 %v3163
        %v4350 = vunpack.c.h.b16 %v3163
        %v4351 = vunpack.c.l.b16 %v3164
        %v4352 = vunpack.c.h.b16 %v3164
        %v4353 = vunpack.c.l.b16 %v3165
        %v4354 = vunpack.c.h.b16 %v3165
        %v4355 = vunpack.c.l.b16 %v3166
        %v4356 = vunpack.c.h.b16 %v3166
        %v4357 = vunpack.c.l.b16 %v3167
        %v4358 = vunpack.c.h.b16 %v3167
        %v4359 = vunpack.c.l.b16 %v3168
        %v4360 = vunpack.c.h.b16 %v3168
        %v4361 = vunpack.c.l.b16 %v3169
        %v4362 = vunpack.c.h.b16 %v3169
        %v4363 = vunpack.c.l.b16 %v3170
        %v4364 = vunpack.c.h.b16 %v3170
        %v4365 = vunpack.c.l.b16 %v3171
        %v4366 = vunpack.c.h.b16 %v3171
        %v4367 = vunpack.c.l.b16 %v3172
        %v4368 = vunpack.c.h.b16 %v3172
        %v4369 = vunpack.c.l.b16 %v3173
        %v4370 = vunpack.c.h.b16 %v3173
        %v4371 = vunpack.c.l.b16 %v3174
        %v4372 = vunpack.c.h.b16 %v3174
        %v4373 = vunpack.c.l.b16 %v3175
        %v4374 = vunpack.c.h.b16 %v3175
        %v4375 = vunpack.c.l.b16 %v3176
        %v4376 = vunpack.c.h.b16 %v3176
        %v4377 = vunpack.c.l.b16 %v3177
        %v4378 = vunpack.c.h.b16 %v3177
        %v4379 = vunpack.c.l.b16 %v3178
        %v4380 = vunpack.c.h.b16 %v3178
        %v4381 = vunpack.c.l.b16 %v3179
        %v4382 = vunpack.c.h.b16 %v3179
        %v4383 = vunpack.c.l.b16 %v3180
        %v4384 = vunpack.c.h.b16 %v3180
        %v4385 = vunpack.c.l.b16 %v3181
        %v4386 = vunpack.c.h.b16 %v3181
        %v4387 = vunpack.c.l.b16 %v3182
        %v4388 = vunpack.c.h.b16 %v3182
        %v4389 = vunpack.c.l.b16 %v3183
        %v4390 = vunpack.c.h.b16 %v3183
        %v4391 = vunpack.c.l.b16 %v3184
        %v4392 = vunpack.c.h.b16 %v3184
        %v4393 = vunpack.c.l.b16 %v3185
        %v4394 = vunpack.c.h.b16 %v3185
        %v4395 = vunpack.c.l.b16 %v3186
        %v4396 = vunpack.c.h.b16 %v3186
        %v4397 = vunpack.c.l.b16 %v3187
        %v4398 = vunpack.c.h.b16 %v3187
        %v4399 = vunpack.c.l.b16 %v3188
        %v4400 = vunpack.c.h.b16 %v3188
        %v4401 = vunpack.c.l.b16 %v3189
        %v4402 = vunpack.c.h.b16 %v3189
        %v4403 = vunpack.c.l.b16 %v3190
        %v4404 = vunpack.c.h.b16 %v3190
        %v4405 = vunpack.c.l.b16 %v3191
        %v4406 = vunpack.c.h.b16 %v3191
        %v4407 = vunpack.c.l.b16 %v3192
        %v4408 = vunpack.c.h.b16 %v3192
        %v4409 = vunpack.c.l.b16 %v3193
        %v4410 = vunpack.c.h.b16 %v3193
        %v4411 = vunpack.c.l.b16 %v3194
        %v4412 = vunpack.c.h.b16 %v3194
        %v4413 = vunpack.c.l.b16 %v3195
        %v4414 = vunpack.c.h.b16 %v3195
        %v4415 = vunpack.c.l.b16 %v3196
        %v4416 = vunpack.c.h.b16 %v3196
        %v4417 = vunpack.c.l.b16 %v3197
        %v4418 = vunpack.c.h.b16 %v3197
        %v4419 = vunpack.c.l.b16 %v3198
        %v4420 = vunpack.c.h.b16 %v3198
        %v4421 = vunpack.c.l.b16 %v3199
        %v4422 = vunpack.c.h.b16 %v3199
        %v4423 = vunpack.c.l.b16 %v3200
        %v4424 = vunpack.c.h.b16 %v3200
        %v4425 = vunpack.c.l.b16 %v3201
        %v4426 = vunpack.c.h.b16 %v3201
        %v4427 = vunpack.c.l.b16 %v3202
        %v4428 = vunpack.c.h.b16 %v3202
        %v4429 = vunpack.c.l.b16 %v3203
        %v4430 = vunpack.c.h.b16 %v3203
        %v4431 = vunpack.c.l.b16 %v3204
        %v4432 = vunpack.c.h.b16 %v3204
        %v4433 = vunpack.c.l.b16 %v3205
        %v4434 = vunpack.c.h.b16 %v3205
        %v4435 = vunpack.c.l.b16 %v3206
        %v4436 = vunpack.c.h.b16 %v3206
        %v4437 = vunpack.c.l.b16 %v3207
        %v4438 = vunpack.c.h.b16 %v3207
        %v4439 = vunpack.c.l.b16 %v3208
        %v4440 = vunpack.c.h.b16 %v3208
        %v4441 = vunpack.c.l.b16 %v3209
        %v4442 = vunpack.c.h.b16 %v3209
        %v4443 = vunpack.c.l.b16 %v3210
        %v4444 = vunpack.c.h.b16 %v3210
        %v4445 = vunpack.c.l.b16 %v3211
        %v4446 = vunpack.c.h.b16 %v3211
        %v4447 = vunpack.c.l.b16 %v3212
        %v4448 = vunpack.c.h.b16 %v3212
        %v4449 = vunpack.c.l.b16 %v3213
        %v4450 = vunpack.c.h.b16 %v3213
        %v4451 = vunpack.c.l.b16 %v3214
        %v4452 = vunpack.c.h.b16 %v3214
        %v4453 = vunpack.c.l.b16 %v3215
        %v4454 = vunpack.c.h.b16 %v3215
        %v4455 = vunpack.c.l.b16 %v3216
        %v4456 = vunpack.c.h.b16 %v3216
        %v4457 = vunpack.c.l.b16 %v3217
        %v4458 = vunpack.c.h.b16 %v3217
        %v4459 = vunpack.c.l.b16 %v3218
        %v4460 = vunpack.c.h.b16 %v3218
        %v4461 = vunpack.c.l.b16 %v3219
        %v4462 = vunpack.c.h.b16 %v3219
        %v4463 = vunpack.c.l.b16 %v3220
        %v4464 = vunpack.c.h.b16 %v3220
        %v4465 = vunpack.c.l.b16 %v3221
        %v4466 = vunpack.c.h.b16 %v3221
        %v4467 = vunpack.c.l.b16 %v3222
        %v4468 = vunpack.c.h.b16 %v3222
        %v4469 = vunpack.c.l.b16 %v3223
        %v4470 = vunpack.c.h.b16 %v3223
        %v4471 = vunpack.c.l.b16 %v3224
        %v4472 = vunpack.c.h.b16 %v3224
        %v4473 = vunpack.c.l.b16 %v3225
        %v4474 = vunpack.c.h.b16 %v3225
        %v4475 = vunpack.c.l.b16 %v3226
        %v4476 = vunpack.c.h.b16 %v3226
        %v4477 = vunpack.c.l.b16 %v3227
        %v4478 = vunpack.c.h.b16 %v3227
        %v4479 = vunpack.c.l.b16 %v3228
        %v4480 = vunpack.c.h.b16 %v3228
        %v4481 = vunpack.c.l.b16 %v3229
        %v4482 = vunpack.c.h.b16 %v3229
        %v4483 = vunpack.c.l.b16 %v3230
        %v4484 = vunpack.c.h.b16 %v3230
        %v4485 = vunpack.c.l.b16 %v3231
        %v4486 = vunpack.c.h.b16 %v3231
        %v4487 = vunpack.c.l.b16 %v3232
        %v4488 = vunpack.c.h.b16 %v3232
        %v4489 = vunpack.c.l.b16 %v3233
        %v4490 = vunpack.c.h.b16 %v3233
        %v4491 = vunpack.c.l.b16 %v3234
        %v4492 = vunpack.c.h.b16 %v3234
        %v4493 = vunpack.c.l.b16 %v3235
        %v4494 = vunpack.c.h.b16 %v3235
        %v4495 = vunpack.c.l.b16 %v3236
        %v4496 = vunpack.c.h.b16 %v3236
        %v4497 = vunpack.c.l.b16 %v3237
        %v4498 = vunpack.c.h.b16 %v3237
        %v4499 = vunpack.c.l.b16 %v3238
        %v4500 = vunpack.c.h.b16 %v3238
        %v4501 = vunpack.c.l.b16 %v3239
        %v4502 = vunpack.c.h.b16 %v3239
        %v4503 = vunpack.c.l.b16 %v3240
        %v4504 = vunpack.c.h.b16 %v3240
        %v4505 = vunpack.c.l.b16 %v3241
        %v4506 = vunpack.c.h.b16 %v3241
        %v4507 = vunpack.c.l.b16 %v3242
        %v4508 = vunpack.c.h.b16 %v3242
        %v4509 = vunpack.c.l.b16 %v3243
        %v4510 = vunpack.c.h.b16 %v3243
        %v4511 = vunpack.c.l.b16 %v3244
        %v4512 = vunpack.c.h.b16 %v3244
        %v4513 = vunpack.c.l.b16 %v3245
        %v4514 = vunpack.c.h.b16 %v3245
        %v4515 = vunpack.c.l.b16 %v3246
        %v4516 = vunpack.c.h.b16 %v3246
        %v4517 = vunpack.c.l.b16 %v3247
        %v4518 = vunpack.c.h.b16 %v3247
        %v4519 = vunpack.c.l.b16 %v3248
        %v4520 = vunpack.c.h.b16 %v3248
        %v4521 = vunpack.c.l.b16 %v3249
        %v4522 = vunpack.c.h.b16 %v3249
        %v4523 = vunpack.c.l.b16 %v3250
        %v4524 = vunpack.c.h.b16 %v3250
        %v4525 = vunpack.c.l.b16 %v3251
        %v4526 = vunpack.c.h.b16 %v3251
        %v4527 = vunpack.c.l.b16 %v3252
        %v4528 = vunpack.c.h.b16 %v3252
        %v4529 = vunpack.c.l.b16 %v3253
        %v4530 = vunpack.c.h.b16 %v3253
        %v4531 = vunpack.c.l.b16 %v3254
        %v4532 = vunpack.c.h.b16 %v3254
        %v4533 = vunpack.c.l.b16 %v3255
        %v4534 = vunpack.c.h.b16 %v3255
        %v4535 = vunpack.c.l.b16 %v3256
        %v4536 = vunpack.c.h.b16 %v3256
        %v4537 = vunpack.c.l.b16 %v3257
        %v4538 = vunpack.c.h.b16 %v3257
        %v4539 = vunpack.c.l.b16 %v3258
        %v4540 = vunpack.c.h.b16 %v3258
        %v4541 = vunpack.c.l.b16 %v3259
        %v4542 = vunpack.c.h.b16 %v3259
        %v4543 = vunpack.c.l.b16 %v3260
        %v4544 = vunpack.c.h.b16 %v3260
        %v4545 = vunpack.c.l.b16 %v3261
        %v4546 = vunpack.c.h.b16 %v3261
        %v4547 = vunpack.c.l.b16 %v3262
        %v4548 = vunpack.c.h.b16 %v3262
        %v4549 = vunpack.c.l.b16 %v3263
        %v4550 = vunpack.c.h.b16 %v3263
        %v4551 = vunpack.c.l.b16 %v3264
        %v4552 = vunpack.c.h.b16 %v3264
        %v4553 = vunpack.c.l.b16 %v3265
        %v4554 = vunpack.c.h.b16 %v3265
        %v4555 = vunpack.c.l.b16 %v3266
        %v4556 = vunpack.c.h.b16 %v3266
        %v4557 = vunpack.c.l.b16 %v3267
        %v4558 = vunpack.c.h.b16 %v3267
        %v4559 = vunpack.c.l.b16 %v3268
        %v4560 = vunpack.c.h.b16 %v3268
        %v4561 = vunpack.c.l.b16 %v3269
        %v4562 = vunpack.c.h.b16 %v3269
        %v4563 = vunpack.c.l.b16 %v3270
        %v4564 = vunpack.c.h.b16 %v3270
        %v4565 = vunpack.c.l.b16 %v3271
        %v4566 = vunpack.c.h.b16 %v3271
        %v4567 = vunpack.c.l.b16 %v3272
        %v4568 = vunpack.c.h.b16 %v3272
        %v4569 = vunpack.c.l.b16 %v3273
        %v4570 = vunpack.c.h.b16 %v3273
        %v4571 = vunpack.c.l.b16 %v3274
        %v4572 = vunpack.c.h.b16 %v3274
        %v4573 = vunpack.c.l.b16 %v3275
        %v4574 = vunpack.c.h.b16 %v3275
        %v4575 = vunpack.c.l.b16 %v3276
        %v4576 = vunpack.c.h.b16 %v3276
        %v4577 = vunpack.c.l.b16 %v3277
        %v4578 = vunpack.c.h.b16 %v3277
        %v4579 = vunpack.c.l.b16 %v3278
        %v4580 = vunpack.c.h.b16 %v3278
        %v4581 = vunpack.c.l.b16 %v3279
        %v4582 = vunpack.c.h.b16 %v3279
        %v4583 = vunpack.c.l.b16 %v3280
        %v4584 = vunpack.c.h.b16 %v3280
        %v4585 = vunpack.c.l.b16 %v3281
        %v4586 = vunpack.c.h.b16 %v3281
        %v4587 = vunpack.c.l.b16 %v3282
        %v4588 = vunpack.c.h.b16 %v3282
        %v4589 = vunpack.c.l.b16 %v3283
        %v4590 = vunpack.c.h.b16 %v3283
        %v4591 = vunpack.c.l.b16 %v3284
        %v4592 = vunpack.c.h.b16 %v3284
        %v4593 = vunpack.c.l.b16 %v3285
        %v4594 = vunpack.c.h.b16 %v3285
        %v4595 = vunpack.c.l.b16 %v3286
        %v4596 = vunpack.c.h.b16 %v3286
        %v4597 = vunpack.c.l.b16 %v3287
        %v4598 = vunpack.c.h.b16 %v3287
        %v4599 = vunpack.c.l.b16 %v3288
        %v4600 = vunpack.c.h.b16 %v3288
        %v4601 = vunpack.c.l.b16 %v3289
        %v4602 = vunpack.c.h.b16 %v3289
        %v4603 = vunpack.c.l.b16 %v3290
        %v4604 = vunpack.c.h.b16 %v3290
        %v4605 = vunpack.c.l.b16 %v3291
        %v4606 = vunpack.c.h.b16 %v3291
        %v4607 = vunpack.c.l.b16 %v3292
        %v4608 = vunpack.c.h.b16 %v3292
        %v4609 = vunpack.c.l.b16 %v3293
        %v4610 = vunpack.c.h.b16 %v3293
        %v4611 = vunpack.c.l.b16 %v3294
        %v4612 = vunpack.c.h.b16 %v3294
        %v4613 = vunpack.c.l.b16 %v3295
        %v4614 = vunpack.c.h.b16 %v3295
        %v4615 = vunpack.c.l.b16 %v3296
        %v4616 = vunpack.c.h.b16 %v3296
        %v4617 = vunpack.c.l.b16 %v3297
        %v4618 = vunpack.c.h.b16 %v3297
        %v4619 = vunpack.c.l.b16 %v3298
        %v4620 = vunpack.c.h.b16 %v3298
        %v4621 = vunpack.c.l.b16 %v3299
        %v4622 = vunpack.c.h.b16 %v3299
        %v4623 = vunpack.c.l.b16 %v3300
        %v4624 = vunpack.c.h.b16 %v3300
        %v4625 = vunpack.c.l.b16 %v3301
        %v4626 = vunpack.c.h.b16 %v3301
        %v4627 = vunpack.c.l.b16 %v3302
        %v4628 = vunpack.c.h.b16 %v3302
        %v4629 = vunpack.c.l.b16 %v3303
        %v4630 = vunpack.c.h.b16 %v3303
        %v4631 = vunpack.c.l.b16 %v3304
        %v4632 = vunpack.c.h.b16 %v3304
        %v4633 = vunpack.c.l.b16 %v3305
        %v4634 = vunpack.c.h.b16 %v3305
        %v4635 = vunpack.c.l.b16 %v3306
        %v4636 = vunpack.c.h.b16 %v3306
        %v4637 = vunpack.c.l.b16 %v3307
        %v4638 = vunpack.c.h.b16 %v3307
        %v4639 = vunpack.c.l.b16 %v3308
        %v4640 = vunpack.c.h.b16 %v3308
        %v4641 = vunpack.c.l.b16 %v3309
        %v4642 = vunpack.c.h.b16 %v3309
        %v4643 = vunpack.c.l.b16 %v3310
        %v4644 = vunpack.c.h.b16 %v3310
        %v4645 = vunpack.c.l.b16 %v3311
        %v4646 = vunpack.c.h.b16 %v3311
        %v4647 = vunpack.c.l.b16 %v3312
        %v4648 = vunpack.c.h.b16 %v3312
        %v4649 = vunpack.c.l.b16 %v3313
        %v4650 = vunpack.c.h.b16 %v3313
        %v4651 = vunpack.c.l.b16 %v3314
        %v4652 = vunpack.c.h.b16 %v3314
        %v4653 = vunpack.c.l.b16 %v3315
        %v4654 = vunpack.c.h.b16 %v3315
        %v4655 = vunpack.c.l.b16 %v3316
        %v4656 = vunpack.c.h.b16 %v3316
        %v4657 = vunpack.c.l.b16 %v3317
        %v4658 = vunpack.c.h.b16 %v3317
        %v4659 = vunpack.c.l.b16 %v3318
        %v4660 = vunpack.c.h.b16 %v3318
        %v4661 = vunpack.c.l.b16 %v3319
        %v4662 = vunpack.c.h.b16 %v3319
        %v4663 = vunpack.c.l.b16 %v3320
        %v4664 = vunpack.c.h.b16 %v3320
        %v4665 = vunpack.c.l.b16 %v3321
        %v4666 = vunpack.c.h.b16 %v3321
        %v4667 = vunpack.c.l.b16 %v3322
        %v4668 = vunpack.c.h.b16 %v3322
        %v4669 = vunpack.c.l.b16 %v3323
        %v4670 = vunpack.c.h.b16 %v3323
        %v4671 = vunpack.c.l.b16 %v3324
        %v4672 = vunpack.c.h.b16 %v3324
        %v4673 = vunpack.c.l.b16 %v3325
        %v4674 = vunpack.c.h.b16 %v3325
        %v4675 = vunpack.c.l.b16 %v3326
        %v4676 = vunpack.c.h.b16 %v3326
        %v4677 = vunpack.c.l.b16 %v3327
        %v4678 = vunpack.c.h.b16 %v3327
        %v4679 = vunpack.c.l.b16 %v3328
        %v4680 = vunpack.c.h.b16 %v3328
        %v4681 = vunpack.c.l.b16 %v3329
        %v4682 = vunpack.c.h.b16 %v3329
        %v4683 = vunpack.c.l.b16 %v3330
        %v4684 = vunpack.c.h.b16 %v3330
        %v4685 = vunpack.c.l.b16 %v3331
        %v4686 = vunpack.c.h.b16 %v3331
        %v4687 = vunpack.c.l.b16 %v3332
        %v4688 = vunpack.c.h.b16 %v3332
        %v4689 = vunpack.c.l.b16 %v3333
        %v4690 = vunpack.c.h.b16 %v3333
        %v4691 = vunpack.c.l.b16 %v3334
        %v4692 = vunpack.c.h.b16 %v3334
        %v4693 = vunpack.c.l.b16 %v3335
        %v4694 = vunpack.c.h.b16 %v3335
        %v4695 = vunpack.c.l.b16 %v3336
        %v4696 = vunpack.c.h.b16 %v3336
        %v4697 = vunpack.c.l.b16 %v3337
        %v4698 = vunpack.c.h.b16 %v3337
        %v4699 = vunpack.c.l.b16 %v3338
        %v4700 = vunpack.c.h.b16 %v3338
        %v4701 = vunpack.c.l.b16 %v3339
        %v4702 = vunpack.c.h.b16 %v3339
        %v4703 = vunpack.c.l.b16 %v3340
        %v4704 = vunpack.c.h.b16 %v3340
        %v4705 = vunpack.c.l.b16 %v3341
        %v4706 = vunpack.c.h.b16 %v3341
        %v4707 = vunpack.c.l.b16 %v3342
        %v4708 = vunpack.c.h.b16 %v3342
        %v4709 = vunpack.c.l.b16 %v3343
        %v4710 = vunpack.c.h.b16 %v3343
        %v4711 = vunpack.c.l.b16 %v3344
        %v4712 = vunpack.c.h.b16 %v3344
        %v4713 = vunpack.c.l.b16 %v3345
        %v4714 = vunpack.c.h.b16 %v3345
        %v4715 = vunpack.c.l.b16 %v3346
        %v4716 = vunpack.c.h.b16 %v3346
        %v4717 = vunpack.c.l.b16 %v3347
        %v4718 = vunpack.c.h.b16 %v3347
        %v4719 = vunpack.c.l.b16 %v3348
        %v4720 = vunpack.c.h.b16 %v3348
        %v4721 = vunpack.c.l.b16 %v3349
        %v4722 = vunpack.c.h.b16 %v3349
        %v4723 = vunpack.c.l.b16 %v3350
        %v4724 = vunpack.c.h.b16 %v3350
        %v4725 = vunpack.c.l.b16 %v3351
        %v4726 = vunpack.c.h.b16 %v3351
        %v4727 = vunpack.c.l.b16 %v3352
        %v4728 = vunpack.c.h.b16 %v3352
        %v4729 = vunpack.c.l.b16 %v3353
        %v4730 = vunpack.c.h.b16 %v3353
        %v4731 = vunpack.c.l.b16 %v3354
        %v4732 = vunpack.c.h.b16 %v3354
        %v4733 = vunpack.c.l.b16 %v3355
        %v4734 = vunpack.c.h.b16 %v3355
        %v4735 = vunpack.c.l.b16 %v3356
        %v4736 = vunpack.c.h.b16 %v3356
        %v4737 = vunpack.c.l.b16 %v3357
        %v4738 = vunpack.c.h.b16 %v3357
        %v4739 = vunpack.c.l.b16 %v3358
        %v4740 = vunpack.c.h.b16 %v3358
        %v4741 = vunpack.c.l.b16 %v3359
        %v4742 = vunpack.c.h.b16 %v3359
        %v4743 = vunpack.c.l.b16 %v3360
        %v4744 = vunpack.c.h.b16 %v3360
        %v4745 = vunpack.c.l.b16 %v3361
        %v4746 = vunpack.c.h.b16 %v3361
        %v4747 = vunpack.c.l.b16 %v3362
        %v4748 = vunpack.c.h.b16 %v3362
        %v4749 = vunpack.c.l.b16 %v3363
        %v4750 = vunpack.c.h.b16 %v3363
        %v4751 = vunpack.c.l.b16 %v3364
        %v4752 = vunpack.c.h.b16 %v3364
        %v4753 = vunpack.c.l.b16 %v3365
        %v4754 = vunpack.c.h.b16 %v3365
        %v4755 = vunpack.c.l.b16 %v3366
        %v4756 = vunpack.c.h.b16 %v3366
        %v4757 = vunpack.c.l.b16 %v3367
        %v4758 = vunpack.c.h.b16 %v3367
        %v4759 = vunpack.c.l.b16 %v3368
        %v4760 = vunpack.c.h.b16 %v3368
        %v4761 = vunpack.c.l.b16 %v3369
        %v4762 = vunpack.c.h.b16 %v3369
        %v4763 = vunpack.c.l.b16 %v3370
        %v4764 = vunpack.c.h.b16 %v3370
        %v4765 = vunpack.c.l.b16 %v3371
        %v4766 = vunpack.c.h.b16 %v3371
        %v4767 = vunpack.c.l.b16 %v3372
        %v4768 = vunpack.c.h.b16 %v3372
        %v4769 = vunpack.c.l.b16 %v3373
        %v4770 = vunpack.c.h.b16 %v3373
        %v4771 = vunpack.c.l.b16 %v3374
        %v4772 = vunpack.c.h.b16 %v3374
        %v4773 = vunpack.c.l.b16 %v3375
        %v4774 = vunpack.c.h.b16 %v3375
        %v4775 = vunpack.c.l.b16 %v3376
        %v4776 = vunpack.c.h.b16 %v3376
        %v4777 = vunpack.c.l.b16 %v3377
        %v4778 = vunpack.c.h.b16 %v3377
        %v4779 = vunpack.c.l.b16 %v3378
        %v4780 = vunpack.c.h.b16 %v3378
        %v4781 = vunpack.c.l.b16 %v3379
        %v4782 = vunpack.c.h.b16 %v3379
        %v4783 = vunpack.c.l.b16 %v3380
        %v4784 = vunpack.c.h.b16 %v3380
        %v4785 = vunpack.c.l.b16 %v3381
        %v4786 = vunpack.c.h.b16 %v3381
        %v4787 = vunpack.c.l.b16 %v3382
        %v4788 = vunpack.c.h.b16 %v3382
        %v4789 = vunpack.c.l.b16 %v3383
        %v4790 = vunpack.c.h.b16 %v3383
        %v4791 = vunpack.c.l.b16 %v3384
        %v4792 = vunpack.c.h.b16 %v3384
        %v4793 = vunpack.c.l.b16 %v3385
        %v4794 = vunpack.c.h.b16 %v3385
        %v4795 = vunpack.c.l.b16 %v3386
        %v4796 = vunpack.c.h.b16 %v3386
        %v4797 = vunpack.c.l.b16 %v3387
        %v4798 = vunpack.c.h.b16 %v3387
        %v4799 = vunpack.c.l.b16 %v3388
        %v4800 = vunpack.c.h.b16 %v3388
        %v4801 = vunpack.c.l.b16 %v3389
        %v4802 = vunpack.c.h.b16 %v3389
        %v4803 = vunpack.c.l.b16 %v3390
        %v4804 = vunpack.c.h.b16 %v3390
        %v4805 = vunpack.c.l.b16 %v3391
        %v4806 = vunpack.c.h.b16 %v3391
        %v4807 = vunpack.c.l.b16 %v3392
        %v4808 = vunpack.c.h.b16 %v3392
        %v4809 = vunpack.c.l.b16 %v3393
        %v4810 = vunpack.c.h.b16 %v3393
        %v4811 = vunpack.c.l.b16 %v3394
        %v4812 = vunpack.c.h.b16 %v3394
        %v4813 = vunpack.c.l.b16 %v3395
        %v4814 = vunpack.c.h.b16 %v3395
        %v4815 = vunpack.c.l.b16 %v3396
        %v4816 = vunpack.c.h.b16 %v3396
        %v4817 = vunpack.c.l.b16 %v3397
        %v4818 = vunpack.c.h.b16 %v3397
        %v4819 = vunpack.c.l.b16 %v3398
        %v4820 = vunpack.c.h.b16 %v3398
        %v4821 = vunpack.c.l.b16 %v3399
        %v4822 = vunpack.c.h.b16 %v3399
        %v4823 = vunpack.c.l.b16 %v3400
        %v4824 = vunpack.c.h.b16 %v3400
        %v4825 = vunpack.c.l.b16 %v3401
        %v4826 = vunpack.c.h.b16 %v3401
        %v4827 = vunpack.c.l.b16 %v3402
        %v4828 = vunpack.c.h.b16 %v3402
        %v4829 = vunpack.c.l.b16 %v3403
        %v4830 = vunpack.c.h.b16 %v3403
        %v4831 = vunpack.c.l.b16 %v3404
        %v4832 = vunpack.c.h.b16 %v3404
        %v4833 = vunpack.c.l.b16 %v3405
        %v4834 = vunpack.c.h.b16 %v3405
        %v4835 = vunpack.c.l.b16 %v3406
        %v4836 = vunpack.c.h.b16 %v3406
        %v4837 = vunpack.c.l.b16 %v3407
        %v4838 = vunpack.c.h.b16 %v3407
        %v4839 = vunpack.c.l.b16 %v3408
        %v4840 = vunpack.c.h.b16 %v3408
        %v4841 = vunpack.c.l.b16 %v3409
        %v4842 = vunpack.c.h.b16 %v3409
        %v4843 = vunpack.c.l.b16 %v3410
        %v4844 = vunpack.c.h.b16 %v3410
        %v4845 = vunpack.c.l.b16 %v3411
        %v4846 = vunpack.c.h.b16 %v3411
        %v4847 = vunpack.c.l.b16 %v3412
        %v4848 = vunpack.c.h.b16 %v3412
        %v4849 = vunpack.c.l.b16 %v3413
        %v4850 = vunpack.c.h.b16 %v3413
        %v4851 = vunpack.c.l.b16 %v3414
        %v4852 = vunpack.c.h.b16 %v3414
        %v4853 = vunpack.c.l.b16 %v3415
        %v4854 = vunpack.c.h.b16 %v3415
        %v4855 = vunpack.c.l.b16 %v3416
        %v4856 = vunpack.c.h.b16 %v3416
        %v4857 = vunpack.c.l.b16 %v3417
        %v4858 = vunpack.c.h.b16 %v3417
        %v4859 = vunpack.c.l.b16 %v3418
        %v4860 = vunpack.c.h.b16 %v3418
        %v4861 = vunpack.c.l.b16 %v3419
        %v4862 = vunpack.c.h.b16 %v3419
        %v4863 = vunpack.c.l.b16 %v3420
        %v4864 = vunpack.c.h.b16 %v3420
        %v4865 = vunpack.c.l.b16 %v3421
        %v4866 = vunpack.c.h.b16 %v3421
        %v4867 = vunpack.c.l.b16 %v3422
        %v4868 = vunpack.c.h.b16 %v3422
        %v4869 = vunpack.c.l.b16 %v3423
        %v4870 = vunpack.c.h.b16 %v3423
        %v4871 = vunpack.c.l.b16 %v3424
        %v4872 = vunpack.c.h.b16 %v3424
        %v4873 = vunpack.c.l.b16 %v3425
        %v4874 = vunpack.c.h.b16 %v3425
        %v4875 = vunpack.c.l.b16 %v3426
        %v4876 = vunpack.c.h.b16 %v3426
        %v4877 = vunpack.c.l.b16 %v3427
        %v4878 = vunpack.c.h.b16 %v3427
        %v4879 = vunpack.c.l.b16 %v3428
        %v4880 = vunpack.c.h.b16 %v3428
        %v4881 = vunpack.c.l.b16 %v3429
        %v4882 = vunpack.c.h.b16 %v3429
        %v4883 = vunpack.c.l.b16 %v3430
        %v4884 = vunpack.c.h.b16 %v3430
        %v4885 = vunpack.c.l.b16 %v3431
        %v4886 = vunpack.c.h.b16 %v3431
        %v4887 = vunpack.c.l.b16 %v3432
        %v4888 = vunpack.c.h.b16 %v3432
        %v4889 = vunpack.c.l.b16 %v3433
        %v4890 = vunpack.c.h.b16 %v3433
        %v4891 = vunpack.c.l.b16 %v3434
        %v4892 = vunpack.c.h.b16 %v3434
        %v4893 = vunpack.c.l.b16 %v3435
        %v4894 = vunpack.c.h.b16 %v3435
        %v4895 = vunpack.c.l.b16 %v3436
        %v4896 = vunpack.c.h.b16 %v3436
        %v4897 = vunpack.c.l.b16 %v3437
        %v4898 = vunpack.c.h.b16 %v3437
        %v4899 = vunpack.c.l.b16 %v3438
        %v4900 = vunpack.c.h.b16 %v3438
        %v4901 = vunpack.c.l.b16 %v3439
        %v4902 = vunpack.c.h.b16 %v3439
        %v4903 = vunpack.c.l.b16 %v3440
        %v4904 = vunpack.c.h.b16 %v3440
        %v4905 = vunpack.c.l.b16 %v3441
        %v4906 = vunpack.c.h.b16 %v3441
        %v4907 = vunpack.c.l.b16 %v3442
        %v4908 = vunpack.c.h.b16 %v3442
        %v4909 = vunpack.c.l.b16 %v3443
        %v4910 = vunpack.c.h.b16 %v3443
        %v4911 = vunpack.c.l.b16 %v3444
        %v4912 = vunpack.c.h.b16 %v3444
        %v4913 = vunpack.c.l.b16 %v3445
        %v4914 = vunpack.c.h.b16 %v3445
        %v4915 = vunpack.c.l.b16 %v3446
        %v4916 = vunpack.c.h.b16 %v3446
        %v4917 = vunpack.c.l.b16 %v3447
        %v4918 = vunpack.c.h.b16 %v3447
        %v4919 = vunpack.c.l.b16 %v3448
        %v4920 = vunpack.c.h.b16 %v3448
        %v4921 = vunpack.c.l.b16 %v3449
        %v4922 = vunpack.c.h.b16 %v3449
        %v4923 = vunpack.c.l.b16 %v3450
        %v4924 = vunpack.c.h.b16 %v3450
        %v4925 = vunpack.c.l.b16 %v3451
        %v4926 = vunpack.c.h.b16 %v3451
        %v4927 = vunpack.c.l.b16 %v3452
        %v4928 = vunpack.c.h.b16 %v3452
        %v4929 = vunpack.c.l.b16 %v3453
        %v4930 = vunpack.c.h.b16 %v3453
        %v4931 = vunpack.c.l.b16 %v3454
        %v4932 = vunpack.c.h.b16 %v3454
        %v4933 = vunpack.c.l.b16 %v3455
        %v4934 = vunpack.c.h.b16 %v3455
        %v4935 = vunpack.c.l.b16 %v3456
        %v4936 = vunpack.c.h.b16 %v3456
        %v4937 = vunpack.c.l.b16 %v3457
        %v4938 = vunpack.c.h.b16 %v3457
        %v4939 = vunpack.c.l.b16 %v3458
        %v4940 = vunpack.c.h.b16 %v3458
        %v4941 = vunpack.c.l.b16 %v3459
        %v4942 = vunpack.c.h.b16 %v3459
        %v4943 = vunpack.c.l.b16 %v3460
        %v4944 = vunpack.c.h.b16 %v3460
        %v4945 = vunpack.c.l.b16 %v3461
        %v4946 = vunpack.c.h.b16 %v3461
        %v4947 = vunpack.c.l.b16 %v3462
        %v4948 = vunpack.c.h.b16 %v3462
        %v4949 = vunpack.c.l.b16 %v3463
        %v4950 = vunpack.c.h.b16 %v3463
        %v4951 = vunpack.c.l.b16 %v3464
        %v4952 = vunpack.c.h.b16 %v3464
        %v4953 = vunpack.c.l.b16 %v3465
        %v4954 = vunpack.c.h.b16 %v3465
        %v4955 = vunpack.c.l.b16 %v3466
        %v4956 = vunpack.c.h.b16 %v3466
        %v4957 = vunpack.c.l.b16 %v3467
        %v4958 = vunpack.c.h.b16 %v3467
        %v4959 = vunpack.c.l.b16 %v3468
        %v4960 = vunpack.c.h.b16 %v3468
        %v4961 = vunpack.c.l.b16 %v3469
        %v4962 = vunpack.c.h.b16 %v3469
        %v4963 = vunpack.c.l.b16 %v3470
        %v4964 = vunpack.c.h.b16 %v3470
        %v4965 = vunpack.c.l.b16 %v3471
        %v4966 = vunpack.c.h.b16 %v3471
        %v4967 = vunpack.c.l.b16 %v3472
        %v4968 = vunpack.c.h.b16 %v3472
        %v4969 = vunpack.c.l.b16 %v3473
        %v4970 = vunpack.c.h.b16 %v3473
        %v4971 = vunpack.c.l.b16 %v3474
        %v4972 = vunpack.c.h.b16 %v3474
        %v4973 = vunpack.c.l.b16 %v3475
        %v4974 = vunpack.c.h.b16 %v3475
        %v4975 = vunpack.c.l.b16 %v3476
        %v4976 = vunpack.c.h.b16 %v3476
        %v4977 = vunpack.c.l.b16 %v3477
        %v4978 = vunpack.c.h.b16 %v3477
        %v4979 = vunpack.c.l.b16 %v3478
        %v4980 = vunpack.c.h.b16 %v3478
        %v4981 = vunpack.c.l.b16 %v3479
        %v4982 = vunpack.c.h.b16 %v3479
        %v4983 = vunpack.c.l.b16 %v3480
        %v4984 = vunpack.c.h.b16 %v3480
        %v4985 = vunpack.c.l.b16 %v3481
        %v4986 = vunpack.c.h.b16 %v3481
        %v4987 = vunpack.c.l.b16 %v3482
        %v4988 = vunpack.c.h.b16 %v3482
        %v4989 = vunpack.c.l.b16 %v3483
        %v4990 = vunpack.c.h.b16 %v3483
        %v4991 = vunpack.c.l.b16 %v3484
        %v4992 = vunpack.c.h.b16 %v3484
        %v4993 = vunpack.c.l.b16 %v3485
        %v4994 = vunpack.c.h.b16 %v3485
        %v4995 = vunpack.c.l.b16 %v3486
        %v4996 = vunpack.c.h.b16 %v3486
        %v4997 = vunpack.c.l.b16 %v3487
        %v4998 = vunpack.c.h.b16 %v3487
        %v4999 = vunpack.c.l.b16 %v3488
        %v5000 = vunpack.c.h.b16 %v3488
        %v5001 = vunpack.c.l.b16 %v3489
        %v5002 = vunpack.c.h.b16 %v3489
        %v5003 = vunpack.c.l.b16 %v3490
        %v5004 = vunpack.c.h.b16 %v3490
        %v5005 = vunpack.c.l.b16 %v3491
        %v5006 = vunpack.c.h.b16 %v3491
        %v5007 = vunpack.c.l.b16 %v3492
        %v5008 = vunpack.c.h.b16 %v3492
        %v5009 = vunpack.c.l.b16 %v3493
        %v5010 = vunpack.c.h.b16 %v3493
        %v5011 = vunpack.c.l.b16 %v3494
        %v5012 = vunpack.c.h.b16 %v3494
        %v5013 = vunpack.c.l.b16 %v3495
        %v5014 = vunpack.c.h.b16 %v3495
        %v5015 = vunpack.c.l.b16 %v3496
        %v5016 = vunpack.c.h.b16 %v3496
        %v5017 = vunpack.c.l.b16 %v3497
        %v5018 = vunpack.c.h.b16 %v3497
        %v5019 = vunpack.c.l.b16 %v3498
        %v5020 = vunpack.c.h.b16 %v3498
        %v5021 = vunpack.c.l.b16 %v3499
        %v5022 = vunpack.c.h.b16 %v3499
        %v5023 = vunpack.c.l.b16 %v3500
        %v5024 = vunpack.c.h.b16 %v3500
        %v5025 = vunpack.c.l.b16 %v3501
        %v5026 = vunpack.c.h.b16 %v3501
        %v5027 = vunpack.c.l.b16 %v3502
        %v5028 = vunpack.c.h.b16 %v3502
        %v5029 = vunpack.c.l.b16 %v3503
        %v5030 = vunpack.c.h.b16 %v3503
        %v5031 = vunpack.c.l.b16 %v3504
        %v5032 = vunpack.c.h.b16 %v3504
        %v5033 = vunpack.c.l.b16 %v3505
        %v5034 = vunpack.c.h.b16 %v3505
        %v5035 = vunpack.c.l.b16 %v3506
        %v5036 = vunpack.c.h.b16 %v3506
        %v5037 = vunpack.c.l.b16 %v3507
        %v5038 = vunpack.c.h.b16 %v3507
        %v5039 = vunpack.c.l.b16 %v3508
        %v5040 = vunpack.c.h.b16 %v3508
        %v5041 = vunpack.c.l.b16 %v3509
        %v5042 = vunpack.c.h.b16 %v3509
        %v5043 = vunpack.c.l.b16 %v3510
        %v5044 = vunpack.c.h.b16 %v3510
        %v5045 = vunpack.c.l.b16 %v3511
        %v5046 = vunpack.c.h.b16 %v3511
        %v5047 = vunpack.c.l.b16 %v3512
        %v5048 = vunpack.c.h.b16 %v3512
        %v5049 = vunpack.c.l.b16 %v3513
        %v5050 = vunpack.c.h.b16 %v3513
        %v5051 = vunpack.c.l.b16 %v3514
        %v5052 = vunpack.c.h.b16 %v3514
        %v5053 = vunpack.c.l.b16 %v3515
        %v5054 = vunpack.c.h.b16 %v3515
        %v5055 = vunpack.c.l.b16 %v3516
        %v5056 = vunpack.c.h.b16 %v3516
        %v5057 = vunpack.c.l.b16 %v3517
        %v5058 = vunpack.c.h.b16 %v3517
        %v5059 = vunpack.c.l.b16 %v3518
        %v5060 = vunpack.c.h.b16 %v3518
        %v5061 = vunpack.c.l.b16 %v3519
        %v5062 = vunpack.c.h.b16 %v3519
        %v5063 = vunpack.c.l.b16 %v3520
        %v5064 = vunpack.c.h.b16 %v3520
        %v5065 = vunpack.c.l.b16 %v3521
        %v5066 = vunpack.c.h.b16 %v3521
        %v5067 = vunpack.c.l.b16 %v3522
        %v5068 = vunpack.c.h.b16 %v3522
        %v5069 = vunpack.c.l.b16 %v3523
        %v5070 = vunpack.c.h.b16 %v3523
        %v5071 = vunpack.c.l.b16 %v3524
        %v5072 = vunpack.c.h.b16 %v3524
        %v5073 = vunpack.c.l.b16 %v3525
        %v5074 = vunpack.c.h.b16 %v3525
        %v5075 = vunpack.c.l.b16 %v3526
        %v5076 = vunpack.c.h.b16 %v3526
        %v5077 = vunpack.c.l.b16 %v3527
        %v5078 = vunpack.c.h.b16 %v3527
        %v5079 = vunpack.c.l.b16 %v3528
        %v5080 = vunpack.c.h.b16 %v3528
        %v5081 = vunpack.c.l.b16 %v3529
        %v5082 = vunpack.c.h.b16 %v3529
        %v5083 = vunpack.c.l.b16 %v3530
        %v5084 = vunpack.c.h.b16 %v3530
        %v5085 = vunpack.c.l.b16 %v3531
        %v5086 = vunpack.c.h.b16 %v3531
        %v5087 = vunpack.c.l.b16 %v3532
        %v5088 = vunpack.c.h.b16 %v3532
        %v5089 = vunpack.c.l.b16 %v3533
        %v5090 = vunpack.c.h.b16 %v3533
        %v5091 = vunpack.c.l.b16 %v3534
        %v5092 = vunpack.c.h.b16 %v3534
        %v5093 = vunpack.c.l.b16 %v3535
        %v5094 = vunpack.c.h.b16 %v3535
        %v5095 = vunpack.c.l.b16 %v3536
        %v5096 = vunpack.c.h.b16 %v3536
        %v5097 = vunpack.c.l.b16 %v3537
        %v5098 = vunpack.c.h.b16 %v3537
        %v5099 = vunpack.c.l.b16 %v3538
        %v5100 = vunpack.c.h.b16 %v3538
        %v5101 = vunpack.c.l.b16 %v3539
        %v5102 = vunpack.c.h.b16 %v3539
        %v5103 = vunpack.c.l.b16 %v3540
        %v5104 = vunpack.c.h.b16 %v3540
        %v5105 = vunpack.c.l.b16 %v3541
        %v5106 = vunpack.c.h.b16 %v3541
        %v5107 = vunpack.c.l.b16 %v3542
        %v5108 = vunpack.c.h.b16 %v3542
        %v5109 = vunpack.c.l.b16 %v3543
        %v5110 = vunpack.c.h.b16 %v3543
        %v5111 = vunpack.c.l.b16 %v3544
        %v5112 = vunpack.c.h.b16 %v3544
        %v5113 = vunpack.c.l.b16 %v3545
        %v5114 = vunpack.c.h.b16 %v3545
        %v5115 = vunpack.c.l.b16 %v3546
        %v5116 = vunpack.c.h.b16 %v3546
        %v5117 = vunpack.c.l.b16 %v3547
        %v5118 = vunpack.c.h.b16 %v3547
        %v5119 = vunpack.c.l.b16 %v3548
        %v5120 = vunpack.c.h.b16 %v3548
        %v5121 = vunpack.c.l.b16 %v3549
        %v5122 = vunpack.c.h.b16 %v3549
        %v5123 = vunpack.c.l.b16 %v3550
        %v5124 = vunpack.c.h.b16 %v3550
        %v5125 = vunpack.c.l.b16 %v3551
        %v5126 = vunpack.c.h.b16 %v3551
        %v5127 = vunpack.c.l.b16 %v3552
        %v5128 = vunpack.c.h.b16 %v3552
        %v5129 = vunpack.c.l.b16 %v3553
        %v5130 = vunpack.c.h.b16 %v3553
        %v5131 = vunpack.c.l.b16 %v3554
        %v5132 = vunpack.c.h.b16 %v3554
        %v5133 = vpack.c.b16 %v4117, %v4109
        %v5134 = vpack.c.b16 %v4118, %v4110
        %v5135 = vpack.c.b16 %v4119, %v4111
        %v5136 = vpack.c.b16 %v4120, %v4112
        %v5137 = vpack.c.b16 %v4121, %v4113
        %v5138 = vpack.c.b16 %v4122, %v4114
        %v5139 = vpack.c.b16 %v4123, %v4115
        %v5140 = vpack.c.b16 %v4124, %v4116
        %v5141 = vpack.c.b16 %v4133, %v4125
        %v5142 = vpack.c.b16 %v4134, %v4126
        %v5143 = vpack.c.b16 %v4135, %v4127
        %v5144 = vpack.c.b16 %v4136, %v4128
        %v5145 = vpack.c.b16 %v4137, %v4129
        %v5146 = vpack.c.b16 %v4138, %v4130
        %v5147 = vpack.c.b16 %v4139, %v4131
        %v5148 = vpack.c.b16 %v4140, %v4132
        %v5149 = vpack.c.b16 %v4149, %v4141
        %v5150 = vpack.c.b16 %v4150, %v4142
        %v5151 = vpack.c.b16 %v4151, %v4143
        %v5152 = vpack.c.b16 %v4152, %v4144
        %v5153 = vpack.c.b16 %v4153, %v4145
        %v5154 = vpack.c.b16 %v4154, %v4146
        %v5155 = vpack.c.b16 %v4155, %v4147
        %v5156 = vpack.c.b16 %v4156, %v4148
        %v5157 = vpack.c.b16 %v4165, %v4157
        %v5158 = vpack.c.b16 %v4166, %v4158
        %v5159 = vpack.c.b16 %v4167, %v4159
        %v5160 = vpack.c.b16 %v4168, %v4160
        %v5161 = vpack.c.b16 %v4169, %v4161
        %v5162 = vpack.c.b16 %v4170, %v4162
        %v5163 = vpack.c.b16 %v4171, %v4163
        %v5164 = vpack.c.b16 %v4172, %v4164
        %v5165 = vpack.c.b16 %v4181, %v4173
        %v5166 = vpack.c.b16 %v4182, %v4174
        %v5167 = vpack.c.b16 %v4183, %v4175
        %v5168 = vpack.c.b16 %v4184, %v4176
        %v5169 = vpack.c.b16 %v4185, %v4177
        %v5170 = vpack.c.b16 %v4186, %v4178
        %v5171 = vpack.c.b16 %v4187, %v4179
        %v5172 = vpack.c.b16 %v4188, %v4180
        %v5173 = vpack.c.b16 %v4197, %v4189
        %v5174 = vpack.c.b16 %v4198, %v4190
        %v5175 = vpack.c.b16 %v4199, %v4191
        %v5176 = vpack.c.b16 %v4200, %v4192
        %v5177 = vpack.c.b16 %v4201, %v4193
        %v5178 = vpack.c.b16 %v4202, %v4194
        %v5179 = vpack.c.b16 %v4203, %v4195
        %v5180 = vpack.c.b16 %v4204, %v4196
        %v5181 = vpack.c.b16 %v4213, %v4205
        %v5182 = vpack.c.b16 %v4214, %v4206
        %v5183 = vpack.c.b16 %v4215, %v4207
        %v5184 = vpack.c.b16 %v4216, %v4208
        %v5185 = vpack.c.b16 %v4217, %v4209
        %v5186 = vpack.c.b16 %v4218, %v4210
        %v5187 = vpack.c.b16 %v4219, %v4211
        %v5188 = vpack.c.b16 %v4220, %v4212
        %v5189 = vpack.c.b16 %v4229, %v4221
        %v5190 = vpack.c.b16 %v4230, %v4222
        %v5191 = vpack.c.b16 %v4231, %v4223
        %v5192 = vpack.c.b16 %v4232, %v4224
        %v5193 = vpack.c.b16 %v4233, %v4225
        %v5194 = vpack.c.b16 %v4234, %v4226
        %v5195 = vpack.c.b16 %v4235, %v4227
        %v5196 = vpack.c.b16 %v4236, %v4228
        %v5197 = vpack.c.b16 %v4245, %v4237
        %v5198 = vpack.c.b16 %v4246, %v4238
        %v5199 = vpack.c.b16 %v4247, %v4239
        %v5200 = vpack.c.b16 %v4248, %v4240
        %v5201 = vpack.c.b16 %v4249, %v4241
        %v5202 = vpack.c.b16 %v4250, %v4242
        %v5203 = vpack.c.b16 %v4251, %v4243
        %v5204 = vpack.c.b16 %v4252, %v4244
        %v5205 = vpack.c.b16 %v4261, %v4253
        %v5206 = vpack.c.b16 %v4262, %v4254
        %v5207 = vpack.c.b16 %v4263, %v4255
        %v5208 = vpack.c.b16 %v4264, %v4256
        %v5209 = vpack.c.b16 %v4265, %v4257
        %v5210 = vpack.c.b16 %v4266, %v4258
        %v5211 = vpack.c.b16 %v4267, %v4259
        %v5212 = vpack.c.b16 %v4268, %v4260
        %v5213 = vpack.c.b16 %v4277, %v4269
        %v5214 = vpack.c.b16 %v4278, %v4270
        %v5215 = vpack.c.b16 %v4279, %v4271
        %v5216 = vpack.c.b16 %v4280, %v4272
        %v5217 = vpack.c.b16 %v4281, %v4273
        %v5218 = vpack.c.b16 %v4282, %v4274
        %v5219 = vpack.c.b16 %v4283, %v4275
        %v5220 = vpack.c.b16 %v4284, %v4276
        %v5221 = vpack.c.b16 %v4293, %v4285
        %v5222 = vpack.c.b16 %v4294, %v4286
        %v5223 = vpack.c.b16 %v4295, %v4287
        %v5224 = vpack.c.b16 %v4296, %v4288
        %v5225 = vpack.c.b16 %v4297, %v4289
        %v5226 = vpack.c.b16 %v4298, %v4290
        %v5227 = vpack.c.b16 %v4299, %v4291
        %v5228 = vpack.c.b16 %v4300, %v4292
        %v5229 = vpack.c.b16 %v4309, %v4301
        %v5230 = vpack.c.b16 %v4310, %v4302
        %v5231 = vpack.c.b16 %v4311, %v4303
        %v5232 = vpack.c.b16 %v4312, %v4304
        %v5233 = vpack.c.b16 %v4313, %v4305
        %v5234 = vpack.c.b16 %v4314, %v4306
        %v5235 = vpack.c.b16 %v4315, %v4307
        %v5236 = vpack.c.b16 %v4316, %v4308
        %v5237 = vpack.c.b16 %v4325, %v4317
        %v5238 = vpack.c.b16 %v4326, %v4318
        %v5239 = vpack.c.b16 %v4327, %v4319
        %v5240 = vpack.c.b16 %v4328, %v4320
        %v5241 = vpack.c.b16 %v4329, %v4321
        %v5242 = vpack.c.b16 %v4330, %v4322
        %v5243 = vpack.c.b16 %v4331, %v4323
        %v5244 = vpack.c.b16 %v4332, %v4324
        %v5245 = vpack.c.b16 %v4341, %v4333
        %v5246 = vpack.c.b16 %v4342, %v4334
        %v5247 = vpack.c.b16 %v4343, %v4335
        %v5248 = vpack.c.b16 %v4344, %v4336
        %v5249 = vpack.c.b16 %v4345, %v4337
        %v5250 = vpack.c.b16 %v4346, %v4338
        %v5251 = vpack.c.b16 %v4347, %v4339
        %v5252 = vpack.c.b16 %v4348, %v4340
        %v5253 = vpack.c.b16 %v4357, %v4349
        %v5254 = vpack.c.b16 %v4358, %v4350
        %v5255 = vpack.c.b16 %v4359, %v4351
        %v5256 = vpack.c.b16 %v4360, %v4352
        %v5257 = vpack.c.b16 %v4361, %v4353
        %v5258 = vpack.c.b16 %v4362, %v4354
        %v5259 = vpack.c.b16 %v4363, %v4355
        %v5260 = vpack.c.b16 %v4364, %v4356
        %v5261 = vpack.c.b16 %v4373, %v4365
        %v5262 = vpack.c.b16 %v4374, %v4366
        %v5263 = vpack.c.b16 %v4375, %v4367
        %v5264 = vpack.c.b16 %v4376, %v4368
        %v5265 = vpack.c.b16 %v4377, %v4369
        %v5266 = vpack.c.b16 %v4378, %v4370
        %v5267 = vpack.c.b16 %v4379, %v4371
        %v5268 = vpack.c.b16 %v4380, %v4372
        %v5269 = vpack.c.b16 %v4389, %v4381
        %v5270 = vpack.c.b16 %v4390, %v4382
        %v5271 = vpack.c.b16 %v4391, %v4383
        %v5272 = vpack.c.b16 %v4392, %v4384
        %v5273 = vpack.c.b16 %v4393, %v4385
        %v5274 = vpack.c.b16 %v4394, %v4386
        %v5275 = vpack.c.b16 %v4395, %v4387
        %v5276 = vpack.c.b16 %v4396, %v4388
        %v5277 = vpack.c.b16 %v4405, %v4397
        %v5278 = vpack.c.b16 %v4406, %v4398
        %v5279 = vpack.c.b16 %v4407, %v4399
        %v5280 = vpack.c.b16 %v4408, %v4400
        %v5281 = vpack.c.b16 %v4409, %v4401
        %v5282 = vpack.c.b16 %v4410, %v4402
        %v5283 = vpack.c.b16 %v4411, %v4403
        %v5284 = vpack.c.b16 %v4412, %v4404
        %v5285 = vpack.c.b16 %v4421, %v4413
        %v5286 = vpack.c.b16 %v4422, %v4414
        %v5287 = vpack.c.b16 %v4423, %v4415
        %v5288 = vpack.c.b16 %v4424, %v4416
        %v5289 = vpack.c.b16 %v4425, %v4417
        %v5290 = vpack.c.b16 %v4426, %v4418
        %v5291 = vpack.c.b16 %v4427, %v4419
        %v5292 = vpack.c.b16 %v4428, %v4420
        %v5293 = vpack.c.b16 %v4437, %v4429
        %v5294 = vpack.c.b16 %v4438, %v4430
        %v5295 = vpack.c.b16 %v4439, %v4431
        %v5296 = vpack.c.b16 %v4440, %v4432
        %v5297 = vpack.c.b16 %v4441, %v4433
        %v5298 = vpack.c.b16 %v4442, %v4434
        %v5299 = vpack.c.b16 %v4443, %v4435
        %v5300 = vpack.c.b16 %v4444, %v4436
        %v5301 = vpack.c.b16 %v4453, %v4445
        %v5302 = vpack.c.b16 %v4454, %v4446
        %v5303 = vpack.c.b16 %v4455, %v4447
        %v5304 = vpack.c.b16 %v4456, %v4448
        %v5305 = vpack.c.b16 %v4457, %v4449
        %v5306 = vpack.c.b16 %v4458, %v4450
        %v5307 = vpack.c.b16 %v4459, %v4451
        %v5308 = vpack.c.b16 %v4460, %v4452
        %v5309 = vpack.c.b16 %v4469, %v4461
        %v5310 = vpack.c.b16 %v4470, %v4462
        %v5311 = vpack.c.b16 %v4471, %v4463
        %v5312 = vpack.c.b16 %v4472, %v4464
        %v5313 = vpack.c.b16 %v4473, %v4465
        %v5314 = vpack.c.b16 %v4474, %v4466
        %v5315 = vpack.c.b16 %v4475, %v4467
        %v5316 = vpack.c.b16 %v4476, %v4468
        %v5317 = vpack.c.b16 %v4485, %v4477
        %v5318 = vpack.c.b16 %v4486, %v4478
        %v5319 = vpack.c.b16 %v4487, %v4479
        %v5320 = vpack.c.b16 %v4488, %v4480
        %v5321 = vpack.c.b16 %v4489, %v4481
        %v5322 = vpack.c.b16 %v4490, %v4482
        %v5323 = vpack.c.b16 %v4491, %v4483
        %v5324 = vpack.c.b16 %v4492, %v4484
        %v5325 = vpack.c.b16 %v4501, %v4493
        %v5326 = vpack.c.b16 %v4502, %v4494
        %v5327 = vpack.c.b16 %v4503, %v4495
        %v5328 = vpack.c.b16 %v4504, %v4496
        %v5329 = vpack.c.b16 %v4505, %v4497
        %v5330 = vpack.c.b16 %v4506, %v4498
        %v5331 = vpack.c.b16 %v4507, %v4499
        %v5332 = vpack.c.b16 %v4508, %v4500
        %v5333 = vpack.c.b16 %v4517, %v4509
        %v5334 = vpack.c.b16 %v4518, %v4510
        %v5335 = vpack.c.b16 %v4519, %v4511
        %v5336 = vpack.c.b16 %v4520, %v4512
        %v5337 = vpack.c.b16 %v4521, %v4513
        %v5338 = vpack.c.b16 %v4522, %v4514
        %v5339 = vpack.c.b16 %v4523, %v4515
        %v5340 = vpack.c.b16 %v4524, %v4516
        %v5341 = vpack.c.b16 %v4533, %v4525
        %v5342 = vpack.c.b16 %v4534, %v4526
        %v5343 = vpack.c.b16 %v4535, %v4527
        %v5344 = vpack.c.b16 %v4536, %v4528
        %v5345 = vpack.c.b16 %v4537, %v4529
        %v5346 = vpack.c.b16 %v4538, %v4530
        %v5347 = vpack.c.b16 %v4539, %v4531
        %v5348 = vpack.c.b16 %v4540, %v4532
        %v5349 = vpack.c.b16 %v4549, %v4541
        %v5350 = vpack.c.b16 %v4550, %v4542
        %v5351 = vpack.c.b16 %v4551, %v4543
        %v5352 = vpack.c.b16 %v4552, %v4544
        %v5353 = vpack.c.b16 %v4553, %v4545
        %v5354 = vpack.c.b16 %v4554, %v4546
        %v5355 = vpack.c.b16 %v4555, %v4547
        %v5356 = vpack.c.b16 %v4556, %v4548
        %v5357 = vpack.c.b16 %v4565, %v4557
        %v5358 = vpack.c.b16 %v4566, %v4558
        %v5359 = vpack.c.b16 %v4567, %v4559
        %v5360 = vpack.c.b16 %v4568, %v4560
        %v5361 = vpack.c.b16 %v4569, %v4561
        %v5362 = vpack.c.b16 %v4570, %v4562
        %v5363 = vpack.c.b16 %v4571, %v4563
        %v5364 = vpack.c.b16 %v4572, %v4564
        %v5365 = vpack.c.b16 %v4581, %v4573
        %v5366 = vpack.c.b16 %v4582, %v4574
        %v5367 = vpack.c.b16 %v4583, %v4575
        %v5368 = vpack.c.b16 %v4584, %v4576
        %v5369 = vpack.c.b16 %v4585, %v4577
        %v5370 = vpack.c.b16 %v4586, %v4578
        %v5371 = vpack.c.b16 %v4587, %v4579
        %v5372 = vpack.c.b16 %v4588, %v4580
        %v5373 = vpack.c.b16 %v4597, %v4589
        %v5374 = vpack.c.b16 %v4598, %v4590
        %v5375 = vpack.c.b16 %v4599, %v4591
        %v5376 = vpack.c.b16 %v4600, %v4592
        %v5377 = vpack.c.b16 %v4601, %v4593
        %v5378 = vpack.c.b16 %v4602, %v4594
        %v5379 = vpack.c.b16 %v4603, %v4595
        %v5380 = vpack.c.b16 %v4604, %v4596
        %v5381 = vpack.c.b16 %v4613, %v4605
        %v5382 = vpack.c.b16 %v4614, %v4606
        %v5383 = vpack.c.b16 %v4615, %v4607
        %v5384 = vpack.c.b16 %v4616, %v4608
        %v5385 = vpack.c.b16 %v4617, %v4609
        %v5386 = vpack.c.b16 %v4618, %v4610
        %v5387 = vpack.c.b16 %v4619, %v4611
        %v5388 = vpack.c.b16 %v4620, %v4612
        %v5389 = vpack.c.b16 %v4629, %v4621
        %v5390 = vpack.c.b16 %v4630, %v4622
        %v5391 = vpack.c.b16 %v4631, %v4623
        %v5392 = vpack.c.b16 %v4632, %v4624
        %v5393 = vpack.c.b16 %v4633, %v4625
        %v5394 = vpack.c.b16 %v4634, %v4626
        %v5395 = vpack.c.b16 %v4635, %v4627
        %v5396 = vpack.c.b16 %v4636, %v4628
        %v5397 = vpack.c.b16 %v4645, %v4637
        %v5398 = vpack.c.b16 %v4646, %v4638
        %v5399 = vpack.c.b16 %v4647, %v4639
        %v5400 = vpack.c.b16 %v4648, %v4640
        %v5401 = vpack.c.b16 %v4649, %v4641
        %v5402 = vpack.c.b16 %v4650, %v4642
        %v5403 = vpack.c.b16 %v4651, %v4643
        %v5404 = vpack.c.b16 %v4652, %v4644
        %v5405 = vpack.c.b16 %v4661, %v4653
        %v5406 = vpack.c.b16 %v4662, %v4654
        %v5407 = vpack.c.b16 %v4663, %v4655
        %v5408 = vpack.c.b16 %v4664, %v4656
        %v5409 = vpack.c.b16 %v4665, %v4657
        %v5410 = vpack.c.b16 %v4666, %v4658
        %v5411 = vpack.c.b16 %v4667, %v4659
        %v5412 = vpack.c.b16 %v4668, %v4660
        %v5413 = vpack.c.b16 %v4677, %v4669
        %v5414 = vpack.c.b16 %v4678, %v4670
        %v5415 = vpack.c.b16 %v4679, %v4671
        %v5416 = vpack.c.b16 %v4680, %v4672
        %v5417 = vpack.c.b16 %v4681, %v4673
        %v5418 = vpack.c.b16 %v4682, %v4674
        %v5419 = vpack.c.b16 %v4683, %v4675
        %v5420 = vpack.c.b16 %v4684, %v4676
        %v5421 = vpack.c.b16 %v4693, %v4685
        %v5422 = vpack.c.b16 %v4694, %v4686
        %v5423 = vpack.c.b16 %v4695, %v4687
        %v5424 = vpack.c.b16 %v4696, %v4688
        %v5425 = vpack.c.b16 %v4697, %v4689
        %v5426 = vpack.c.b16 %v4698, %v4690
        %v5427 = vpack.c.b16 %v4699, %v4691
        %v5428 = vpack.c.b16 %v4700, %v4692
        %v5429 = vpack.c.b16 %v4709, %v4701
        %v5430 = vpack.c.b16 %v4710, %v4702
        %v5431 = vpack.c.b16 %v4711, %v4703
        %v5432 = vpack.c.b16 %v4712, %v4704
        %v5433 = vpack.c.b16 %v4713, %v4705
        %v5434 = vpack.c.b16 %v4714, %v4706
        %v5435 = vpack.c.b16 %v4715, %v4707
        %v5436 = vpack.c.b16 %v4716, %v4708
        %v5437 = vpack.c.b16 %v4725, %v4717
        %v5438 = vpack.c.b16 %v4726, %v4718
        %v5439 = vpack.c.b16 %v4727, %v4719
        %v5440 = vpack.c.b16 %v4728, %v4720
        %v5441 = vpack.c.b16 %v4729, %v4721
        %v5442 = vpack.c.b16 %v4730, %v4722
        %v5443 = vpack.c.b16 %v4731, %v4723
        %v5444 = vpack.c.b16 %v4732, %v4724
        %v5445 = vpack.c.b16 %v4741, %v4733
        %v5446 = vpack.c.b16 %v4742, %v4734
        %v5447 = vpack.c.b16 %v4743, %v4735
        %v5448 = vpack.c.b16 %v4744, %v4736
        %v5449 = vpack.c.b16 %v4745, %v4737
        %v5450 = vpack.c.b16 %v4746, %v4738
        %v5451 = vpack.c.b16 %v4747, %v4739
        %v5452 = vpack.c.b16 %v4748, %v4740
        %v5453 = vpack.c.b16 %v4757, %v4749
        %v5454 = vpack.c.b16 %v4758, %v4750
        %v5455 = vpack.c.b16 %v4759, %v4751
        %v5456 = vpack.c.b16 %v4760, %v4752
        %v5457 = vpack.c.b16 %v4761, %v4753
        %v5458 = vpack.c.b16 %v4762, %v4754
        %v5459 = vpack.c.b16 %v4763, %v4755
        %v5460 = vpack.c.b16 %v4764, %v4756
        %v5461 = vpack.c.b16 %v4773, %v4765
        %v5462 = vpack.c.b16 %v4774, %v4766
        %v5463 = vpack.c.b16 %v4775, %v4767
        %v5464 = vpack.c.b16 %v4776, %v4768
        %v5465 = vpack.c.b16 %v4777, %v4769
        %v5466 = vpack.c.b16 %v4778, %v4770
        %v5467 = vpack.c.b16 %v4779, %v4771
        %v5468 = vpack.c.b16 %v4780, %v4772
        %v5469 = vpack.c.b16 %v4789, %v4781
        %v5470 = vpack.c.b16 %v4790, %v4782
        %v5471 = vpack.c.b16 %v4791, %v4783
        %v5472 = vpack.c.b16 %v4792, %v4784
        %v5473 = vpack.c.b16 %v4793, %v4785
        %v5474 = vpack.c.b16 %v4794, %v4786
        %v5475 = vpack.c.b16 %v4795, %v4787
        %v5476 = vpack.c.b16 %v4796, %v4788
        %v5477 = vpack.c.b16 %v4805, %v4797
        %v5478 = vpack.c.b16 %v4806, %v4798
        %v5479 = vpack.c.b16 %v4807, %v4799
        %v5480 = vpack.c.b16 %v4808, %v4800
        %v5481 = vpack.c.b16 %v4809, %v4801
        %v5482 = vpack.c.b16 %v4810, %v4802
        %v5483 = vpack.c.b16 %v4811, %v4803
        %v5484 = vpack.c.b16 %v4812, %v4804
        %v5485 = vpack.c.b16 %v4821, %v4813
        %v5486 = vpack.c.b16 %v4822, %v4814
        %v5487 = vpack.c.b16 %v4823, %v4815
        %v5488 = vpack.c.b16 %v4824, %v4816
        %v5489 = vpack.c.b16 %v4825, %v4817
        %v5490 = vpack.c.b16 %v4826, %v4818
        %v5491 = vpack.c.b16 %v4827, %v4819
        %v5492 = vpack.c.b16 %v4828, %v4820
        %v5493 = vpack.c.b16 %v4837, %v4829
        %v5494 = vpack.c.b16 %v4838, %v4830
        %v5495 = vpack.c.b16 %v4839, %v4831
        %v5496 = vpack.c.b16 %v4840, %v4832
        %v5497 = vpack.c.b16 %v4841, %v4833
        %v5498 = vpack.c.b16 %v4842, %v4834
        %v5499 = vpack.c.b16 %v4843, %v4835
        %v5500 = vpack.c.b16 %v4844, %v4836
        %v5501 = vpack.c.b16 %v4853, %v4845
        %v5502 = vpack.c.b16 %v4854, %v4846
        %v5503 = vpack.c.b16 %v4855, %v4847
        %v5504 = vpack.c.b16 %v4856, %v4848
        %v5505 = vpack.c.b16 %v4857, %v4849
        %v5506 = vpack.c.b16 %v4858, %v4850
        %v5507 = vpack.c.b16 %v4859, %v4851
        %v5508 = vpack.c.b16 %v4860, %v4852
        %v5509 = vpack.c.b16 %v4869, %v4861
        %v5510 = vpack.c.b16 %v4870, %v4862
        %v5511 = vpack.c.b16 %v4871, %v4863
        %v5512 = vpack.c.b16 %v4872, %v4864
        %v5513 = vpack.c.b16 %v4873, %v4865
        %v5514 = vpack.c.b16 %v4874, %v4866
        %v5515 = vpack.c.b16 %v4875, %v4867
        %v5516 = vpack.c.b16 %v4876, %v4868
        %v5517 = vpack.c.b16 %v4885, %v4877
        %v5518 = vpack.c.b16 %v4886, %v4878
        %v5519 = vpack.c.b16 %v4887, %v4879
        %v5520 = vpack.c.b16 %v4888, %v4880
        %v5521 = vpack.c.b16 %v4889, %v4881
        %v5522 = vpack.c.b16 %v4890, %v4882
        %v5523 = vpack.c.b16 %v4891, %v4883
        %v5524 = vpack.c.b16 %v4892, %v4884
        %v5525 = vpack.c.b16 %v4901, %v4893
        %v5526 = vpack.c.b16 %v4902, %v4894
        %v5527 = vpack.c.b16 %v4903, %v4895
        %v5528 = vpack.c.b16 %v4904, %v4896
        %v5529 = vpack.c.b16 %v4905, %v4897
        %v5530 = vpack.c.b16 %v4906, %v4898
        %v5531 = vpack.c.b16 %v4907, %v4899
        %v5532 = vpack.c.b16 %v4908, %v4900
        %v5533 = vpack.c.b16 %v4917, %v4909
        %v5534 = vpack.c.b16 %v4918, %v4910
        %v5535 = vpack.c.b16 %v4919, %v4911
        %v5536 = vpack.c.b16 %v4920, %v4912
        %v5537 = vpack.c.b16 %v4921, %v4913
        %v5538 = vpack.c.b16 %v4922, %v4914
        %v5539 = vpack.c.b16 %v4923, %v4915
        %v5540 = vpack.c.b16 %v4924, %v4916
        %v5541 = vpack.c.b16 %v4933, %v4925
        %v5542 = vpack.c.b16 %v4934, %v4926
        %v5543 = vpack.c.b16 %v4935, %v4927
        %v5544 = vpack.c.b16 %v4936, %v4928
        %v5545 = vpack.c.b16 %v4937, %v4929
        %v5546 = vpack.c.b16 %v4938, %v4930
        %v5547 = vpack.c.b16 %v4939, %v4931
        %v5548 = vpack.c.b16 %v4940, %v4932
        %v5549 = vpack.c.b16 %v4949, %v4941
        %v5550 = vpack.c.b16 %v4950, %v4942
        %v5551 = vpack.c.b16 %v4951, %v4943
        %v5552 = vpack.c.b16 %v4952, %v4944
        %v5553 = vpack.c.b16 %v4953, %v4945
        %v5554 = vpack.c.b16 %v4954, %v4946
        %v5555 = vpack.c.b16 %v4955, %v4947
        %v5556 = vpack.c.b16 %v4956, %v4948
        %v5557 = vpack.c.b16 %v4965, %v4957
        %v5558 = vpack.c.b16 %v4966, %v4958
        %v5559 = vpack.c.b16 %v4967, %v4959
        %v5560 = vpack.c.b16 %v4968, %v4960
        %v5561 = vpack.c.b16 %v4969, %v4961
        %v5562 = vpack.c.b16 %v4970, %v4962
        %v5563 = vpack.c.b16 %v4971, %v4963
        %v5564 = vpack.c.b16 %v4972, %v4964
        %v5565 = vpack.c.b16 %v4981, %v4973
        %v5566 = vpack.c.b16 %v4982, %v4974
        %v5567 = vpack.c.b16 %v4983, %v4975
        %v5568 = vpack.c.b16 %v4984, %v4976
        %v5569 = vpack.c.b16 %v4985, %v4977
        %v5570 = vpack.c.b16 %v4986, %v4978
        %v5571 = vpack.c.b16 %v4987, %v4979
        %v5572 = vpack.c.b16 %v4988, %v4980
        %v5573 = vpack.c.b16 %v4997, %v4989
        %v5574 = vpack.c.b16 %v4998, %v4990
        %v5575 = vpack.c.b16 %v4999, %v4991
        %v5576 = vpack.c.b16 %v5000, %v4992
        %v5577 = vpack.c.b16 %v5001, %v4993
        %v5578 = vpack.c.b16 %v5002, %v4994
        %v5579 = vpack.c.b16 %v5003, %v4995
        %v5580 = vpack.c.b16 %v5004, %v4996
        %v5581 = vpack.c.b16 %v5013, %v5005
        %v5582 = vpack.c.b16 %v5014, %v5006
        %v5583 = vpack.c.b16 %v5015, %v5007
        %v5584 = vpack.c.b16 %v5016, %v5008
        %v5585 = vpack.c.b16 %v5017, %v5009
        %v5586 = vpack.c.b16 %v5018, %v5010
        %v5587 = vpack.c.b16 %v5019, %v5011
        %v5588 = vpack.c.b16 %v5020, %v5012
        %v5589 = vpack.c.b16 %v5029, %v5021
        %v5590 = vpack.c.b16 %v5030, %v5022
        %v5591 = vpack.c.b16 %v5031, %v5023
        %v5592 = vpack.c.b16 %v5032, %v5024
        %v5593 = vpack.c.b16 %v5033, %v5025
        %v5594 = vpack.c.b16 %v5034, %v5026
        %v5595 = vpack.c.b16 %v5035, %v5027
        %v5596 = vpack.c.b16 %v5036, %v5028
        %v5597 = vpack.c.b16 %v5045, %v5037
        %v5598 = vpack.c.b16 %v5046, %v5038
        %v5599 = vpack.c.b16 %v5047, %v5039
        %v5600 = vpack.c.b16 %v5048, %v5040
        %v5601 = vpack.c.b16 %v5049, %v5041
        %v5602 = vpack.c.b16 %v5050, %v5042
        %v5603 = vpack.c.b16 %v5051, %v5043
        %v5604 = vpack.c.b16 %v5052, %v5044
        %v5605 = vpack.c.b16 %v5061, %v5053
        %v5606 = vpack.c.b16 %v5062, %v5054
        %v5607 = vpack.c.b16 %v5063, %v5055
        %v5608 = vpack.c.b16 %v5064, %v5056
        %v5609 = vpack.c.b16 %v5065, %v5057
        %v5610 = vpack.c.b16 %v5066, %v5058
        %v5611 = vpack.c.b16 %v5067, %v5059
        %v5612 = vpack.c.b16 %v5068, %v5060
        %v5613 = vpack.c.b16 %v5077, %v5069
        %v5614 = vpack.c.b16 %v5078, %v5070
        %v5615 = vpack.c.b16 %v5079, %v5071
        %v5616 = vpack.c.b16 %v5080, %v5072
        %v5617 = vpack.c.b16 %v5081, %v5073
        %v5618 = vpack.c.b16 %v5082, %v5074
        %v5619 = vpack.c.b16 %v5083, %v5075
        %v5620 = vpack.c.b16 %v5084, %v5076
        %v5621 = vpack.c.b16 %v5093, %v5085
        %v5622 = vpack.c.b16 %v5094, %v5086
        %v5623 = vpack.c.b16 %v5095, %v5087
        %v5624 = vpack.c.b16 %v5096, %v5088
        %v5625 = vpack.c.b16 %v5097, %v5089
        %v5626 = vpack.c.b16 %v5098, %v5090
        %v5627 = vpack.c.b16 %v5099, %v5091
        %v5628 = vpack.c.b16 %v5100, %v5092
        %v5629 = vpack.c.b16 %v5109, %v5101
        %v5630 = vpack.c.b16 %v5110, %v5102
        %v5631 = vpack.c.b16 %v5111, %v5103
        %v5632 = vpack.c.b16 %v5112, %v5104
        %v5633 = vpack.c.b16 %v5113, %v5105
        %v5634 = vpack.c.b16 %v5114, %v5106
        %v5635 = vpack.c.b16 %v5115, %v5107
        %v5636 = vpack.c.b16 %v5116, %v5108
        %v5637 = vpack.c.b16 %v5125, %v5117
        %v5638 = vpack.c.b16 %v5126, %v5118
        %v5639 = vpack.c.b16 %v5127, %v5119
        %v5640 = vpack.c.b16 %v5128, %v5120
        %v5641 = vpack.c.b16 %v5129, %v5121
        %v5642 = vpack.c.b16 %v5130, %v5122
        %v5643 = vpack.c.b16 %v5131, %v5123
        %v5644 = vpack.c.b16 %v5132, %v5124
        %6157 = vmatprep.subr.bf16.mxu0 %v5190
        %6158 = vmatpush1.bf16.msra.mxu0 %v5189
        %6159 = vmatprep.subr.bf16.mxu0 %v5182
        %6160 = vmatpush1.bf16.msra.mxu0 %v5181
        %6161 = vmatprep.subr.bf16.mxu0 %v5174
        %6162 = vmatpush1.bf16.msra.mxu0 %v5173
        %6163 = vmatprep.subr.bf16.mxu0 %v5166
        %6164 = vmatpush1.bf16.msra.mxu0 %v5165
        %6165 = vmatprep.subr.bf16.mxu0 %v5158
        %6166 = vmatpush1.bf16.msra.mxu0 %v5157
        %6167 = vmatprep.subr.bf16.mxu0 %v5150
        %6168 = vmatpush1.bf16.msra.mxu0 %v5149
        %6169 = vmatprep.subr.bf16.mxu0 %v5142
        %6170 = vmatpush1.bf16.msra.mxu0 %v5141
        %6171 = vmatprep.subr.bf16.mxu0 %v5134
        %6172 = vmatpush1.bf16.msra.mxu0 %v5133
        %6173 = vmatprep.subr.bf16.mxu0 %v5254
        %6174 = vmatpush2.bf16.msra.mxu0 %v5253
        %6175 = vmatprep.subr.bf16.mxu0 %v5246
        %6176 = vmatpush2.bf16.msra.mxu0 %v5245
        %6177 = vmatprep.subr.bf16.mxu0 %v5238
        %6178 = vmatpush2.bf16.msra.mxu0 %v5237
        %6179 = vmatprep.subr.bf16.mxu0 %v5230
        %6180 = vmatpush2.bf16.msra.mxu0 %v5229
        %6181 = vmatprep.subr.bf16.mxu0 %v5222
        %6182 = vmatpush2.bf16.msra.mxu0 %v5221
        %6183 = vmatprep.subr.bf16.mxu0 %v5214
        %6184 = vmatpush2.bf16.msra.mxu0 %v5213
        %6185 = vmatprep.subr.bf16.mxu0 %v5206
        %6186 = vmatpush2.bf16.msra.mxu0 %v5205
        %6187 = vmatprep.subr.bf16.mxu0 %v5198
        %6188 = vmatpush2.bf16.msra.mxu0 %v5197
        %6189 = vmatprep.mubr.bf16.mxu0 %v3036
        %6190 = vmatmul.mubr.bf16.gmra.mxu0 %v3035
        %v6191 = vpop.f32.mrf.mxu0
        %v6192 = vadd.f32 %v3560, %v6191
        %v6193 = vpop.f32.mrf.mxu0
        %v6194 = vadd.f32 %v3564, %v6193
        %v6195 = vpop.f32.mrf.mxu0
        %v6196 = vpop.f32.mrf.mxu0
        %6197 = vdwg.mxu0
        %6198 = vmatprep.subr.bf16.mxu0 %v5318
        %6199 = vmatpush1.bf16.msra.mxu0 %v5317
        %6200 = vmatprep.subr.bf16.mxu0 %v5310
        %6201 = vmatpush1.bf16.msra.mxu0 %v5309
        %6202 = vmatprep.subr.bf16.mxu0 %v5302
        %6203 = vmatpush1.bf16.msra.mxu0 %v5301
        %6204 = vmatprep.subr.bf16.mxu0 %v5294
        %6205 = vmatpush1.bf16.msra.mxu0 %v5293
        %6206 = vmatprep.subr.bf16.mxu0 %v5286
        %6207 = vmatpush1.bf16.msra.mxu0 %v5285
        %6208 = vmatprep.subr.bf16.mxu0 %v5278
        %6209 = vmatpush1.bf16.msra.mxu0 %v5277
        %6210 = vmatprep.subr.bf16.mxu0 %v5270
        %6211 = vmatpush1.bf16.msra.mxu0 %v5269
        %6212 = vmatprep.subr.bf16.mxu0 %v5262
        %6213 = vmatpush1.bf16.msra.mxu0 %v5261
        %6214 = vmatprep.subr.bf16.mxu0 %v5382
        %6215 = vmatpush2.bf16.msra.mxu0 %v5381
        %6216 = vmatprep.subr.bf16.mxu0 %v5374
        %6217 = vmatpush2.bf16.msra.mxu0 %v5373
        %6218 = vmatprep.subr.bf16.mxu0 %v5366
        %6219 = vmatpush2.bf16.msra.mxu0 %v5365
        %6220 = vmatprep.subr.bf16.mxu0 %v5358
        %6221 = vmatpush2.bf16.msra.mxu0 %v5357
        %6222 = vmatprep.subr.bf16.mxu0 %v5350
        %6223 = vmatpush2.bf16.msra.mxu0 %v5349
        %6224 = vmatprep.subr.bf16.mxu0 %v5342
        %6225 = vmatpush2.bf16.msra.mxu0 %v5341
        %6226 = vmatprep.subr.bf16.mxu0 %v5334
        %6227 = vmatpush2.bf16.msra.mxu0 %v5333
        %6228 = vmatprep.subr.bf16.mxu0 %v5326
        %6229 = vmatpush2.bf16.msra.mxu0 %v5325
        %6230 = vmatprep.mubr.bf16.mxu0 %v3038
        %6231 = vmatmul.mubr.bf16.gmra.mxu0 %v3037
        %v6232 = vpop.f32.mrf.mxu0
        %v6233 = vadd.f32 %v6192, %v6232
        %v6234 = vpop.f32.mrf.mxu0
        %v6235 = vadd.f32 %v6194, %v6234
        %v6236 = vpop.f32.mrf.mxu0
        %v6237 = vpop.f32.mrf.mxu0
        %6238 = vdwg.mxu0
        %6239 = vmatprep.subr.bf16.mxu0 %v5446
        %6240 = vmatpush1.bf16.msra.mxu0 %v5445
        %6241 = vmatprep.subr.bf16.mxu0 %v5438
        %6242 = vmatpush1.bf16.msra.mxu0 %v5437
        %6243 = vmatprep.subr.bf16.mxu0 %v5430
        %6244 = vmatpush1.bf16.msra.mxu0 %v5429
        %6245 = vmatprep.subr.bf16.mxu0 %v5422
        %6246 = vmatpush1.bf16.msra.mxu0 %v5421
        %6247 = vmatprep.subr.bf16.mxu0 %v5414
        %6248 = vmatpush1.bf16.msra.mxu0 %v5413
        %6249 = vmatprep.subr.bf16.mxu0 %v5406
        %6250 = vmatpush1.bf16.msra.mxu0 %v5405
        %6251 = vmatprep.subr.bf16.mxu0 %v5398
        %6252 = vmatpush1.bf16.msra.mxu0 %v5397
        %6253 = vmatprep.subr.bf16.mxu0 %v5390
        %6254 = vmatpush1.bf16.msra.mxu0 %v5389
        %6255 = vmatprep.subr.bf16.mxu0 %v5510
        %6256 = vmatpush2.bf16.msra.mxu0 %v5509
        %6257 = vmatprep.subr.bf16.mxu0 %v5502
        %6258 = vmatpush2.bf16.msra.mxu0 %v5501
        %6259 = vmatprep.subr.bf16.mxu0 %v5494
        %6260 = vmatpush2.bf16.msra.mxu0 %v5493
        %6261 = vmatprep.subr.bf16.mxu0 %v5486
        %6262 = vmatpush2.bf16.msra.mxu0 %v5485
        %6263 = vmatprep.subr.bf16.mxu0 %v5478
        %6264 = vmatpush2.bf16.msra.mxu0 %v5477
        %6265 = vmatprep.subr.bf16.mxu0 %v5470
        %6266 = vmatpush2.bf16.msra.mxu0 %v5469
        %6267 = vmatprep.subr.bf16.mxu0 %v5462
        %6268 = vmatpush2.bf16.msra.mxu0 %v5461
        %6269 = vmatprep.subr.bf16.mxu0 %v5454
        %6270 = vmatpush2.bf16.msra.mxu0 %v5453
        %6271 = vmatprep.mubr.bf16.mxu0 %v3040
        %6272 = vmatmul.mubr.bf16.gmra.mxu0 %v3039
        %v6273 = vpop.f32.mrf.mxu0
        %v6274 = vadd.f32 %v6233, %v6273
        %v6275 = vpop.f32.mrf.mxu0
        %v6276 = vadd.f32 %v6235, %v6275
        %v6277 = vpop.f32.mrf.mxu0
        %v6278 = vpop.f32.mrf.mxu0
        %6279 = vdwg.mxu0
        %6280 = vmatprep.subr.bf16.mxu0 %v5574
        %6281 = vmatpush1.bf16.msra.mxu0 %v5573
        %6282 = vmatprep.subr.bf16.mxu0 %v5566
        %6283 = vmatpush1.bf16.msra.mxu0 %v5565
        %6284 = vmatprep.subr.bf16.mxu0 %v5558
        %6285 = vmatpush1.bf16.msra.mxu0 %v5557
        %6286 = vmatprep.subr.bf16.mxu0 %v5550
        %6287 = vmatpush1.bf16.msra.mxu0 %v5549
        %6288 = vmatprep.subr.bf16.mxu0 %v5542
        %6289 = vmatpush1.bf16.msra.mxu0 %v5541
        %6290 = vmatprep.subr.bf16.mxu0 %v5534
        %6291 = vmatpush1.bf16.msra.mxu0 %v5533
        %6292 = vmatprep.subr.bf16.mxu0 %v5526
        %6293 = vmatpush1.bf16.msra.mxu0 %v5525
        %6294 = vmatprep.subr.bf16.mxu0 %v5518
        %6295 = vmatpush1.bf16.msra.mxu0 %v5517
        %6296 = vmatprep.subr.bf16.mxu0 %v5638
        %6297 = vmatpush2.bf16.msra.mxu0 %v5637
        %6298 = vmatprep.subr.bf16.mxu0 %v5630
        %6299 = vmatpush2.bf16.msra.mxu0 %v5629
        %6300 = vmatprep.subr.bf16.mxu0 %v5622
        %6301 = vmatpush2.bf16.msra.mxu0 %v5621
        %6302 = vmatprep.subr.bf16.mxu0 %v5614
        %6303 = vmatpush2.bf16.msra.mxu0 %v5613
        %6304 = vmatprep.subr.bf16.mxu0 %v5606
        %6305 = vmatpush2.bf16.msra.mxu0 %v5605
        %6306 = vmatprep.subr.bf16.mxu0 %v5598
        %6307 = vmatpush2.bf16.msra.mxu0 %v5597
        %6308 = vmatprep.subr.bf16.mxu0 %v5590
        %6309 = vmatpush2.bf16.msra.mxu0 %v5589
        %6310 = vmatprep.subr.bf16.mxu0 %v5582
        %6311 = vmatpush2.bf16.msra.mxu0 %v5581
        %6312 = vmatprep.mubr.bf16.mxu0 %v3042
        %6313 = vmatmul.mubr.bf16.gmra.mxu0 %v3041
        %v6314 = vpop.f32.mrf.mxu0
        %v6315 = vadd.f32 %v6274, %v6314
        %v6316 = vpop.f32.mrf.mxu0
        %v6317 = vadd.f32 %v6276, %v6316
        %v6318 = vpop.f32.mrf.mxu0
        %v6319 = vpop.f32.mrf.mxu0
        %6320 = vdwg.mxu0
        %6321 = vmatprep.subr.bf16.mxu0 %v5192
        %6322 = vmatpush1.bf16.msra.mxu0 %v5191
        %6323 = vmatprep.subr.bf16.mxu0 %v5184
        %6324 = vmatpush1.bf16.msra.mxu0 %v5183
        %6325 = vmatprep.subr.bf16.mxu0 %v5176
        %6326 = vmatpush1.bf16.msra.mxu0 %v5175
        %6327 = vmatprep.subr.bf16.mxu0 %v5168
        %6328 = vmatpush1.bf16.msra.mxu0 %v5167
        %6329 = vmatprep.subr.bf16.mxu0 %v5160
        %6330 = vmatpush1.bf16.msra.mxu0 %v5159
        %6331 = vmatprep.subr.bf16.mxu0 %v5152
        %6332 = vmatpush1.bf16.msra.mxu0 %v5151
        %6333 = vmatprep.subr.bf16.mxu0 %v5144
        %6334 = vmatpush1.bf16.msra.mxu0 %v5143
        %6335 = vmatprep.subr.bf16.mxu0 %v5136
        %6336 = vmatpush1.bf16.msra.mxu0 %v5135
        %6337 = vmatprep.subr.bf16.mxu0 %v5256
        %6338 = vmatpush2.bf16.msra.mxu0 %v5255
        %6339 = vmatprep.subr.bf16.mxu0 %v5248
        %6340 = vmatpush2.bf16.msra.mxu0 %v5247
        %6341 = vmatprep.subr.bf16.mxu0 %v5240
        %6342 = vmatpush2.bf16.msra.mxu0 %v5239
        %6343 = vmatprep.subr.bf16.mxu0 %v5232
        %6344 = vmatpush2.bf16.msra.mxu0 %v5231
        %6345 = vmatprep.subr.bf16.mxu0 %v5224
        %6346 = vmatpush2.bf16.msra.mxu0 %v5223
        %6347 = vmatprep.subr.bf16.mxu0 %v5216
        %6348 = vmatpush2.bf16.msra.mxu0 %v5215
        %6349 = vmatprep.subr.bf16.mxu0 %v5208
        %6350 = vmatpush2.bf16.msra.mxu0 %v5207
        %6351 = vmatprep.subr.bf16.mxu0 %v5200
        %6352 = vmatpush2.bf16.msra.mxu0 %v5199
        %6353 = vmatprep.mubr.bf16.mxu0 %v3036
        %6354 = vmatmul.mubr.bf16.gmra.mxu0 %v3035
        %v6355 = vpop.f32.mrf.mxu0
        %v6356 = vadd.f32 %v3568, %v6355
        %v6357 = vpop.f32.mrf.mxu0
        %v6358 = vadd.f32 %v3572, %v6357
        %v6359 = vpop.f32.mrf.mxu0
        %v6360 = vpop.f32.mrf.mxu0
        %6361 = vdwg.mxu0
        %6362 = vmatprep.subr.bf16.mxu0 %v5320
        %6363 = vmatpush1.bf16.msra.mxu0 %v5319
        %6364 = vmatprep.subr.bf16.mxu0 %v5312
        %6365 = vmatpush1.bf16.msra.mxu0 %v5311
        %6366 = vmatprep.subr.bf16.mxu0 %v5304
        %6367 = vmatpush1.bf16.msra.mxu0 %v5303
        %6368 = vmatprep.subr.bf16.mxu0 %v5296
        %6369 = vmatpush1.bf16.msra.mxu0 %v5295
        %6370 = vmatprep.subr.bf16.mxu0 %v5288
        %6371 = vmatpush1.bf16.msra.mxu0 %v5287
        %6372 = vmatprep.subr.bf16.mxu0 %v5280
        %6373 = vmatpush1.bf16.msra.mxu0 %v5279
        %6374 = vmatprep.subr.bf16.mxu0 %v5272
        %6375 = vmatpush1.bf16.msra.mxu0 %v5271
        %6376 = vmatprep.subr.bf16.mxu0 %v5264
        %6377 = vmatpush1.bf16.msra.mxu0 %v5263
        %6378 = vmatprep.subr.bf16.mxu0 %v5384
        %6379 = vmatpush2.bf16.msra.mxu0 %v5383
        %6380 = vmatprep.subr.bf16.mxu0 %v5376
        %6381 = vmatpush2.bf16.msra.mxu0 %v5375
        %6382 = vmatprep.subr.bf16.mxu0 %v5368
        %6383 = vmatpush2.bf16.msra.mxu0 %v5367
        %6384 = vmatprep.subr.bf16.mxu0 %v5360
        %6385 = vmatpush2.bf16.msra.mxu0 %v5359
        %6386 = vmatprep.subr.bf16.mxu0 %v5352
        %6387 = vmatpush2.bf16.msra.mxu0 %v5351
        %6388 = vmatprep.subr.bf16.mxu0 %v5344
        %6389 = vmatpush2.bf16.msra.mxu0 %v5343
        %6390 = vmatprep.subr.bf16.mxu0 %v5336
        %6391 = vmatpush2.bf16.msra.mxu0 %v5335
        %6392 = vmatprep.subr.bf16.mxu0 %v5328
        %6393 = vmatpush2.bf16.msra.mxu0 %v5327
        %6394 = vmatprep.mubr.bf16.mxu0 %v3038
        %6395 = vmatmul.mubr.bf16.gmra.mxu0 %v3037
        %v6396 = vpop.f32.mrf.mxu0
        %v6397 = vadd.f32 %v6356, %v6396
        %v6398 = vpop.f32.mrf.mxu0
        %v6399 = vadd.f32 %v6358, %v6398
        %v6400 = vpop.f32.mrf.mxu0
        %v6401 = vpop.f32.mrf.mxu0
        %6402 = vdwg.mxu0
        %6403 = vmatprep.subr.bf16.mxu0 %v5448
        %6404 = vmatpush1.bf16.msra.mxu0 %v5447
        %6405 = vmatprep.subr.bf16.mxu0 %v5440
        %6406 = vmatpush1.bf16.msra.mxu0 %v5439
        %6407 = vmatprep.subr.bf16.mxu0 %v5432
        %6408 = vmatpush1.bf16.msra.mxu0 %v5431
        %6409 = vmatprep.subr.bf16.mxu0 %v5424
        %6410 = vmatpush1.bf16.msra.mxu0 %v5423
        %6411 = vmatprep.subr.bf16.mxu0 %v5416
        %6412 = vmatpush1.bf16.msra.mxu0 %v5415
        %6413 = vmatprep.subr.bf16.mxu0 %v5408
        %6414 = vmatpush1.bf16.msra.mxu0 %v5407
        %6415 = vmatprep.subr.bf16.mxu0 %v5400
        %6416 = vmatpush1.bf16.msra.mxu0 %v5399
        %6417 = vmatprep.subr.bf16.mxu0 %v5392
        %6418 = vmatpush1.bf16.msra.mxu0 %v5391
        %6419 = vmatprep.subr.bf16.mxu0 %v5512
        %6420 = vmatpush2.bf16.msra.mxu0 %v5511
        %6421 = vmatprep.subr.bf16.mxu0 %v5504
        %6422 = vmatpush2.bf16.msra.mxu0 %v5503
        %6423 = vmatprep.subr.bf16.mxu0 %v5496
        %6424 = vmatpush2.bf16.msra.mxu0 %v5495
        %6425 = vmatprep.subr.bf16.mxu0 %v5488
        %6426 = vmatpush2.bf16.msra.mxu0 %v5487
        %6427 = vmatprep.subr.bf16.mxu0 %v5480
        %6428 = vmatpush2.bf16.msra.mxu0 %v5479
        %6429 = vmatprep.subr.bf16.mxu0 %v5472
        %6430 = vmatpush2.bf16.msra.mxu0 %v5471
        %6431 = vmatprep.subr.bf16.mxu0 %v5464
        %6432 = vmatpush2.bf16.msra.mxu0 %v5463
        %6433 = vmatprep.subr.bf16.mxu0 %v5456
        %6434 = vmatpush2.bf16.msra.mxu0 %v5455
        %6435 = vmatprep.mubr.bf16.mxu0 %v3040
        %6436 = vmatmul.mubr.bf16.gmra.mxu0 %v3039
        %v6437 = vpop.f32.mrf.mxu0
        %v6438 = vadd.f32 %v6397, %v6437
        %v6439 = vpop.f32.mrf.mxu0
        %v6440 = vadd.f32 %v6399, %v6439
        %v6441 = vpop.f32.mrf.mxu0
        %v6442 = vpop.f32.mrf.mxu0
        %6443 = vdwg.mxu0
        %6444 = vmatprep.subr.bf16.mxu0 %v5576
        %6445 = vmatpush1.bf16.msra.mxu0 %v5575
        %6446 = vmatprep.subr.bf16.mxu0 %v5568
        %6447 = vmatpush1.bf16.msra.mxu0 %v5567
        %6448 = vmatprep.subr.bf16.mxu0 %v5560
        %6449 = vmatpush1.bf16.msra.mxu0 %v5559
        %6450 = vmatprep.subr.bf16.mxu0 %v5552
        %6451 = vmatpush1.bf16.msra.mxu0 %v5551
        %6452 = vmatprep.subr.bf16.mxu0 %v5544
        %6453 = vmatpush1.bf16.msra.mxu0 %v5543
        %6454 = vmatprep.subr.bf16.mxu0 %v5536
        %6455 = vmatpush1.bf16.msra.mxu0 %v5535
        %6456 = vmatprep.subr.bf16.mxu0 %v5528
        %6457 = vmatpush1.bf16.msra.mxu0 %v5527
        %6458 = vmatprep.subr.bf16.mxu0 %v5520
        %6459 = vmatpush1.bf16.msra.mxu0 %v5519
        %6460 = vmatprep.subr.bf16.mxu0 %v5640
        %6461 = vmatpush2.bf16.msra.mxu0 %v5639
        %6462 = vmatprep.subr.bf16.mxu0 %v5632
        %6463 = vmatpush2.bf16.msra.mxu0 %v5631
        %6464 = vmatprep.subr.bf16.mxu0 %v5624
        %6465 = vmatpush2.bf16.msra.mxu0 %v5623
        %6466 = vmatprep.subr.bf16.mxu0 %v5616
        %6467 = vmatpush2.bf16.msra.mxu0 %v5615
        %6468 = vmatprep.subr.bf16.mxu0 %v5608
        %6469 = vmatpush2.bf16.msra.mxu0 %v5607
        %6470 = vmatprep.subr.bf16.mxu0 %v5600
        %6471 = vmatpush2.bf16.msra.mxu0 %v5599
        %6472 = vmatprep.subr.bf16.mxu0 %v5592
        %6473 = vmatpush2.bf16.msra.mxu0 %v5591
        %6474 = vmatprep.subr.bf16.mxu0 %v5584
        %6475 = vmatpush2.bf16.msra.mxu0 %v5583
        %6476 = vmatprep.mubr.bf16.mxu0 %v3042
        %6477 = vmatmul.mubr.bf16.gmra.mxu0 %v3041
        %v6478 = vpop.f32.mrf.mxu0
        %v6479 = vadd.f32 %v6438, %v6478
        %v6480 = vpop.f32.mrf.mxu0
        %v6481 = vadd.f32 %v6440, %v6480
        %v6482 = vpop.f32.mrf.mxu0
        %v6483 = vpop.f32.mrf.mxu0
        %6484 = vdwg.mxu0
        %6485 = vmatprep.subr.bf16.mxu0 %v5194
        %6486 = vmatpush1.bf16.msra.mxu0 %v5193
        %6487 = vmatprep.subr.bf16.mxu0 %v5186
        %6488 = vmatpush1.bf16.msra.mxu0 %v5185
        %6489 = vmatprep.subr.bf16.mxu0 %v5178
        %6490 = vmatpush1.bf16.msra.mxu0 %v5177
        %6491 = vmatprep.subr.bf16.mxu0 %v5170
        %6492 = vmatpush1.bf16.msra.mxu0 %v5169
        %6493 = vmatprep.subr.bf16.mxu0 %v5162
        %6494 = vmatpush1.bf16.msra.mxu0 %v5161
        %6495 = vmatprep.subr.bf16.mxu0 %v5154
        %6496 = vmatpush1.bf16.msra.mxu0 %v5153
        %6497 = vmatprep.subr.bf16.mxu0 %v5146
        %6498 = vmatpush1.bf16.msra.mxu0 %v5145
        %6499 = vmatprep.subr.bf16.mxu0 %v5138
        %6500 = vmatpush1.bf16.msra.mxu0 %v5137
        %6501 = vmatprep.subr.bf16.mxu0 %v5258
        %6502 = vmatpush2.bf16.msra.mxu0 %v5257
        %6503 = vmatprep.subr.bf16.mxu0 %v5250
        %6504 = vmatpush2.bf16.msra.mxu0 %v5249
        %6505 = vmatprep.subr.bf16.mxu0 %v5242
        %6506 = vmatpush2.bf16.msra.mxu0 %v5241
        %6507 = vmatprep.subr.bf16.mxu0 %v5234
        %6508 = vmatpush2.bf16.msra.mxu0 %v5233
        %6509 = vmatprep.subr.bf16.mxu0 %v5226
        %6510 = vmatpush2.bf16.msra.mxu0 %v5225
        %6511 = vmatprep.subr.bf16.mxu0 %v5218
        %6512 = vmatpush2.bf16.msra.mxu0 %v5217
        %6513 = vmatprep.subr.bf16.mxu0 %v5210
        %6514 = vmatpush2.bf16.msra.mxu0 %v5209
        %6515 = vmatprep.subr.bf16.mxu0 %v5202
        %6516 = vmatpush2.bf16.msra.mxu0 %v5201
        %6517 = vmatprep.mubr.bf16.mxu0 %v3036
        %6518 = vmatmul.mubr.bf16.gmra.mxu0 %v3035
        %v6519 = vpop.f32.mrf.mxu0
        %v6520 = vadd.f32 %v3576, %v6519
        %v6521 = vpop.f32.mrf.mxu0
        %v6522 = vadd.f32 %v3580, %v6521
        %v6523 = vpop.f32.mrf.mxu0
        %v6524 = vpop.f32.mrf.mxu0
        %6525 = vdwg.mxu0
        %6526 = vmatprep.subr.bf16.mxu0 %v5322
        %6527 = vmatpush1.bf16.msra.mxu0 %v5321
        %6528 = vmatprep.subr.bf16.mxu0 %v5314
        %6529 = vmatpush1.bf16.msra.mxu0 %v5313
        %6530 = vmatprep.subr.bf16.mxu0 %v5306
        %6531 = vmatpush1.bf16.msra.mxu0 %v5305
        %6532 = vmatprep.subr.bf16.mxu0 %v5298
        %6533 = vmatpush1.bf16.msra.mxu0 %v5297
        %6534 = vmatprep.subr.bf16.mxu0 %v5290
        %6535 = vmatpush1.bf16.msra.mxu0 %v5289
        %6536 = vmatprep.subr.bf16.mxu0 %v5282
        %6537 = vmatpush1.bf16.msra.mxu0 %v5281
        %6538 = vmatprep.subr.bf16.mxu0 %v5274
        %6539 = vmatpush1.bf16.msra.mxu0 %v5273
        %6540 = vmatprep.subr.bf16.mxu0 %v5266
        %6541 = vmatpush1.bf16.msra.mxu0 %v5265
        %6542 = vmatprep.subr.bf16.mxu0 %v5386
        %6543 = vmatpush2.bf16.msra.mxu0 %v5385
        %6544 = vmatprep.subr.bf16.mxu0 %v5378
        %6545 = vmatpush2.bf16.msra.mxu0 %v5377
        %6546 = vmatprep.subr.bf16.mxu0 %v5370
        %6547 = vmatpush2.bf16.msra.mxu0 %v5369
        %6548 = vmatprep.subr.bf16.mxu0 %v5362
        %6549 = vmatpush2.bf16.msra.mxu0 %v5361
        %6550 = vmatprep.subr.bf16.mxu0 %v5354
        %6551 = vmatpush2.bf16.msra.mxu0 %v5353
        %6552 = vmatprep.subr.bf16.mxu0 %v5346
        %6553 = vmatpush2.bf16.msra.mxu0 %v5345
        %6554 = vmatprep.subr.bf16.mxu0 %v5338
        %6555 = vmatpush2.bf16.msra.mxu0 %v5337
        %6556 = vmatprep.subr.bf16.mxu0 %v5330
        %6557 = vmatpush2.bf16.msra.mxu0 %v5329
        %6558 = vmatprep.mubr.bf16.mxu0 %v3038
        %6559 = vmatmul.mubr.bf16.gmra.mxu0 %v3037
        %v6560 = vpop.f32.mrf.mxu0
        %v6561 = vadd.f32 %v6520, %v6560
        %v6562 = vpop.f32.mrf.mxu0
        %v6563 = vadd.f32 %v6522, %v6562
        %v6564 = vpop.f32.mrf.mxu0
        %v6565 = vpop.f32.mrf.mxu0
        %6566 = vdwg.mxu0
        %6567 = vmatprep.subr.bf16.mxu0 %v5450
        %6568 = vmatpush1.bf16.msra.mxu0 %v5449
        %6569 = vmatprep.subr.bf16.mxu0 %v5442
        %6570 = vmatpush1.bf16.msra.mxu0 %v5441
        %6571 = vmatprep.subr.bf16.mxu0 %v5434
        %6572 = vmatpush1.bf16.msra.mxu0 %v5433
        %6573 = vmatprep.subr.bf16.mxu0 %v5426
        %6574 = vmatpush1.bf16.msra.mxu0 %v5425
        %6575 = vmatprep.subr.bf16.mxu0 %v5418
        %6576 = vmatpush1.bf16.msra.mxu0 %v5417
        %6577 = vmatprep.subr.bf16.mxu0 %v5410
        %6578 = vmatpush1.bf16.msra.mxu0 %v5409
        %6579 = vmatprep.subr.bf16.mxu0 %v5402
        %6580 = vmatpush1.bf16.msra.mxu0 %v5401
        %6581 = vmatprep.subr.bf16.mxu0 %v5394
        %6582 = vmatpush1.bf16.msra.mxu0 %v5393
        %6583 = vmatprep.subr.bf16.mxu0 %v5514
        %6584 = vmatpush2.bf16.msra.mxu0 %v5513
        %6585 = vmatprep.subr.bf16.mxu0 %v5506
        %6586 = vmatpush2.bf16.msra.mxu0 %v5505
        %6587 = vmatprep.subr.bf16.mxu0 %v5498
        %6588 = vmatpush2.bf16.msra.mxu0 %v5497
        %6589 = vmatprep.subr.bf16.mxu0 %v5490
        %6590 = vmatpush2.bf16.msra.mxu0 %v5489
        %6591 = vmatprep.subr.bf16.mxu0 %v5482
        %6592 = vmatpush2.bf16.msra.mxu0 %v5481
        %6593 = vmatprep.subr.bf16.mxu0 %v5474
        %6594 = vmatpush2.bf16.msra.mxu0 %v5473
        %6595 = vmatprep.subr.bf16.mxu0 %v5466
        %6596 = vmatpush2.bf16.msra.mxu0 %v5465
        %6597 = vmatprep.subr.bf16.mxu0 %v5458
        %6598 = vmatpush2.bf16.msra.mxu0 %v5457
        %6599 = vmatprep.mubr.bf16.mxu0 %v3040
        %6600 = vmatmul.mubr.bf16.gmra.mxu0 %v3039
        %v6601 = vpop.f32.mrf.mxu0
        %v6602 = vadd.f32 %v6561, %v6601
        %v6603 = vpop.f32.mrf.mxu0
        %v6604 = vadd.f32 %v6563, %v6603
        %v6605 = vpop.f32.mrf.mxu0
        %v6606 = vpop.f32.mrf.mxu0
        %6607 = vdwg.mxu0
        %6608 = vmatprep.subr.bf16.mxu0 %v5578
        %6609 = vmatpush1.bf16.msra.mxu0 %v5577
        %6610 = vmatprep.subr.bf16.mxu0 %v5570
        %6611 = vmatpush1.bf16.msra.mxu0 %v5569
        %6612 = vmatprep.subr.bf16.mxu0 %v5562
        %6613 = vmatpush1.bf16.msra.mxu0 %v5561
        %6614 = vmatprep.subr.bf16.mxu0 %v5554
        %6615 = vmatpush1.bf16.msra.mxu0 %v5553
        %6616 = vmatprep.subr.bf16.mxu0 %v5546
        %6617 = vmatpush1.bf16.msra.mxu0 %v5545
        %6618 = vmatprep.subr.bf16.mxu0 %v5538
        %6619 = vmatpush1.bf16.msra.mxu0 %v5537
        %6620 = vmatprep.subr.bf16.mxu0 %v5530
        %6621 = vmatpush1.bf16.msra.mxu0 %v5529
        %6622 = vmatprep.subr.bf16.mxu0 %v5522
        %6623 = vmatpush1.bf16.msra.mxu0 %v5521
        %6624 = vmatprep.subr.bf16.mxu0 %v5642
        %6625 = vmatpush2.bf16.msra.mxu0 %v5641
        %6626 = vmatprep.subr.bf16.mxu0 %v5634
        %6627 = vmatpush2.bf16.msra.mxu0 %v5633
        %6628 = vmatprep.subr.bf16.mxu0 %v5626
        %6629 = vmatpush2.bf16.msra.mxu0 %v5625
        %6630 = vmatprep.subr.bf16.mxu0 %v5618
        %6631 = vmatpush2.bf16.msra.mxu0 %v5617
        %6632 = vmatprep.subr.bf16.mxu0 %v5610
        %6633 = vmatpush2.bf16.msra.mxu0 %v5609
        %6634 = vmatprep.subr.bf16.mxu0 %v5602
        %6635 = vmatpush2.bf16.msra.mxu0 %v5601
        %6636 = vmatprep.subr.bf16.mxu0 %v5594
        %6637 = vmatpush2.bf16.msra.mxu0 %v5593
        %6638 = vmatprep.subr.bf16.mxu0 %v5586
        %6639 = vmatpush2.bf16.msra.mxu0 %v5585
        %6640 = vmatprep.mubr.bf16.mxu0 %v3042
        %6641 = vmatmul.mubr.bf16.gmra.mxu0 %v3041
        %v6642 = vpop.f32.mrf.mxu0
        %v6643 = vadd.f32 %v6602, %v6642
        %v6644 = vpop.f32.mrf.mxu0
        %v6645 = vadd.f32 %v6604, %v6644
        %v6646 = vpop.f32.mrf.mxu0
        %v6647 = vpop.f32.mrf.mxu0
        %6648 = vdwg.mxu0
        %6649 = vmatprep.subr.bf16.mxu0 %v5196
        %6650 = vmatpush1.bf16.msra.mxu0 %v5195
        %6651 = vmatprep.subr.bf16.mxu0 %v5188
        %6652 = vmatpush1.bf16.msra.mxu0 %v5187
        %6653 = vmatprep.subr.bf16.mxu0 %v5180
        %6654 = vmatpush1.bf16.msra.mxu0 %v5179
        %6655 = vmatprep.subr.bf16.mxu0 %v5172
        %6656 = vmatpush1.bf16.msra.mxu0 %v5171
        %6657 = vmatprep.subr.bf16.mxu0 %v5164
        %6658 = vmatpush1.bf16.msra.mxu0 %v5163
        %6659 = vmatprep.subr.bf16.mxu0 %v5156
        %6660 = vmatpush1.bf16.msra.mxu0 %v5155
        %6661 = vmatprep.subr.bf16.mxu0 %v5148
        %6662 = vmatpush1.bf16.msra.mxu0 %v5147
        %6663 = vmatprep.subr.bf16.mxu0 %v5140
        %6664 = vmatpush1.bf16.msra.mxu0 %v5139
        %6665 = vmatprep.subr.bf16.mxu0 %v5260
        %6666 = vmatpush2.bf16.msra.mxu0 %v5259
        %6667 = vmatprep.subr.bf16.mxu0 %v5252
        %6668 = vmatpush2.bf16.msra.mxu0 %v5251
        %6669 = vmatprep.subr.bf16.mxu0 %v5244
        %6670 = vmatpush2.bf16.msra.mxu0 %v5243
        %6671 = vmatprep.subr.bf16.mxu0 %v5236
        %6672 = vmatpush2.bf16.msra.mxu0 %v5235
        %6673 = vmatprep.subr.bf16.mxu0 %v5228
        %6674 = vmatpush2.bf16.msra.mxu0 %v5227
        %6675 = vmatprep.subr.bf16.mxu0 %v5220
        %6676 = vmatpush2.bf16.msra.mxu0 %v5219
        %6677 = vmatprep.subr.bf16.mxu0 %v5212
        %6678 = vmatpush2.bf16.msra.mxu0 %v5211
        %6679 = vmatprep.subr.bf16.mxu0 %v5204
        %6680 = vmatpush2.bf16.msra.mxu0 %v5203
        %6681 = vmatprep.mubr.bf16.mxu0 %v3036
        %6682 = vmatmul.mubr.bf16.gmra.mxu0 %v3035
        %v6683 = vpop.f32.mrf.mxu0
        %v6684 = vadd.f32 %v3584, %v6683
        %v6685 = vpop.f32.mrf.mxu0
        %v6686 = vadd.f32 %v3588, %v6685
        %v6687 = vpop.f32.mrf.mxu0
        %v6688 = vpop.f32.mrf.mxu0
        %6689 = vdwg.mxu0
        %6690 = vmatprep.subr.bf16.mxu0 %v5324
        %6691 = vmatpush1.bf16.msra.mxu0 %v5323
        %6692 = vmatprep.subr.bf16.mxu0 %v5316
        %6693 = vmatpush1.bf16.msra.mxu0 %v5315
        %6694 = vmatprep.subr.bf16.mxu0 %v5308
        %6695 = vmatpush1.bf16.msra.mxu0 %v5307
        %6696 = vmatprep.subr.bf16.mxu0 %v5300
        %6697 = vmatpush1.bf16.msra.mxu0 %v5299
        %6698 = vmatprep.subr.bf16.mxu0 %v5292
        %6699 = vmatpush1.bf16.msra.mxu0 %v5291
        %6700 = vmatprep.subr.bf16.mxu0 %v5284
        %6701 = vmatpush1.bf16.msra.mxu0 %v5283
        %6702 = vmatprep.subr.bf16.mxu0 %v5276
        %6703 = vmatpush1.bf16.msra.mxu0 %v5275
        %6704 = vmatprep.subr.bf16.mxu0 %v5268
        %6705 = vmatpush1.bf16.msra.mxu0 %v5267
        %6706 = vmatprep.subr.bf16.mxu0 %v5388
        %6707 = vmatpush2.bf16.msra.mxu0 %v5387
        %6708 = vmatprep.subr.bf16.mxu0 %v5380
        %6709 = vmatpush2.bf16.msra.mxu0 %v5379
        %6710 = vmatprep.subr.bf16.mxu0 %v5372
        %6711 = vmatpush2.bf16.msra.mxu0 %v5371
        %6712 = vmatprep.subr.bf16.mxu0 %v5364
        %6713 = vmatpush2.bf16.msra.mxu0 %v5363
        %6714 = vmatprep.subr.bf16.mxu0 %v5356
        %6715 = vmatpush2.bf16.msra.mxu0 %v5355
        %6716 = vmatprep.subr.bf16.mxu0 %v5348
        %6717 = vmatpush2.bf16.msra.mxu0 %v5347
        %6718 = vmatprep.subr.bf16.mxu0 %v5340
        %6719 = vmatpush2.bf16.msra.mxu0 %v5339
        %6720 = vmatprep.subr.bf16.mxu0 %v5332
        %6721 = vmatpush2.bf16.msra.mxu0 %v5331
        %6722 = vmatprep.mubr.bf16.mxu0 %v3038
        %6723 = vmatmul.mubr.bf16.gmra.mxu0 %v3037
        %v6724 = vpop.f32.mrf.mxu0
        %v6725 = vadd.f32 %v6684, %v6724
        %v6726 = vpop.f32.mrf.mxu0
        %v6727 = vadd.f32 %v6686, %v6726
        %v6728 = vpop.f32.mrf.mxu0
        %v6729 = vpop.f32.mrf.mxu0
        %6730 = vdwg.mxu0
        %6731 = vmatprep.subr.bf16.mxu0 %v5452
        %6732 = vmatpush1.bf16.msra.mxu0 %v5451
        %6733 = vmatprep.subr.bf16.mxu0 %v5444
        %6734 = vmatpush1.bf16.msra.mxu0 %v5443
        %6735 = vmatprep.subr.bf16.mxu0 %v5436
        %6736 = vmatpush1.bf16.msra.mxu0 %v5435
        %6737 = vmatprep.subr.bf16.mxu0 %v5428
        %6738 = vmatpush1.bf16.msra.mxu0 %v5427
        %6739 = vmatprep.subr.bf16.mxu0 %v5420
        %6740 = vmatpush1.bf16.msra.mxu0 %v5419
        %6741 = vmatprep.subr.bf16.mxu0 %v5412
        %6742 = vmatpush1.bf16.msra.mxu0 %v5411
        %6743 = vmatprep.subr.bf16.mxu0 %v5404
        %6744 = vmatpush1.bf16.msra.mxu0 %v5403
        %6745 = vmatprep.subr.bf16.mxu0 %v5396
        %6746 = vmatpush1.bf16.msra.mxu0 %v5395
        %6747 = vmatprep.subr.bf16.mxu0 %v5516
        %6748 = vmatpush2.bf16.msra.mxu0 %v5515
        %6749 = vmatprep.subr.bf16.mxu0 %v5508
        %6750 = vmatpush2.bf16.msra.mxu0 %v5507
        %6751 = vmatprep.subr.bf16.mxu0 %v5500
        %6752 = vmatpush2.bf16.msra.mxu0 %v5499
        %6753 = vmatprep.subr.bf16.mxu0 %v5492
        %6754 = vmatpush2.bf16.msra.mxu0 %v5491
        %6755 = vmatprep.subr.bf16.mxu0 %v5484
        %6756 = vmatpush2.bf16.msra.mxu0 %v5483
        %6757 = vmatprep.subr.bf16.mxu0 %v5476
        %6758 = vmatpush2.bf16.msra.mxu0 %v5475
        %6759 = vmatprep.subr.bf16.mxu0 %v5468
        %6760 = vmatpush2.bf16.msra.mxu0 %v5467
        %6761 = vmatprep.subr.bf16.mxu0 %v5460
        %6762 = vmatpush2.bf16.msra.mxu0 %v5459
        %6763 = vmatprep.mubr.bf16.mxu0 %v3040
        %6764 = vmatmul.mubr.bf16.gmra.mxu0 %v3039
        %v6765 = vpop.f32.mrf.mxu0
        %v6766 = vadd.f32 %v6725, %v6765
        %v6767 = vpop.f32.mrf.mxu0
        %v6768 = vadd.f32 %v6727, %v6767
        %v6769 = vpop.f32.mrf.mxu0
        %v6770 = vpop.f32.mrf.mxu0
        %6771 = vdwg.mxu0
        %6772 = vmatprep.subr.bf16.mxu0 %v5580
        %6773 = vmatpush1.bf16.msra.mxu0 %v5579
        %6774 = vmatprep.subr.bf16.mxu0 %v5572
        %6775 = vmatpush1.bf16.msra.mxu0 %v5571
        %6776 = vmatprep.subr.bf16.mxu0 %v5564
        %6777 = vmatpush1.bf16.msra.mxu0 %v5563
        %6778 = vmatprep.subr.bf16.mxu0 %v5556
        %6779 = vmatpush1.bf16.msra.mxu0 %v5555
        %6780 = vmatprep.subr.bf16.mxu0 %v5548
        %6781 = vmatpush1.bf16.msra.mxu0 %v5547
        %6782 = vmatprep.subr.bf16.mxu0 %v5540
        %6783 = vmatpush1.bf16.msra.mxu0 %v5539
        %6784 = vmatprep.subr.bf16.mxu0 %v5532
        %6785 = vmatpush1.bf16.msra.mxu0 %v5531
        %6786 = vmatprep.subr.bf16.mxu0 %v5524
        %6787 = vmatpush1.bf16.msra.mxu0 %v5523
        %6788 = vmatprep.subr.bf16.mxu0 %v5644
        %6789 = vmatpush2.bf16.msra.mxu0 %v5643
        %6790 = vmatprep.subr.bf16.mxu0 %v5636
        %6791 = vmatpush2.bf16.msra.mxu0 %v5635
        %6792 = vmatprep.subr.bf16.mxu0 %v5628
        %6793 = vmatpush2.bf16.msra.mxu0 %v5627
        %6794 = vmatprep.subr.bf16.mxu0 %v5620
        %6795 = vmatpush2.bf16.msra.mxu0 %v5619
        %6796 = vmatprep.subr.bf16.mxu0 %v5612
        %6797 = vmatpush2.bf16.msra.mxu0 %v5611
        %6798 = vmatprep.subr.bf16.mxu0 %v5604
        %6799 = vmatpush2.bf16.msra.mxu0 %v5603
        %6800 = vmatprep.subr.bf16.mxu0 %v5596
        %6801 = vmatpush2.bf16.msra.mxu0 %v5595
        %6802 = vmatprep.subr.bf16.mxu0 %v5588
        %6803 = vmatpush2.bf16.msra.mxu0 %v5587
        %6804 = vmatprep.mubr.bf16.mxu0 %v3042
        %6805 = vmatmul.mubr.bf16.gmra.mxu0 %v3041
        %v6806 = vpop.f32.mrf.mxu0
        %v6807 = vadd.f32 %v6766, %v6806
        %v6808 = vpop.f32.mrf.mxu0
        %v6809 = vadd.f32 %v6768, %v6808
        %v6810 = vpop.f32.mrf.mxu0
        %v6811 = vpop.f32.mrf.mxu0
        %6812 = vdwg.mxu0
        %v6813 = vtanh.pop %v6315
        %v6814 = vtanh.pop %v6317
        %v6815 = vtanh.pop %v6479
        %v6816 = vtanh.pop %v6481
        %v6817 = vtanh.pop %v6643
        %v6818 = vtanh.pop %v6645
        %v6819 = vtanh.pop %v6807
        %v6820 = vtanh.pop %v6809
        %6821 = vst [vmem:[%s467] sm:$0xff] %v6813
        %6822 = vst [vmem:[%s467 + $0x8] sm:$0xff] %v6814
        %6823 = vst [vmem:[%s467 + $0x10] sm:$0xff] %v6815
        %6824 = vst [vmem:[%s467 + $0x18] sm:$0xff] %v6816
        %6825 = vst [vmem:[%s467 + $0x20] sm:$0xff] %v6817
        %6826 = vst [vmem:[%s467 + $0x28] sm:$0xff] %v6818
        %6827 = vst [vmem:[%s467 + $0x30] sm:$0xff] %v6819
        %6828 = vst [vmem:[%s467 + $0x38] sm:$0xff] %v6820
        %s6829 = smul.u32 8, %s24
        %p6830 = scmp.lt.s32.totalorder %s6829, 47
        %s6831 = scalar_select %p6830, %s6829, 47
        %s6832 = smul.addr %s6831, 8
        %s6833 = scalar_lea.vmem %s9, %s6832
        // Predicated region
        $region89: #{generator_forward.1} parent=55 // pred_check
          %p6834 = pneg %p241
        $region90: #{generator_forward.1} parent=55 // pred_check_branch
          %6836 = sbr.rel (%p6834) target = $region92
        $region91: #{generator_forward.1} parent=55 // pred_region
          %s6837 = smul.u32 8, %s24
        $region92: #{generator_forward.1} parent=55 // pred_fallthru
          _
      $region56: #{generator_forward.1} parent=5 // pred_fallthru
        _
      %p6838 = scmp.le.s32.totalorder 2, %s19
      // Predicated region
      $region93: #{generator_forward.1} parent=5 // pred_check
        %p6839 = pneg %p6838
      $region94: #{generator_forward.1} parent=5 // pred_check_branch
        %6841 = sbr.rel (%p6839) target = $region96
      $region95: #{generator_forward.1} parent=5 // pred_region
        %s6842 = ssub.s32 %s19, 2
        // Predicated region
        $region97: #{generator_forward.1} parent=95 // pred_check
          %p6843 = pneg %p247
        $region98: #{generator_forward.1} parent=95 // pred_check_branch
          %6845 = sbr.rel (%p6843) target = $region100
        $region99: #{generator_forward.1} parent=95 // pred_region
          %s6846 = smul.u32 8, %s25
          %p6847 = scmp.lt.s32.totalorder %s6846, 47
          %s6848 = scalar_select %p6847, %s6846, 47
          %s6849 = smul.addr %s6848, 8
          %s6850 = scalar_lea.vmem %s9, %s6849
        $region100: #{generator_forward.1} parent=95 // pred_fallthru
          _
      $region96: #{generator_forward.1} parent=5 // pred_fallthru
        _
    $region6: #{generator_forward.1} parent=1 // loop_footer
      %s23 = sadd.s32 1, %s19
    $region7: #{generator_forward.1} parent=1 // loop_footer_branch
      %18 = sbr.rel target = $region3
    $region8: #{generator_forward.1} parent=1 // loop_exit
      _
    %6851 = vsyncpa [#allocation3], 1
    %s6852 = scalar_lea.sflag [#allocation3], 1
    %6853 = vsyncpa %s6852, 1
    %6854 = vsyncpa [#allocation5], 1
    %6855 = vsyncpa [#allocation8], 1
    %6856 = vsyncpa [#allocation11], 1

</llo_original>
